<compile_context>
chip_gen: v6e
topology: v6e:2x2x1
jax: 0.10.0
libtpu: 0.0.40
codegen_flags: <defaults>
</compile_context>

<pallas_src>
import math

import jax
import jax.numpy as jnp
from jax.experimental import pallas as pl
from jax.experimental.pallas import tpu as pltpu

# ------------------------- small config (scaled-down BERT) -------------------
B = 2            # batch
S = 16           # sequence length
H = 256          # hidden size        (768 in bert-base)
NUM_HEADS = 2    # attention heads    (12 in bert-base)
HEAD_DIM = H // NUM_HEADS            # 128 -> head slices are full lane tiles
INTER = 512      # FFN intermediate   (3072 in bert-base)
NUM_LAYERS = 2   # encoder layers     (12 in bert-base)
VOCAB = 128
MAX_POS = 32
FC_OUT = 128     # self.fc output     (512 in the full-size module)
LN_EPS = 1e-12


# ----------------------------------- kernel ----------------------------------
def _encoder_kernel(
    x_ref,                       # (B*S, H)   f32 summed embeddings (pre-LayerNorm)
    bias_ref,                    # (B*S, B*S) f32 additive block-diag attention bias
    embg_ref, embb_ref,          # (1, H)     embedding LayerNorm gamma/beta
    wqkv_ref, bqkv_ref,          # (H, 3H) bf16, (1, 3H) f32     [per-layer block]
    wo_ref, bo_ref,              # (H, H)  bf16, (1, H)
    ln1g_ref, ln1b_ref,          # (1, H)
    wi_ref, bi_ref,              # (H, I)  bf16, (1, I)
    wf_ref, bf_ref,              # (I, H)  bf16, (1, H)
    ln2g_ref, ln2b_ref,          # (1, H)
    wp_ref, bp_ref,              # (H, H)  bf16, (1, H)           pooler dense
    wfc_ref, bfc_ref,            # (H, FC_OUT) bf16, (1, FC_OUT)  final fc
    out_ref,                     # (B, FC_OUT) f32
    h_ref,                       # VMEM scratch (B*S, H) f32 — persists across layers
):
    layer = pl.program_id(0)
    scale = 1.0 / math.sqrt(HEAD_DIM)

    def layer_norm(x, g, b):
        mu = jnp.mean(x, axis=-1, keepdims=True)
        var = jnp.mean(jnp.square(x - mu), axis=-1, keepdims=True)
        return (x - mu) * jax.lax.rsqrt(var + LN_EPS) * g + b

    # Embedding LayerNorm once, on the first grid step.
    @pl.when(layer == 0)
    def _():
        h_ref[...] = layer_norm(x_ref[...], embg_ref[...], embb_ref[...])

    h = h_ref[...]                                              # (B*S, H) f32
    h_bf16 = h.astype(jnp.bfloat16)                             # cast once per layer

    # ---- self-attention: fused QKV projection, M = B*S ----
    qkv = jnp.dot(h_bf16, wqkv_ref[...],
                  preferred_element_type=jnp.float32) + bqkv_ref[...]   # (B*S, 3H)
    qkv_bf16 = qkv.astype(jnp.bfloat16)
    bias = bias_ref[...]                                        # (B*S, B*S)

    # Block-diagonal attention over the flattened (B*S) key axis: one
    # (B*S, D) x (D, B*S) score matmul per head, cross-batch / padded keys
    # killed by the additive bias.  Per-head context is folded straight into
    # the output projection (accumulate, no lane concat).
    attn_acc = jnp.zeros((B * S, H), jnp.float32)
    for hd in range(NUM_HEADS):
        lo = hd * HEAD_DIM                                      # 128-aligned slices
        q = qkv_bf16[:, lo:lo + HEAD_DIM]                       # (B*S, D)
        k = qkv_bf16[:, H + lo:H + lo + HEAD_DIM]
        v = qkv_bf16[:, 2 * H + lo:2 * H + lo + HEAD_DIM]

        s = jnp.einsum("qd,kd->qk", q, k,
                       preferred_element_type=jnp.float32) * scale + bias
        s = s - jnp.max(s, axis=-1, keepdims=True)              # stable softmax (f32)
        p = jnp.exp(s)
        p = p * pl.reciprocal(jnp.sum(p, axis=-1, keepdims=True), approx=True)
        c = jnp.dot(p.astype(jnp.bfloat16), v,
                    preferred_element_type=jnp.float32)          # (B*S, D)
        attn_acc = attn_acc + jnp.dot(c.astype(jnp.bfloat16),
                                      wo_ref[lo:lo + HEAD_DIM, :],
                                      preferred_element_type=jnp.float32)

    attn_out = attn_acc + bo_ref[...]
    h = layer_norm(attn_out + h, ln1g_ref[...], ln1b_ref[...])
    h_bf16 = h.astype(jnp.bfloat16)

    # ---- feed-forward ----
    inter = jax.nn.gelu(
        jnp.dot(h_bf16, wi_ref[...], preferred_element_type=jnp.float32)
        + bi_ref[...],
        approximate=True)
    ffn_out = jnp.dot(inter.astype(jnp.bfloat16), wf_ref[...],
                      preferred_element_type=jnp.float32) + bf_ref[...]
    h = layer_norm(ffn_out + h, ln2g_ref[...], ln2b_ref[...])
    h_ref[...] = h

    # ---- BERT pooler (first token -> dense -> tanh) + final fc, last layer only ----
    @pl.when(layer == pl.num_programs(0) - 1)
    def _():
        cls = h.reshape(B, S, H)[:, 0, :].astype(jnp.bfloat16)   # (B, H)
        pooled = jnp.tanh(jnp.dot(cls, wp_ref[...],
                                  preferred_element_type=jnp.float32) + bp_ref[...])
        out_ref[...] = jnp.dot(pooled.astype(jnp.bfloat16), wfc_ref[...],
                               preferred_element_type=jnp.float32) + bfc_ref[...]


# ----------------------------- one-time weight packing --------------------------
def pack_params(params):
    """Pre-pack / pre-cast weights into kernel layout. Call ONCE, outside the forward."""
    bf16 = lambda a: jnp.asarray(a, jnp.bfloat16)
    wqkv = jnp.concatenate([params["wq"], params["wk"], params["wv"]], axis=-1)
    bqkv = jnp.concatenate([params["bq"], params["bk"], params["bv"]], axis=-1)
    packed = {
        "word_emb": params["word_emb"],
        "pos_emb": params["pos_emb"],
        "type_emb": params["type_emb"],
        "emb_ln_g": params["emb_ln_g"].reshape(1, H),
        "emb_ln_b": params["emb_ln_b"].reshape(1, H),
        "wqkv": bf16(wqkv),                                        # (L, H, 3H)
        "bqkv": bqkv.reshape(NUM_LAYERS, 1, 3 * H),
        "wo": bf16(params["wo"]),  "bo": params["bo"].reshape(NUM_LAYERS, 1, H),
        "ln1_g": params["ln1_g"].reshape(NUM_LAYERS, 1, H),
        "ln1_b": params["ln1_b"].reshape(NUM_LAYERS, 1, H),
        "wi": bf16(params["wi"]),  "bi": params["bi"].reshape(NUM_LAYERS, 1, INTER),
        "wf": bf16(params["wf"]),  "bf": params["bf"].reshape(NUM_LAYERS, 1, H),
        "ln2_g": params["ln2_g"].reshape(NUM_LAYERS, 1, H),
        "ln2_b": params["ln2_b"].reshape(NUM_LAYERS, 1, H),
        "wp": bf16(params["wp"]),  "bp": params["bp"].reshape(1, H),
        "wfc": bf16(params["wfc"]), "bfc": params["bfc"].reshape(1, FC_OUT),
    }
    return jax.tree_util.tree_map(jnp.asarray, packed)


# ---------------------------------- wrapper -----------------------------------
def _full_spec(shape):
    n = len(shape)
    return pl.BlockSpec(shape, lambda l, _n=n: (0,) * _n)


def _per_layer_spec(shape):
    n = len(shape)
    return pl.BlockSpec((None,) + tuple(shape[1:]),
                        lambda l, _n=n: (l,) + (0,) * (_n - 1))


@jax.jit
def question_encoder_forward(packed, input_ids, attention_mask):
    b, s = input_ids.shape
    # Embedding gather stays in the wrapper (data-dependent gather); everything
    # else runs inside the single pallas_call, gridded over encoder layers.
    word = packed["word_emb"][input_ids]                        # (B, S, H)
    pos = packed["pos_emb"][:s][None, :, :]                     # (1, S, H)
    tok = packed["type_emb"][0][None, None, :]                  # token_type_ids == 0
    x = (word + pos + tok).reshape(b * s, H).astype(jnp.float32)

    # Block-diagonal additive bias over the flattened (B*S) key axis:
    # 0 for same-batch valid keys, -10000 (HF-style) for padded or cross-batch keys.
    batch_ids = jnp.repeat(jnp.arange(b, dtype=jnp.int32), s)
    same_batch = batch_ids[:, None] == batch_ids[None, :]
    key_valid = attention_mask.reshape(b * s) > 0
    allowed = jnp.logical_and(same_batch, key_valid[None, :])
    attn_bias = jnp.where(allowed, 0.0, -10000.0).astype(jnp.float32)   # (B*S, B*S)

    operands = [
        x, attn_bias,
        packed["emb_ln_g"], packed["emb_ln_b"],
        packed["wqkv"], packed["bqkv"],
        packed["wo"], packed["bo"],
        packed["ln1_g"], packed["ln1_b"],
        packed["wi"], packed["bi"],
        packed["wf"], packed["bf"],
        packed["ln2_g"], packed["ln2_b"],
        packed["wp"], packed["bp"],
        packed["wfc"], packed["bfc"],
    ]
    in_specs = [
        _full_spec(x.shape), _full_spec(attn_bias.shape),
        _full_spec((1, H)), _full_spec((1, H)),
        _per_layer_spec(packed["wqkv"].shape), _per_layer_spec(packed["bqkv"].shape),
        _per_layer_spec(packed["wo"].shape),   _per_layer_spec(packed["bo"].shape),
        _per_layer_spec(packed["ln1_g"].shape), _per_layer_spec(packed["ln1_b"].shape),
        _per_layer_spec(packed["wi"].shape),   _per_layer_spec(packed["bi"].shape),
        _per_layer_spec(packed["wf"].shape),   _per_layer_spec(packed["bf"].shape),
        _per_layer_spec(packed["ln2_g"].shape), _per_layer_spec(packed["ln2_b"].shape),
        _full_spec((H, H)), _full_spec((1, H)),
        _full_spec((H, FC_OUT)), _full_spec((1, FC_OUT)),
    ]

    return pl.pallas_call(
        _encoder_kernel,
        out_shape=jax.ShapeDtypeStruct((b, FC_OUT), jnp.float32),
        grid_spec=pltpu.PrefetchScalarGridSpec(
            num_scalar_prefetch=0,
            grid=(NUM_LAYERS,),          # per-layer steps -> weights double-buffered
            in_specs=in_specs,
            out_specs=pl.BlockSpec((b, FC_OUT), lambda l: (0, 0)),
            scratch_shapes=[pltpu.VMEM((B * S, H), jnp.float32)],   # persistent h
        ),
        compiler_params=pltpu.CompilerParams(
            dimension_semantics=("arbitrary",),      # layers are sequential
            vmem_limit_bytes=32 * 1024 * 1024,
        ),
    )(*operands)


# ----------------------------- pure-JAX reference ------------------------------
def reference_forward(params, input_ids, attention_mask):
    b, s = input_ids.shape

    def layer_norm(x, g, bb):
        mu = jnp.mean(x, axis=-1, keepdims=True)
        var = jnp.mean(jnp.square(x - mu), axis=-1, keepdims=True)
        return (x - mu) * jax.lax.rsqrt(var + LN_EPS) * g + bb

    x = (params["word_emb"][input_ids] + params["pos_emb"][:s][None]
         + params["type_emb"][0][None, None])
    h = layer_norm(x, params["emb_ln_g"], params["emb_ln_b"])          # (B, S, H)
    mask_add = (1.0 - attention_mask.astype(jnp.float32))[:, None, None, :] * -10000.0

    for l in range(NUM_LAYERS):
        q = h @ params["wq"][l] + params["bq"][l]
        k = h @ params["wk"][l] + params["bk"][l]
        v = h @ params["wv"][l] + params["bv"][l]

        def heads(t):
            return t.reshape(b, s, NUM_HEADS, HEAD_DIM).transpose(0, 2, 1, 3)

        qh, kh, vh = heads(q), heads(k), heads(v)
        sc = jnp.einsum("bhqd,bhkd->bhqk", qh, kh) / math.sqrt(HEAD_DIM) + mask_add
        p = jax.nn.softmax(sc, axis=-1)
        c = jnp.einsum("bhqk,bhkd->bhqd", p, vh).transpose(0, 2, 1, 3).reshape(b, s, H)
        attn = c @ params["wo"][l] + params["bo"][l]
        h = layer_norm(attn + h, params["ln1_g"][l], params["ln1_b"][l])
        inter = jax.nn.gelu(h @ params["wi"][l] + params["bi"][l], approximate=True)
        ffn = inter @ params["wf"][l] + params["bf"][l]
        h = layer_norm(ffn + h, params["ln2_g"][l], params["ln2_b"][l])

    pooled = jnp.tanh(h[:, 0, :] @ params["wp"] + params["bp"])
    return pooled @ params["wfc"] + params["bfc"]


# --------------------------------- init / main ---------------------------------
def init_params(key):
    ks = iter(jax.random.split(key, 48))

    def rnd(shape, scale=0.02):
        return (scale * jax.random.normal(next(ks), shape)).astype(jnp.float32)

    return {
        "word_emb": rnd((VOCAB, H)),
        "pos_emb": rnd((MAX_POS, H)),
        "type_emb": rnd((2, H)),
        "emb_ln_g": 1.0 + rnd((H,)), "emb_ln_b": rnd((H,)),
        "wq": rnd((NUM_LAYERS, H, H)), "bq": rnd((NUM_LAYERS, H)),
        "wk": rnd((NUM_LAYERS, H, H)), "bk": rnd((NUM_LAYERS, H)),
        "wv": rnd((NUM_LAYERS, H, H)), "bv": rnd((NUM_LAYERS, H)),
        "wo": rnd((NUM_LAYERS, H, H)), "bo": rnd((NUM_LAYERS, H)),
        "ln1_g": 1.0 + rnd((NUM_LAYERS, H)), "ln1_b": rnd((NUM_LAYERS, H)),
        "wi": rnd((NUM_LAYERS, H, INTER)), "bi": rnd((NUM_LAYERS, INTER)),
        "wf": rnd((NUM_LAYERS, INTER, H)), "bf": rnd((NUM_LAYERS, H)),
        "ln2_g": 1.0 + rnd((NUM_LAYERS, H)), "ln2_b": rnd((NUM_LAYERS, H)),
        "wp": rnd((H, H)), "bp": rnd((H,)),
        "wfc": rnd((H, FC_OUT)), "bfc": rnd((FC_OUT,)),
    }


if __name__ == "__main__":
    key = jax.random.PRNGKey(0)
    k_par, k_ids = jax.random.split(key, 2)

    params = init_params(k_par)
    packed = jax.block_until_ready(pack_params(params))   # one-time packing / bf16 cast

    input_ids = jax.random.randint(k_ids, (B, S), 0, VOCAB, dtype=jnp.int32)
    lengths = jnp.array([S, S - 6], dtype=jnp.int32)       # ragged valid lengths
    attention_mask = (jnp.arange(S)[None, :] < lengths[:, None]).astype(jnp.int32)

    out = question_encoder_forward(packed, input_ids, attention_mask)
    out = jax.block_until_ready(out)

    ref = reference_forward(params, input_ids, attention_mask)
    assert out.shape == (B, FC_OUT), out.shape
    if not jnp.allclose(out, ref, atol=2e-2, rtol=2e-2):
        err = float(jnp.max(jnp.abs(out - ref)))
        raise AssertionError(
            f"Pallas kernel output mismatch vs JAX reference (max abs err {err})")

    print("KERNEL_OK")
</pallas_src>

<mosaic_0001>
module attributes {stable_mosaic.version = 11 : i64} {
  func.func @_encoder_kernel(%arg0: i32, %arg1: memref<32x256xf32, #tpu.memory_space<vmem>>, %arg2: memref<32x32xf32, #tpu.memory_space<vmem>>, %arg3: memref<1x256xf32, #tpu.memory_space<vmem>>, %arg4: memref<1x256xf32, #tpu.memory_space<vmem>>, %arg5: memref<1x256x768xbf16, #tpu.memory_space<vmem>>, %arg6: memref<1x1x768xf32, #tpu.memory_space<vmem>>, %arg7: memref<1x256x256xbf16, #tpu.memory_space<vmem>>, %arg8: memref<1x1x256xf32, #tpu.memory_space<vmem>>, %arg9: memref<1x1x256xf32, #tpu.memory_space<vmem>>, %arg10: memref<1x1x256xf32, #tpu.memory_space<vmem>>, %arg11: memref<1x256x512xbf16, #tpu.memory_space<vmem>>, %arg12: memref<1x1x512xf32, #tpu.memory_space<vmem>>, %arg13: memref<1x512x256xbf16, #tpu.memory_space<vmem>>, %arg14: memref<1x1x256xf32, #tpu.memory_space<vmem>>, %arg15: memref<1x1x256xf32, #tpu.memory_space<vmem>>, %arg16: memref<1x1x256xf32, #tpu.memory_space<vmem>>, %arg17: memref<256x256xbf16, #tpu.memory_space<vmem>>, %arg18: memref<1x256xf32, #tpu.memory_space<vmem>>, %arg19: memref<256x128xbf16, #tpu.memory_space<vmem>>, %arg20: memref<1x128xf32, #tpu.memory_space<vmem>>, %arg21: memref<2x128xf32, #tpu.memory_space<vmem>>, %arg22: memref<32x256xf32, #tpu.memory_space<vmem>>) attributes {dimension_semantics = [#tpu.dimension_semantics<arbitrary>], iteration_bounds = array<i64: 2>, scalar_prefetch = 0 : i64, scratch_operands = 1 : i64, tpu.core_type = #tpu.core_type<tc>, window_params = [{pipeline_mode = #tpu.pipeline_mode<synchronous>, transform_indices = @transform_0, window_bounds = array<i64: 32, 256>}, {pipeline_mode = #tpu.pipeline_mode<synchronous>, transform_indices = @transform_1, window_bounds = array<i64: 32, 32>}, {pipeline_mode = #tpu.pipeline_mode<synchronous>, transform_indices = @transform_2, window_bounds = array<i64: 1, 256>}, {pipeline_mode = #tpu.pipeline_mode<synchronous>, transform_indices = @transform_3, window_bounds = array<i64: 1, 256>}, {transform_indices = @transform_4, window_bounds = array<i64: 1, 256, 768>}, {transform_indices = @transform_5, window_bounds = array<i64: 1, 1, 768>}, {transform_indices = @transform_6, window_bounds = array<i64: 1, 256, 256>}, {transform_indices = @transform_7, window_bounds = array<i64: 1, 1, 256>}, {transform_indices = @transform_8, window_bounds = array<i64: 1, 1, 256>}, {transform_indices = @transform_9, window_bounds = array<i64: 1, 1, 256>}, {transform_indices = @transform_10, window_bounds = array<i64: 1, 256, 512>}, {transform_indices = @transform_11, window_bounds = array<i64: 1, 1, 512>}, {transform_indices = @transform_12, window_bounds = array<i64: 1, 512, 256>}, {transform_indices = @transform_13, window_bounds = array<i64: 1, 1, 256>}, {transform_indices = @transform_14, window_bounds = array<i64: 1, 1, 256>}, {transform_indices = @transform_15, window_bounds = array<i64: 1, 1, 256>}, {pipeline_mode = #tpu.pipeline_mode<synchronous>, transform_indices = @transform_16, window_bounds = array<i64: 256, 256>}, {pipeline_mode = #tpu.pipeline_mode<synchronous>, transform_indices = @transform_17, window_bounds = array<i64: 1, 256>}, {pipeline_mode = #tpu.pipeline_mode<synchronous>, transform_indices = @transform_18, window_bounds = array<i64: 256, 128>}, {pipeline_mode = #tpu.pipeline_mode<synchronous>, transform_indices = @transform_19, window_bounds = array<i64: 1, 128>}, {pipeline_mode = #tpu.pipeline_mode<synchronous>, transform_indices = @transform_20, window_bounds = array<i64: 2, 128>}]} {
    %c0_i32 = arith.constant 0 : i32
    %0 = arith.cmpi eq, %arg0, %c0_i32 : i32
    %1 = arith.extui %0 : i1 to i32
    %c0_i32_0 = arith.constant 0 : i32
    %2 = arith.cmpi ne, %1, %c0_i32_0 : i32
    scf.if %2 {
      %c0_74 = arith.constant 0 : index
      %c0_75 = arith.constant 0 : index
      %154 = vector.load %arg1[%c0_74, %c0_75] : memref<32x256xf32, #tpu.memory_space<vmem>>, vector<32x256xf32>
      %c0_76 = arith.constant 0 : index
      %c0_77 = arith.constant 0 : index
      %155 = vector.load %arg3[%c0_76, %c0_77] : memref<1x256xf32, #tpu.memory_space<vmem>>, vector<1x256xf32>
      %c0_78 = arith.constant 0 : index
      %c0_79 = arith.constant 0 : index
      %156 = vector.load %arg4[%c0_78, %c0_79] : memref<1x256xf32, #tpu.memory_space<vmem>>, vector<1x256xf32>
      %cst_80 = arith.constant dense<0.000000e+00> : vector<32xf32>
      %157 = vector.multi_reduction <add>, %154, %cst_80 [1] : vector<32x256xf32> to vector<32xf32>
      %158 = vector.shape_cast %157 : vector<32xf32> to vector<32x1xf32>
      %cst_81 = arith.constant 2.560000e+02 : f32
      %159 = vector.broadcast %cst_81 : f32 to vector<32x1xf32>
      %160 = arith.divf %158, %159 : vector<32x1xf32>
      %161 = vector.broadcast %160 : vector<32x1xf32> to vector<32x256xf32>
      %162 = arith.subf %154, %161 : vector<32x256xf32>
      %163 = arith.mulf %162, %162 : vector<32x256xf32>
      %cst_82 = arith.constant dense<0.000000e+00> : vector<32xf32>
      %164 = vector.multi_reduction <add>, %163, %cst_82 [1] : vector<32x256xf32> to vector<32xf32>
      %165 = vector.shape_cast %164 : vector<32xf32> to vector<32x1xf32>
      %cst_83 = arith.constant 2.560000e+02 : f32
      %166 = vector.broadcast %cst_83 : f32 to vector<32x1xf32>
      %167 = arith.divf %165, %166 : vector<32x1xf32>
      %168 = vector.broadcast %160 : vector<32x1xf32> to vector<32x256xf32>
      %169 = arith.subf %154, %168 : vector<32x256xf32>
      %cst_84 = arith.constant 9.99999996E-13 : f32
      %170 = vector.broadcast %cst_84 : f32 to vector<32x1xf32>
      %171 = arith.addf %167, %170 : vector<32x1xf32>
      %172 = math.rsqrt %171 : vector<32x1xf32>
      %173 = vector.broadcast %172 : vector<32x1xf32> to vector<32x256xf32>
      %174 = arith.mulf %169, %173 : vector<32x256xf32>
      %175 = vector.broadcast %155 : vector<1x256xf32> to vector<32x256xf32>
      %176 = arith.mulf %174, %175 : vector<32x256xf32>
      %177 = vector.broadcast %156 : vector<1x256xf32> to vector<32x256xf32>
      %178 = arith.addf %176, %177 : vector<32x256xf32>
      %c0_85 = arith.constant 0 : index
      %c0_86 = arith.constant 0 : index
      %179 = vector.load %arg22[%c0_85, %c0_86] : memref<32x256xf32, #tpu.memory_space<vmem>>, vector<32x256xf32>
      tpu.vector_store %arg22[%c0_85, %c0_86], %178 {strides = array<i32>} : memref<32x256xf32, #tpu.memory_space<vmem>>, vector<32x256xf32>,
    } else {
    }
    %c0 = arith.constant 0 : index
    %c0_1 = arith.constant 0 : index
    %3 = vector.load %arg22[%c0, %c0_1] : memref<32x256xf32, #tpu.memory_space<vmem>>, vector<32x256xf32>
    %4 = arith.truncf %3 : vector<32x256xf32> to vector<32x256xbf16>
    %c0_2 = arith.constant 0 : index
    %c0_3 = arith.constant 0 : index
    %c0_4 = arith.constant 0 : index
    %5 = vector.load %arg5[%c0_2, %c0_3, %c0_4] : memref<1x256x768xbf16, #tpu.memory_space<vmem>>, vector<1x256x768xbf16>
    %6 = vector.shape_cast %5 : vector<1x256x768xbf16> to vector<256x768xbf16>
    %cst = arith.constant dense<0.000000e+00> : vector<32x768xf32>
    %7 = tpu.matmul %4, %6, %cst {dimension_numbers = #tpu.dot_dimension_numbers<[1], [0], [0], [1], [0, 0, 1, 1], [], []>} : vector<32x256xbf16>, vector<256x768xbf16>, vector<32x768xf32> -> vector<32x768xf32>
    %c0_5 = arith.constant 0 : index
    %c0_6 = arith.constant 0 : index
    %c0_7 = arith.constant 0 : index
    %8 = vector.load %arg6[%c0_5, %c0_6, %c0_7] : memref<1x1x768xf32, #tpu.memory_space<vmem>>, vector<1x1x768xf32>
    %9 = vector.shape_cast %8 : vector<1x1x768xf32> to vector<1x768xf32>
    %10 = vector.broadcast %9 : vector<1x768xf32> to vector<32x768xf32>
    %11 = arith.addf %7, %10 : vector<32x768xf32>
    %12 = arith.truncf %11 : vector<32x768xf32> to vector<32x768xbf16>
    %c0_8 = arith.constant 0 : index
    %c0_9 = arith.constant 0 : index
    %13 = vector.load %arg2[%c0_8, %c0_9] : memref<32x32xf32, #tpu.memory_space<vmem>>, vector<32x32xf32>
    %cst_10 = arith.constant 0.000000e+00 : f32
    %14 = vector.broadcast %cst_10 : f32 to vector<32x256xf32>
    %15 = vector.extract_strided_slice %12 {offsets = [0, 0], sizes = [32, 128], strides = [1, 1]} : vector<32x768xbf16> to vector<32x128xbf16>
    %16 = vector.extract_strided_slice %12 {offsets = [0, 256], sizes = [32, 128], strides = [1, 1]} : vector<32x768xbf16> to vector<32x128xbf16>
    %17 = vector.extract_strided_slice %12 {offsets = [0, 512], sizes = [32, 128], strides = [1, 1]} : vector<32x768xbf16> to vector<32x128xbf16>
    "tpu.trace_start"() <{level = 10 : i32, message = "qd,kd->qk"}> : () -> ()
    %cst_11 = arith.constant dense<0.000000e+00> : vector<32x32xf32>
    %18 = tpu.matmul %15, %16, %cst_11 {dimension_numbers = #tpu.dot_dimension_numbers<[1], [1], [0], [0], [0, 0, 1, 0], [], []>} : vector<32x128xbf16>, vector<32x128xbf16>, vector<32x32xf32> -> vector<32x32xf32>
    "tpu.trace_stop"() : () -> ()
    %cst_12 = arith.constant 0.0883883461 : f32
    %19 = vector.broadcast %cst_12 : f32 to vector<32x32xf32>
    %20 = arith.mulf %18, %19 : vector<32x32xf32>
    %21 = arith.addf %20, %13 : vector<32x32xf32>
    %cst_13 = arith.constant dense<0xFF800000> : vector<32xf32>
    %22 = vector.multi_reduction <maximumf>, %21, %cst_13 [1] : vector<32x32xf32> to vector<32xf32>
    %23 = vector.shape_cast %22 : vector<32xf32> to vector<32x1xf32>
    %24 = vector.broadcast %23 : vector<32x1xf32> to vector<32x32xf32>
    %25 = arith.subf %21, %24 : vector<32x32xf32>
    %26 = math.exp %25 : vector<32x32xf32>
    %cst_14 = arith.constant dense<0.000000e+00> : vector<32xf32>
    %27 = vector.multi_reduction <add>, %26, %cst_14 [1] : vector<32x32xf32> to vector<32xf32>
    %28 = vector.shape_cast %27 : vector<32xf32> to vector<32x1xf32>
    %29 = tpu.reciprocal %28 {approx = true} : vector<32x1xf32> -> vector<32x1xf32>
    %30 = vector.broadcast %29 : vector<32x1xf32> to vector<32x32xf32>
    %31 = arith.mulf %26, %30 : vector<32x32xf32>
    %32 = arith.truncf %31 : vector<32x32xf32> to vector<32x32xbf16>
    %cst_15 = arith.constant dense<0.000000e+00> : vector<32x128xf32>
    %33 = tpu.matmul %32, %17, %cst_15 {dimension_numbers = #tpu.dot_dimension_numbers<[1], [0], [0], [1], [0, 0, 1, 1], [], []>} : vector<32x32xbf16>, vector<32x128xbf16>, vector<32x128xf32> -> vector<32x128xf32>
    %34 = arith.truncf %33 : vector<32x128xf32> to vector<32x128xbf16>
    %c0_16 = arith.constant 0 : index
    %c0_17 = arith.constant 0 : index
    %c0_18 = arith.constant 0 : index
    %35 = vector.load %arg7[%c0_16, %c0_17, %c0_18] : memref<1x256x256xbf16, #tpu.memory_space<vmem>>, vector<1x128x256xbf16>
    %36 = vector.shape_cast %35 : vector<1x128x256xbf16> to vector<128x256xbf16>
    %cst_19 = arith.constant dense<0.000000e+00> : vector<32x256xf32>
    %37 = tpu.matmul %34, %36, %cst_19 {dimension_numbers = #tpu.dot_dimension_numbers<[1], [0], [0], [1], [0, 0, 1, 1], [], []>} : vector<32x128xbf16>, vector<128x256xbf16>, vector<32x256xf32> -> vector<32x256xf32>
    %38 = arith.addf %14, %37 : vector<32x256xf32>
    %39 = vector.extract_strided_slice %12 {offsets = [0, 128], sizes = [32, 128], strides = [1, 1]} : vector<32x768xbf16> to vector<32x128xbf16>
    %40 = vector.extract_strided_slice %12 {offsets = [0, 384], sizes = [32, 128], strides = [1, 1]} : vector<32x768xbf16> to vector<32x128xbf16>
    %41 = vector.extract_strided_slice %12 {offsets = [0, 640], sizes = [32, 128], strides = [1, 1]} : vector<32x768xbf16> to vector<32x128xbf16>
    "tpu.trace_start"() <{level = 10 : i32, message = "qd,kd->qk"}> : () -> ()
    %cst_20 = arith.constant dense<0.000000e+00> : vector<32x32xf32>
    %42 = tpu.matmul %39, %40, %cst_20 {dimension_numbers = #tpu.dot_dimension_numbers<[1], [1], [0], [0], [0, 0, 1, 0], [], []>} : vector<32x128xbf16>, vector<32x128xbf16>, vector<32x32xf32> -> vector<32x32xf32>
    "tpu.trace_stop"() : () -> ()
    %cst_21 = arith.constant 0.0883883461 : f32
    %43 = vector.broadcast %cst_21 : f32 to vector<32x32xf32>
    %44 = arith.mulf %42, %43 : vector<32x32xf32>
    %45 = arith.addf %44, %13 : vector<32x32xf32>
    %cst_22 = arith.constant dense<0xFF800000> : vector<32xf32>
    %46 = vector.multi_reduction <maximumf>, %45, %cst_22 [1] : vector<32x32xf32> to vector<32xf32>
    %47 = vector.shape_cast %46 : vector<32xf32> to vector<32x1xf32>
    %48 = vector.broadcast %47 : vector<32x1xf32> to vector<32x32xf32>
    %49 = arith.subf %45, %48 : vector<32x32xf32>
    %50 = math.exp %49 : vector<32x32xf32>
    %cst_23 = arith.constant dense<0.000000e+00> : vector<32xf32>
    %51 = vector.multi_reduction <add>, %50, %cst_23 [1] : vector<32x32xf32> to vector<32xf32>
    %52 = vector.shape_cast %51 : vector<32xf32> to vector<32x1xf32>
    %53 = tpu.reciprocal %52 {approx = true} : vector<32x1xf32> -> vector<32x1xf32>
    %54 = vector.broadcast %53 : vector<32x1xf32> to vector<32x32xf32>
    %55 = arith.mulf %50, %54 : vector<32x32xf32>
    %56 = arith.truncf %55 : vector<32x32xf32> to vector<32x32xbf16>
    %cst_24 = arith.constant dense<0.000000e+00> : vector<32x128xf32>
    %57 = tpu.matmul %56, %41, %cst_24 {dimension_numbers = #tpu.dot_dimension_numbers<[1], [0], [0], [1], [0, 0, 1, 1], [], []>} : vector<32x32xbf16>, vector<32x128xbf16>, vector<32x128xf32> -> vector<32x128xf32>
    %58 = arith.truncf %57 : vector<32x128xf32> to vector<32x128xbf16>
    %c0_25 = arith.constant 0 : index
    %c128 = arith.constant 128 : index
    %c0_26 = arith.constant 0 : index
    %59 = vector.load %arg7[%c0_25, %c128, %c0_26] : memref<1x256x256xbf16, #tpu.memory_space<vmem>>, vector<1x128x256xbf16>
    %60 = vector.shape_cast %59 : vector<1x128x256xbf16> to vector<128x256xbf16>
    %cst_27 = arith.constant dense<0.000000e+00> : vector<32x256xf32>
    %61 = tpu.matmul %58, %60, %cst_27 {dimension_numbers = #tpu.dot_dimension_numbers<[1], [0], [0], [1], [0, 0, 1, 1], [], []>} : vector<32x128xbf16>, vector<128x256xbf16>, vector<32x256xf32> -> vector<32x256xf32>
    %62 = arith.addf %38, %61 : vector<32x256xf32>
    %c0_28 = arith.constant 0 : index
    %c0_29 = arith.constant 0 : index
    %c0_30 = arith.constant 0 : index
    %63 = vector.load %arg8[%c0_28, %c0_29, %c0_30] : memref<1x1x256xf32, #tpu.memory_space<vmem>>, vector<1x1x256xf32>
    %64 = vector.shape_cast %63 : vector<1x1x256xf32> to vector<1x256xf32>
    %65 = vector.broadcast %64 : vector<1x256xf32> to vector<32x256xf32>
    %66 = arith.addf %62, %65 : vector<32x256xf32>
    %67 = arith.addf %66, %3 : vector<32x256xf32>
    %c0_31 = arith.constant 0 : index
    %c0_32 = arith.constant 0 : index
    %c0_33 = arith.constant 0 : index
    %68 = vector.load %arg9[%c0_31, %c0_32, %c0_33] : memref<1x1x256xf32, #tpu.memory_space<vmem>>, vector<1x1x256xf32>
    %69 = vector.shape_cast %68 : vector<1x1x256xf32> to vector<1x256xf32>
    %c0_34 = arith.constant 0 : index
    %c0_35 = arith.constant 0 : index
    %c0_36 = arith.constant 0 : index
    %70 = vector.load %arg10[%c0_34, %c0_35, %c0_36] : memref<1x1x256xf32, #tpu.memory_space<vmem>>, vector<1x1x256xf32>
    %71 = vector.shape_cast %70 : vector<1x1x256xf32> to vector<1x256xf32>
    %cst_37 = arith.constant dense<0.000000e+00> : vector<32xf32>
    %72 = vector.multi_reduction <add>, %67, %cst_37 [1] : vector<32x256xf32> to vector<32xf32>
    %73 = vector.shape_cast %72 : vector<32xf32> to vector<32x1xf32>
    %cst_38 = arith.constant 2.560000e+02 : f32
    %74 = vector.broadcast %cst_38 : f32 to vector<32x1xf32>
    %75 = arith.divf %73, %74 : vector<32x1xf32>
    %76 = vector.broadcast %75 : vector<32x1xf32> to vector<32x256xf32>
    %77 = arith.subf %67, %76 : vector<32x256xf32>
    %78 = arith.mulf %77, %77 : vector<32x256xf32>
    %cst_39 = arith.constant dense<0.000000e+00> : vector<32xf32>
    %79 = vector.multi_reduction <add>, %78, %cst_39 [1] : vector<32x256xf32> to vector<32xf32>
    %80 = vector.shape_cast %79 : vector<32xf32> to vector<32x1xf32>
    %cst_40 = arith.constant 2.560000e+02 : f32
    %81 = vector.broadcast %cst_40 : f32 to vector<32x1xf32>
    %82 = arith.divf %80, %81 : vector<32x1xf32>
    %83 = vector.broadcast %75 : vector<32x1xf32> to vector<32x256xf32>
    %84 = arith.subf %67, %83 : vector<32x256xf32>
    %cst_41 = arith.constant 9.99999996E-13 : f32
    %85 = vector.broadcast %cst_41 : f32 to vector<32x1xf32>
    %86 = arith.addf %82, %85 : vector<32x1xf32>
    %87 = math.rsqrt %86 : vector<32x1xf32>
    %88 = vector.broadcast %87 : vector<32x1xf32> to vector<32x256xf32>
    %89 = arith.mulf %84, %88 : vector<32x256xf32>
    %90 = vector.broadcast %69 : vector<1x256xf32> to vector<32x256xf32>
    %91 = arith.mulf %89, %90 : vector<32x256xf32>
    %92 = vector.broadcast %71 : vector<1x256xf32> to vector<32x256xf32>
    %93 = arith.addf %91, %92 : vector<32x256xf32>
    %94 = arith.truncf %93 : vector<32x256xf32> to vector<32x256xbf16>
    %c0_42 = arith.constant 0 : index
    %c0_43 = arith.constant 0 : index
    %c0_44 = arith.constant 0 : index
    %95 = vector.load %arg11[%c0_42, %c0_43, %c0_44] : memref<1x256x512xbf16, #tpu.memory_space<vmem>>, vector<1x256x512xbf16>
    %96 = vector.shape_cast %95 : vector<1x256x512xbf16> to vector<256x512xbf16>
    %cst_45 = arith.constant dense<0.000000e+00> : vector<32x512xf32>
    %97 = tpu.matmul %94, %96, %cst_45 {dimension_numbers = #tpu.dot_dimension_numbers<[1], [0], [0], [1], [0, 0, 1, 1], [], []>} : vector<32x256xbf16>, vector<256x512xbf16>, vector<32x512xf32> -> vector<32x512xf32>
    %c0_46 = arith.constant 0 : index
    %c0_47 = arith.constant 0 : index
    %c0_48 = arith.constant 0 : index
    %98 = vector.load %arg12[%c0_46, %c0_47, %c0_48] : memref<1x1x512xf32, #tpu.memory_space<vmem>>, vector<1x1x512xf32>
    %99 = vector.shape_cast %98 : vector<1x1x512xf32> to vector<1x512xf32>
    %100 = vector.broadcast %99 : vector<1x512xf32> to vector<32x512xf32>
    %101 = arith.addf %97, %100 : vector<32x512xf32>
    %102 = arith.mulf %101, %101 : vector<32x512xf32>
    %103 = arith.mulf %101, %102 : vector<32x512xf32>
    %cst_49 = arith.constant 4.471500e-02 : f32
    %104 = vector.broadcast %cst_49 : f32 to vector<32x512xf32>
    %105 = arith.mulf %104, %103 : vector<32x512xf32>
    %106 = arith.addf %101, %105 : vector<32x512xf32>
    %cst_50 = arith.constant 0.797884583 : f32
    %107 = vector.broadcast %cst_50 : f32 to vector<32x512xf32>
    %108 = arith.mulf %107, %106 : vector<32x512xf32>
    %109 = math.tanh %108 : vector<32x512xf32>
    %cst_51 = arith.constant 1.000000e+00 : f32
    %110 = vector.broadcast %cst_51 : f32 to vector<32x512xf32>
    %111 = arith.addf %110, %109 : vector<32x512xf32>
    %cst_52 = arith.constant 5.000000e-01 : f32
    %112 = vector.broadcast %cst_52 : f32 to vector<32x512xf32>
    %113 = arith.mulf %112, %111 : vector<32x512xf32>
    %114 = arith.mulf %101, %113 : vector<32x512xf32>
    %115 = arith.truncf %114 : vector<32x512xf32> to vector<32x512xbf16>
    %c0_53 = arith.constant 0 : index
    %c0_54 = arith.constant 0 : index
    %c0_55 = arith.constant 0 : index
    %116 = vector.load %arg13[%c0_53, %c0_54, %c0_55] : memref<1x512x256xbf16, #tpu.memory_space<vmem>>, vector<1x512x256xbf16>
    %117 = vector.shape_cast %116 : vector<1x512x256xbf16> to vector<512x256xbf16>
    %cst_56 = arith.constant dense<0.000000e+00> : vector<32x256xf32>
    %118 = tpu.matmul %115, %117, %cst_56 {dimension_numbers = #tpu.dot_dimension_numbers<[1], [0], [0], [1], [0, 0, 1, 1], [], []>} : vector<32x512xbf16>, vector<512x256xbf16>, vector<32x256xf32> -> vector<32x256xf32>
    %c0_57 = arith.constant 0 : index
    %c0_58 = arith.constant 0 : index
    %c0_59 = arith.constant 0 : index
    %119 = vector.load %arg14[%c0_57, %c0_58, %c0_59] : memref<1x1x256xf32, #tpu.memory_space<vmem>>, vector<1x1x256xf32>
    %120 = vector.shape_cast %119 : vector<1x1x256xf32> to vector<1x256xf32>
    %121 = vector.broadcast %120 : vector<1x256xf32> to vector<32x256xf32>
    %122 = arith.addf %118, %121 : vector<32x256xf32>
    %123 = arith.addf %122, %93 : vector<32x256xf32>
    %c0_60 = arith.constant 0 : index
    %c0_61 = arith.constant 0 : index
    %c0_62 = arith.constant 0 : index
    %124 = vector.load %arg15[%c0_60, %c0_61, %c0_62] : memref<1x1x256xf32, #tpu.memory_space<vmem>>, vector<1x1x256xf32>
    %125 = vector.shape_cast %124 : vector<1x1x256xf32> to vector<1x256xf32>
    %c0_63 = arith.constant 0 : index
    %c0_64 = arith.constant 0 : index
    %c0_65 = arith.constant 0 : index
    %126 = vector.load %arg16[%c0_63, %c0_64, %c0_65] : memref<1x1x256xf32, #tpu.memory_space<vmem>>, vector<1x1x256xf32>
    %127 = vector.shape_cast %126 : vector<1x1x256xf32> to vector<1x256xf32>
    %cst_66 = arith.constant dense<0.000000e+00> : vector<32xf32>
    %128 = vector.multi_reduction <add>, %123, %cst_66 [1] : vector<32x256xf32> to vector<32xf32>
    %129 = vector.shape_cast %128 : vector<32xf32> to vector<32x1xf32>
    %cst_67 = arith.constant 2.560000e+02 : f32
    %130 = vector.broadcast %cst_67 : f32 to vector<32x1xf32>
    %131 = arith.divf %129, %130 : vector<32x1xf32>
    %132 = vector.broadcast %131 : vector<32x1xf32> to vector<32x256xf32>
    %133 = arith.subf %123, %132 : vector<32x256xf32>
    %134 = arith.mulf %133, %133 : vector<32x256xf32>
    %cst_68 = arith.constant dense<0.000000e+00> : vector<32xf32>
    %135 = vector.multi_reduction <add>, %134, %cst_68 [1] : vector<32x256xf32> to vector<32xf32>
    %136 = vector.shape_cast %135 : vector<32xf32> to vector<32x1xf32>
    %cst_69 = arith.constant 2.560000e+02 : f32
    %137 = vector.broadcast %cst_69 : f32 to vector<32x1xf32>
    %138 = arith.divf %136, %137 : vector<32x1xf32>
    %139 = vector.broadcast %131 : vector<32x1xf32> to vector<32x256xf32>
    %140 = arith.subf %123, %139 : vector<32x256xf32>
    %cst_70 = arith.constant 9.99999996E-13 : f32
    %141 = vector.broadcast %cst_70 : f32 to vector<32x1xf32>
    %142 = arith.addf %138, %141 : vector<32x1xf32>
    %143 = math.rsqrt %142 : vector<32x1xf32>
    %144 = vector.broadcast %143 : vector<32x1xf32> to vector<32x256xf32>
    %145 = arith.mulf %140, %144 : vector<32x256xf32>
    %146 = vector.broadcast %125 : vector<1x256xf32> to vector<32x256xf32>
    %147 = arith.mulf %145, %146 : vector<32x256xf32>
    %148 = vector.broadcast %127 : vector<1x256xf32> to vector<32x256xf32>
    %149 = arith.addf %147, %148 : vector<32x256xf32>
    %c0_71 = arith.constant 0 : index
    %c0_72 = arith.constant 0 : index
    %150 = vector.load %arg22[%c0_71, %c0_72] : memref<32x256xf32, #tpu.memory_space<vmem>>, vector<32x256xf32>
    tpu.vector_store %arg22[%c0_71, %c0_72], %149 {strides = array<i32>} : memref<32x256xf32, #tpu.memory_space<vmem>>, vector<32x256xf32>,
    %c1_i32 = arith.constant 1 : i32
    %151 = arith.cmpi eq, %arg0, %c1_i32 : i32
    %152 = arith.extui %151 : i1 to i32
    %c0_i32_73 = arith.constant 0 : i32
    %153 = arith.cmpi ne, %152, %c0_i32_73 : i32
    scf.if %153 {
      %154 = vector.shape_cast %149 : vector<32x256xf32> to vector<2x16x256xf32>
      %155 = vector.extract_strided_slice %154 {offsets = [0, 0, 0], sizes = [2, 1, 256], strides = [1, 1, 1]} : vector<2x16x256xf32> to vector<2x1x256xf32>
      %156 = vector.shape_cast %155 : vector<2x1x256xf32> to vector<2x256xf32>
      %157 = arith.truncf %156 : vector<2x256xf32> to vector<2x256xbf16>
      %c0_74 = arith.constant 0 : index
      %c0_75 = arith.constant 0 : index
      %158 = vector.load %arg17[%c0_74, %c0_75] : memref<256x256xbf16, #tpu.memory_space<vmem>>, vector<256x256xbf16>
      %cst_76 = arith.constant dense<0.000000e+00> : vector<2x256xf32>
      %159 = tpu.matmul %157, %158, %cst_76 {dimension_numbers = #tpu.dot_dimension_numbers<[1], [0], [0], [1], [0, 0, 1, 1], [], []>} : vector<2x256xbf16>, vector<256x256xbf16>, vector<2x256xf32> -> vector<2x256xf32>
      %c0_77 = arith.constant 0 : index
      %c0_78 = arith.constant 0 : index
      %160 = vector.load %arg18[%c0_77, %c0_78] : memref<1x256xf32, #tpu.memory_space<vmem>>, vector<1x256xf32>
      %161 = vector.broadcast %160 : vector<1x256xf32> to vector<2x256xf32>
      %162 = arith.addf %159, %161 : vector<2x256xf32>
      %163 = math.tanh %162 : vector<2x256xf32>
      %164 = arith.truncf %163 : vector<2x256xf32> to vector<2x256xbf16>
      %c0_79 = arith.constant 0 : index
      %c0_80 = arith.constant 0 : index
      %165 = vector.load %arg19[%c0_79, %c0_80] : memref<256x128xbf16, #tpu.memory_space<vmem>>, vector<256x128xbf16>
      %cst_81 = arith.constant dense<0.000000e+00> : vector<2x128xf32>
      %166 = tpu.matmul %164, %165, %cst_81 {dimension_numbers = #tpu.dot_dimension_numbers<[1], [0], [0], [1], [0, 0, 1, 1], [], []>} : vector<2x256xbf16>, vector<256x128xbf16>, vector<2x128xf32> -> vector<2x128xf32>
      %c0_82 = arith.constant 0 : index
      %c0_83 = arith.constant 0 : index
      %167 = vector.load %arg20[%c0_82, %c0_83] : memref<1x128xf32, #tpu.memory_space<vmem>>, vector<1x128xf32>
      %168 = vector.broadcast %167 : vector<1x128xf32> to vector<2x128xf32>
      %169 = arith.addf %166, %168 : vector<2x128xf32>
      %c0_84 = arith.constant 0 : index
      %c0_85 = arith.constant 0 : index
      %170 = vector.load %arg21[%c0_84, %c0_85] : memref<2x128xf32, #tpu.memory_space<vmem>>, vector<2x128xf32>
      tpu.vector_store %arg21[%c0_84, %c0_85], %169 {strides = array<i32>} : memref<2x128xf32, #tpu.memory_space<vmem>>, vector<2x128xf32>,
    } else {
    }
    return
  }
  func.func @transform_0(%arg0: i32) -> (i32, i32) {
    %c0_i32 = arith.constant 0 : i32
    %c0_i32_0 = arith.constant 0 : i32
    %c0_i32_1 = arith.constant 0 : i32
    return %c0_i32, %c0_i32_0 : i32, i32
  }
  func.func @transform_1(%arg0: i32) -> (i32, i32) {
    %c0_i32 = arith.constant 0 : i32
    %c0_i32_0 = arith.constant 0 : i32
    %c0_i32_1 = arith.constant 0 : i32
    return %c0_i32, %c0_i32_0 : i32, i32
  }
  func.func @transform_2(%arg0: i32) -> (i32, i32) {
    %c0_i32 = arith.constant 0 : i32
    %c0_i32_0 = arith.constant 0 : i32
    %c0_i32_1 = arith.constant 0 : i32
    return %c0_i32, %c0_i32_0 : i32, i32
  }
  func.func @transform_3(%arg0: i32) -> (i32, i32) {
    %c0_i32 = arith.constant 0 : i32
    %c0_i32_0 = arith.constant 0 : i32
    %c0_i32_1 = arith.constant 0 : i32
    return %c0_i32, %c0_i32_0 : i32, i32
  }
  func.func @transform_4(%arg0: i32) -> (i32, i32, i32) {
    %c0_i32 = arith.constant 0 : i32
    %c0_i32_0 = arith.constant 0 : i32
    %c0_i32_1 = arith.constant 0 : i32
    return %arg0, %c0_i32, %c0_i32_0 : i32, i32, i32
  }
  func.func @transform_5(%arg0: i32) -> (i32, i32, i32) {
    %c0_i32 = arith.constant 0 : i32
    %c0_i32_0 = arith.constant 0 : i32
    %c0_i32_1 = arith.constant 0 : i32
    return %arg0, %c0_i32, %c0_i32_0 : i32, i32, i32
  }
  func.func @transform_6(%arg0: i32) -> (i32, i32, i32) {
    %c0_i32 = arith.constant 0 : i32
    %c0_i32_0 = arith.constant 0 : i32
    %c0_i32_1 = arith.constant 0 : i32
    return %arg0, %c0_i32, %c0_i32_0 : i32, i32, i32
  }
  func.func @transform_7(%arg0: i32) -> (i32, i32, i32) {
    %c0_i32 = arith.constant 0 : i32
    %c0_i32_0 = arith.constant 0 : i32
    %c0_i32_1 = arith.constant 0 : i32
    return %arg0, %c0_i32, %c0_i32_0 : i32, i32, i32
  }
  func.func @transform_8(%arg0: i32) -> (i32, i32, i32) {
    %c0_i32 = arith.constant 0 : i32
    %c0_i32_0 = arith.constant 0 : i32
    %c0_i32_1 = arith.constant 0 : i32
    return %arg0, %c0_i32, %c0_i32_0 : i32, i32, i32
  }
  func.func @transform_9(%arg0: i32) -> (i32, i32, i32) {
    %c0_i32 = arith.constant 0 : i32
    %c0_i32_0 = arith.constant 0 : i32
    %c0_i32_1 = arith.constant 0 : i32
    return %arg0, %c0_i32, %c0_i32_0 : i32, i32, i32
  }
  func.func @transform_10(%arg0: i32) -> (i32, i32, i32) {
    %c0_i32 = arith.constant 0 : i32
    %c0_i32_0 = arith.constant 0 : i32
    %c0_i32_1 = arith.constant 0 : i32
    return %arg0, %c0_i32, %c0_i32_0 : i32, i32, i32
  }
  func.func @transform_11(%arg0: i32) -> (i32, i32, i32) {
    %c0_i32 = arith.constant 0 : i32
    %c0_i32_0 = arith.constant 0 : i32
    %c0_i32_1 = arith.constant 0 : i32
    return %arg0, %c0_i32, %c0_i32_0 : i32, i32, i32
  }
  func.func @transform_12(%arg0: i32) -> (i32, i32, i32) {
    %c0_i32 = arith.constant 0 : i32
    %c0_i32_0 = arith.constant 0 : i32
    %c0_i32_1 = arith.constant 0 : i32
    return %arg0, %c0_i32, %c0_i32_0 : i32, i32, i32
  }
  func.func @transform_13(%arg0: i32) -> (i32, i32, i32) {
    %c0_i32 = arith.constant 0 : i32
    %c0_i32_0 = arith.constant 0 : i32
    %c0_i32_1 = arith.constant 0 : i32
    return %arg0, %c0_i32, %c0_i32_0 : i32, i32, i32
  }
  func.func @transform_14(%arg0: i32) -> (i32, i32, i32) {
    %c0_i32 = arith.constant 0 : i32
    %c0_i32_0 = arith.constant 0 : i32
    %c0_i32_1 = arith.constant 0 : i32
    return %arg0, %c0_i32, %c0_i32_0 : i32, i32, i32
  }
  func.func @transform_15(%arg0: i32) -> (i32, i32, i32) {
    %c0_i32 = arith.constant 0 : i32
    %c0_i32_0 = arith.constant 0 : i32
    %c0_i32_1 = arith.constant 0 : i32
    return %arg0, %c0_i32, %c0_i32_0 : i32, i32, i32
  }
  func.func @transform_16(%arg0: i32) -> (i32, i32) {
    %c0_i32 = arith.constant 0 : i32
    %c0_i32_0 = arith.constant 0 : i32
    %c0_i32_1 = arith.constant 0 : i32
    return %c0_i32, %c0_i32_0 : i32, i32
  }
  func.func @transform_17(%arg0: i32) -> (i32, i32) {
    %c0_i32 = arith.constant 0 : i32
    %c0_i32_0 = arith.constant 0 : i32
    %c0_i32_1 = arith.constant 0 : i32
    return %c0_i32, %c0_i32_0 : i32, i32
  }
  func.func @transform_18(%arg0: i32) -> (i32, i32) {
    %c0_i32 = arith.constant 0 : i32
    %c0_i32_0 = arith.constant 0 : i32
    %c0_i32_1 = arith.constant 0 : i32
    return %c0_i32, %c0_i32_0 : i32, i32
  }
  func.func @transform_19(%arg0: i32) -> (i32, i32) {
    %c0_i32 = arith.constant 0 : i32
    %c0_i32_0 = arith.constant 0 : i32
    %c0_i32_1 = arith.constant 0 : i32
    return %c0_i32, %c0_i32_0 : i32, i32
  }
  func.func @transform_20(%arg0: i32) -> (i32, i32) {
    %c0_i32 = arith.constant 0 : i32
    %c0_i32_0 = arith.constant 0 : i32
    %c0_i32_1 = arith.constant 0 : i32
    return %c0_i32, %c0_i32_0 : i32, i32
  }
}

</mosaic_0001>

<llo_original>
// kernel: question_encoder_forward.1
$region0: #{question_encoder_forward.1}
  #allocation0 [shape = 'u32[]', space=smem, size = 0x4, offset = 0x4, fixed_abs, tag = 'smem constant byte address 0x4 - core index']
  #allocation1 [shape = 'u32[144,128]{1,0:T(1,128)}', space=vmem, size = 0x12000, scoped, tag = 'internal scratch']
  #allocation2 [shape = 'f32[32,256]{1,0:T(8,128)}', space=vmem, size = 0x8000, scoped, tag = 'scratch operand']
  %s0 = inlined_call_operand.vmem [shape: f32[32,256], index: 0, kind: input, shape index: {}]
  %s1 = inlined_call_operand.vmem [shape: f32[32,32], index: 1, kind: input, shape index: {}]
  %s2 = inlined_call_operand.vmem [shape: f32[1,256], index: 2, kind: input, shape index: {}]
  %s3 = inlined_call_operand.vmem [shape: f32[1,256], index: 3, kind: input, shape index: {}]
  %s4 = inlined_call_operand.hbm [shape: bf16[2,256,768], index: 4, kind: input, shape index: {}]
  %s5 = inlined_call_operand.vmem [shape: f32[2,1,768], index: 5, kind: input, shape index: {}]
  %s6 = inlined_call_operand.vmem [shape: bf16[2,256,256], index: 6, kind: input, shape index: {}]
  %s7 = inlined_call_operand.vmem [shape: f32[2,1,256], index: 7, kind: input, shape index: {}]
  %s8 = inlined_call_operand.vmem [shape: f32[2,1,256], index: 8, kind: input, shape index: {}]
  %s9 = inlined_call_operand.vmem [shape: f32[2,1,256], index: 9, kind: input, shape index: {}]
  %s10 = inlined_call_operand.hbm [shape: bf16[2,256,512], index: 10, kind: input, shape index: {}]
  %s11 = inlined_call_operand.vmem [shape: f32[2,1,512], index: 11, kind: input, shape index: {}]
  %s12 = inlined_call_operand.hbm [shape: bf16[2,512,256], index: 12, kind: input, shape index: {}]
  %s13 = inlined_call_operand.vmem [shape: f32[2,1,256], index: 13, kind: input, shape index: {}]
  %s14 = inlined_call_operand.vmem [shape: f32[2,1,256], index: 14, kind: input, shape index: {}]
  %s15 = inlined_call_operand.vmem [shape: f32[2,1,256], index: 15, kind: input, shape index: {}]
  %s16 = inlined_call_operand.vmem [shape: bf16[256,256], index: 16, kind: input, shape index: {}]
  %s17 = inlined_call_operand.vmem [shape: f32[1,256], index: 17, kind: input, shape index: {}]
  %s18 = inlined_call_operand.vmem [shape: bf16[256,128], index: 18, kind: input, shape index: {}]
  %s19 = inlined_call_operand.vmem [shape: f32[1,128], index: 19, kind: input, shape index: {}]
  %s20 = inlined_call_operand.hbm [shape: f32[2,128], index: 20, kind: output, shape index: {}]
  %s21 = sld [smem:[#allocation0]]
  $region133: #{question_encoder_forward.1} parent=0
    _
  %s23 = ssub.s32 1, %s21
  %s24 = scalar_select 0, %s23, %s21
  $region1: #{question_encoder_forward.1} parent=0
    #allocation3 [shape = 'u8[786432]{0}', space=vmem, size = 0xc0000, scoped, tag = 'input window, operand 4']
    #allocation4 [shape = 's32[2]{0}', space=sflag, size = 0x8, scoped, tag = 'scoped memory for question_encoder_forward.1']
    #allocation5 [shape = 's32[2]{0}', space=sflag, size = 0x8, scoped, tag = 'scoped memory for question_encoder_forward.1']
    #allocation6 [shape = 'u8[524288]{0}', space=vmem, size = 0x80000, scoped, tag = 'input window, operand 10']
    #allocation7 [shape = 's32[2]{0}', space=sflag, size = 0x8, scoped, tag = 'scoped memory for question_encoder_forward.1']
    #allocation8 [shape = 'u8[524288]{0}', space=vmem, size = 0x80000, scoped, tag = 'input window, operand 12']
    #allocation9 [shape = 'u8[1024]{0}', space=vmem, size = 0x400, scoped, tag = 'output window, operand 0, single buffered']
    %25 = vsyncpa [#allocation4], 0
    %s26 = scalar_lea.sflag [#allocation4], 1
    %27 = vsyncpa %s26, 0
    %28 = vsyncpa [#allocation7], 0
    %s29 = scalar_lea.sflag [#allocation7], 1
    %30 = vsyncpa %s29, 0
    %31 = vsyncpa [#allocation5], 0
    loop: start=0, step=1, limit=4
    $region2: #{question_encoder_forward.1} parent=1 // loop_pre_header
      _
    $region3: #{question_encoder_forward.1} parent=1 // loop_header
      %s33 = sphi 0, %s37
      %p34 = scmp.ge.s32.totalorder %s33, 4
      %s41 = sphi 0, %s41
      %s43 = sphi 0, %s41
      %s44 = sphi 0, %s43
      %s58 = sphi 0, %s44
      %s62 = sphi 0, %s62
      %s64 = sphi 0, %s62
      %s65 = sphi 0, %s64
      %s79 = sphi 0, %s65
      %s83 = sphi 0, %s83
      %s85 = sphi 0, %s83
      %s86 = sphi 0, %s85
      %s100 = sphi 0, %s86
      %s104 = sphi 0, %s104
      %s106 = sphi 0, %s104
      %s107 = sphi 0, %s106
      %s121 = sphi 0, %s107
      %s127 = sphi 0, %s129
      %s130 = sphi 0, %s127
      %s131 = sphi 0, %s130
      %s147 = sphi 0, %s131
      %s153 = sphi 0, %s155
      %s156 = sphi 0, %s153
      %s157 = sphi 0, %s156
      %s173 = sphi 0, %s157
      %s179 = sphi 0, %s181
      %s182 = sphi 0, %s179
      %s183 = sphi 0, %s182
      %s199 = sphi 0, %s183
      %s205 = sphi 0, %s207
      %s208 = sphi 0, %s205
      %s209 = sphi 0, %s208
      %s225 = sphi 0, %s209
      %s231 = sphi 0, %s233
      %s234 = sphi 0, %s231
      %s235 = sphi 0, %s234
      %s251 = sphi 0, %s235
      %s257 = sphi 0, %s259
      %s260 = sphi 0, %s257
      %s261 = sphi 0, %s260
      %s277 = sphi 0, %s261
      %s283 = sphi 0, %s285
      %s286 = sphi 0, %s283
      %s287 = sphi 0, %s286
      %s303 = sphi 0, %s287
      %s309 = sphi 0, %s311
      %s312 = sphi 0, %s309
      %s313 = sphi 0, %s312
      %s329 = sphi 0, %s313
      %s335 = sphi 0, %s337
      %s338 = sphi 0, %s335
      %s339 = sphi 0, %s338
      %s355 = sphi 0, %s339
      %s361 = sphi 0, %s363
      %s364 = sphi 0, %s361
      %s365 = sphi 0, %s364
      %s381 = sphi 0, %s365
      %s387 = sphi 0, %s389
      %s390 = sphi 0, %s387
      %s391 = sphi 0, %s390
      %s407 = sphi 0, %s391
      %s413 = sphi 0, %s415
      %s416 = sphi 0, %s413
      %s417 = sphi 0, %s416
      %s433 = sphi 0, %s417
      %s437 = sphi 0, %s437
      %s439 = sphi 0, %s437
      %s440 = sphi 0, %s439
      %s454 = sphi 0, %s440
      %s458 = sphi 0, %s458
      %s460 = sphi 0, %s458
      %s461 = sphi 0, %s460
      %s475 = sphi 0, %s461
      %s479 = sphi 0, %s479
      %s481 = sphi 0, %s479
      %s482 = sphi 0, %s481
      %s496 = sphi 0, %s482
      %s500 = sphi 0, %s500
      %s502 = sphi 0, %s500
      %s503 = sphi 0, %s502
      %s517 = sphi 0, %s503
      %s521 = sphi 0, %s521
      %s523 = sphi 0, %s521
      %s524 = sphi 0, %s523
      %s538 = sphi 0, %s524
    $region4: #{question_encoder_forward.1} parent=1 // loop_header_branch
      %36 = sbr.rel (%p34) target = $region8
    $region5: #{question_encoder_forward.1} parent=1 // loop_body
      %s38 = ssub.s32 %s33, 1
      %s39 = ssub.s32 %s33, 2
      %s40 = sadd.s32 %s33, 1
      %s42 = sadd.s32 %s41, 1
      %p45 = scmp.eq.s32.totalorder %s33, 1
      %p46 = scmp.ne.s32.totalorder %s41, %s43
      %p47 = scmp.eq.s32.totalorder %s33, 0
      %p48 = por %p46, %p47
      %p49 = scmp.ne.s32.totalorder %s41, %s43
      %p50 = scmp.eq.s32.totalorder %s38, 1
      %p51 = por %p49, %p50
      %p52 = scmp.ne.s32.totalorder %s43, %s44
      %p53 = scmp.eq.s32.totalorder %s38, 0
      %p54 = por %p52, %p53
      %p55 = scmp.ne.s32.totalorder %s43, %s44
      %p56 = scmp.eq.s32.totalorder %s39, 1
      %p57 = por %p55, %p56
      %p59 = scmp.ne.s32.totalorder %s44, %s58
      %p60 = scmp.eq.s32.totalorder %s39, 0
      %p61 = por %p59, %p60
      %s63 = sadd.s32 %s62, 1
      %p66 = scmp.eq.s32.totalorder %s33, 1
      %p67 = scmp.ne.s32.totalorder %s62, %s64
      %p68 = scmp.eq.s32.totalorder %s33, 0
      %p69 = por %p67, %p68
      %p70 = scmp.ne.s32.totalorder %s62, %s64
      %p71 = scmp.eq.s32.totalorder %s38, 1
      %p72 = por %p70, %p71
      %p73 = scmp.ne.s32.totalorder %s64, %s65
      %p74 = scmp.eq.s32.totalorder %s38, 0
      %p75 = por %p73, %p74
      %p76 = scmp.ne.s32.totalorder %s64, %s65
      %p77 = scmp.eq.s32.totalorder %s39, 1
      %p78 = por %p76, %p77
      %p80 = scmp.ne.s32.totalorder %s65, %s79
      %p81 = scmp.eq.s32.totalorder %s39, 0
      %p82 = por %p80, %p81
      %s84 = sadd.s32 %s83, 1
      %p87 = scmp.eq.s32.totalorder %s33, 1
      %p88 = scmp.ne.s32.totalorder %s83, %s85
      %p89 = scmp.eq.s32.totalorder %s33, 0
      %p90 = por %p88, %p89
      %p91 = scmp.ne.s32.totalorder %s83, %s85
      %p92 = scmp.eq.s32.totalorder %s38, 1
      %p93 = por %p91, %p92
      %p94 = scmp.ne.s32.totalorder %s85, %s86
      %p95 = scmp.eq.s32.totalorder %s38, 0
      %p96 = por %p94, %p95
      %p97 = scmp.ne.s32.totalorder %s85, %s86
      %p98 = scmp.eq.s32.totalorder %s39, 1
      %p99 = por %p97, %p98
      %p101 = scmp.ne.s32.totalorder %s86, %s100
      %p102 = scmp.eq.s32.totalorder %s39, 0
      %p103 = por %p101, %p102
      %s105 = sadd.s32 %s104, 1
      %p108 = scmp.eq.s32.totalorder %s33, 1
      %p109 = scmp.ne.s32.totalorder %s104, %s106
      %p110 = scmp.eq.s32.totalorder %s33, 0
      %p111 = por %p109, %p110
      %p112 = scmp.ne.s32.totalorder %s104, %s106
      %p113 = scmp.eq.s32.totalorder %s38, 1
      %p114 = por %p112, %p113
      %p115 = scmp.ne.s32.totalorder %s106, %s107
      %p116 = scmp.eq.s32.totalorder %s38, 0
      %p117 = por %p115, %p116
      %p118 = scmp.ne.s32.totalorder %s106, %s107
      %p119 = scmp.eq.s32.totalorder %s39, 1
      %p120 = por %p118, %p119
      %p122 = scmp.ne.s32.totalorder %s107, %s121
      %p123 = scmp.eq.s32.totalorder %s39, 0
      %p124 = por %p122, %p123
      %s125 = ssub.s32 %s33, %s40
      %p126 = scmp.eq.s32.totalorder %s125, 0
      %s128 = sadd.s32 %s127, 1
      %s129 = scalar_select %p126, %s127, %s128
      %p132 = pneg %p126
      %p133 = scmp.eq.s32.totalorder %s33, 1
      %p134 = por %p132, %p133
      %p135 = scmp.ne.s32.totalorder %s127, %s130
      %p136 = scmp.eq.s32.totalorder %s33, 0
      %p137 = por %p135, %p136
      %p138 = scmp.ne.s32.totalorder %s127, %s130
      %p139 = scmp.eq.s32.totalorder %s38, 1
      %p140 = por %p138, %p139
      %p141 = scmp.ne.s32.totalorder %s130, %s131
      %p142 = scmp.eq.s32.totalorder %s38, 0
      %p143 = por %p141, %p142
      %p144 = scmp.ne.s32.totalorder %s130, %s131
      %p145 = scmp.eq.s32.totalorder %s39, 1
      %p146 = por %p144, %p145
      %p148 = scmp.ne.s32.totalorder %s131, %s147
      %p149 = scmp.eq.s32.totalorder %s39, 0
      %p150 = por %p148, %p149
      %s151 = ssub.s32 %s33, %s40
      %p152 = scmp.eq.s32.totalorder %s151, 0
      %s154 = sadd.s32 %s153, 1
      %s155 = scalar_select %p152, %s153, %s154
      %p158 = pneg %p152
      %p159 = scmp.eq.s32.totalorder %s33, 1
      %p160 = por %p158, %p159
      %p161 = scmp.ne.s32.totalorder %s153, %s156
      %p162 = scmp.eq.s32.totalorder %s33, 0
      %p163 = por %p161, %p162
      %p164 = scmp.ne.s32.totalorder %s153, %s156
      %p165 = scmp.eq.s32.totalorder %s38, 1
      %p166 = por %p164, %p165
      %p167 = scmp.ne.s32.totalorder %s156, %s157
      %p168 = scmp.eq.s32.totalorder %s38, 0
      %p169 = por %p167, %p168
      %p170 = scmp.ne.s32.totalorder %s156, %s157
      %p171 = scmp.eq.s32.totalorder %s39, 1
      %p172 = por %p170, %p171
      %p174 = scmp.ne.s32.totalorder %s157, %s173
      %p175 = scmp.eq.s32.totalorder %s39, 0
      %p176 = por %p174, %p175
      %s177 = ssub.s32 %s33, %s40
      %p178 = scmp.eq.s32.totalorder %s177, 0
      %s180 = sadd.s32 %s179, 1
      %s181 = scalar_select %p178, %s179, %s180
      %p184 = pneg %p178
      %p185 = scmp.eq.s32.totalorder %s33, 1
      %p186 = por %p184, %p185
      %p187 = scmp.ne.s32.totalorder %s179, %s182
      %p188 = scmp.eq.s32.totalorder %s33, 0
      %p189 = por %p187, %p188
      %p190 = scmp.ne.s32.totalorder %s179, %s182
      %p191 = scmp.eq.s32.totalorder %s38, 1
      %p192 = por %p190, %p191
      %p193 = scmp.ne.s32.totalorder %s182, %s183
      %p194 = scmp.eq.s32.totalorder %s38, 0
      %p195 = por %p193, %p194
      %p196 = scmp.ne.s32.totalorder %s182, %s183
      %p197 = scmp.eq.s32.totalorder %s39, 1
      %p198 = por %p196, %p197
      %p200 = scmp.ne.s32.totalorder %s183, %s199
      %p201 = scmp.eq.s32.totalorder %s39, 0
      %p202 = por %p200, %p201
      %s203 = ssub.s32 %s33, %s40
      %p204 = scmp.eq.s32.totalorder %s203, 0
      %s206 = sadd.s32 %s205, 1
      %s207 = scalar_select %p204, %s205, %s206
      %p210 = pneg %p204
      %p211 = scmp.eq.s32.totalorder %s33, 1
      %p212 = por %p210, %p211
      %p213 = scmp.ne.s32.totalorder %s205, %s208
      %p214 = scmp.eq.s32.totalorder %s33, 0
      %p215 = por %p213, %p214
      %p216 = scmp.ne.s32.totalorder %s205, %s208
      %p217 = scmp.eq.s32.totalorder %s38, 1
      %p218 = por %p216, %p217
      %p219 = scmp.ne.s32.totalorder %s208, %s209
      %p220 = scmp.eq.s32.totalorder %s38, 0
      %p221 = por %p219, %p220
      %p222 = scmp.ne.s32.totalorder %s208, %s209
      %p223 = scmp.eq.s32.totalorder %s39, 1
      %p224 = por %p222, %p223
      %p226 = scmp.ne.s32.totalorder %s209, %s225
      %p227 = scmp.eq.s32.totalorder %s39, 0
      %p228 = por %p226, %p227
      %s229 = ssub.s32 %s33, %s40
      %p230 = scmp.eq.s32.totalorder %s229, 0
      %s232 = sadd.s32 %s231, 1
      %s233 = scalar_select %p230, %s231, %s232
      %p236 = pneg %p230
      %p237 = scmp.eq.s32.totalorder %s33, 1
      %p238 = por %p236, %p237
      %p239 = scmp.ne.s32.totalorder %s231, %s234
      %p240 = scmp.eq.s32.totalorder %s33, 0
      %p241 = por %p239, %p240
      %p242 = scmp.ne.s32.totalorder %s231, %s234
      %p243 = scmp.eq.s32.totalorder %s38, 1
      %p244 = por %p242, %p243
      %p245 = scmp.ne.s32.totalorder %s234, %s235
      %p246 = scmp.eq.s32.totalorder %s38, 0
      %p247 = por %p245, %p246
      %p248 = scmp.ne.s32.totalorder %s234, %s235
      %p249 = scmp.eq.s32.totalorder %s39, 1
      %p250 = por %p248, %p249
      %p252 = scmp.ne.s32.totalorder %s235, %s251
      %p253 = scmp.eq.s32.totalorder %s39, 0
      %p254 = por %p252, %p253
      %s255 = ssub.s32 %s33, %s40
      %p256 = scmp.eq.s32.totalorder %s255, 0
      %s258 = sadd.s32 %s257, 1
      %s259 = scalar_select %p256, %s257, %s258
      %p262 = pneg %p256
      %p263 = scmp.eq.s32.totalorder %s33, 1
      %p264 = por %p262, %p263
      %p265 = scmp.ne.s32.totalorder %s257, %s260
      %p266 = scmp.eq.s32.totalorder %s33, 0
      %p267 = por %p265, %p266
      %p268 = scmp.ne.s32.totalorder %s257, %s260
      %p269 = scmp.eq.s32.totalorder %s38, 1
      %p270 = por %p268, %p269
      %p271 = scmp.ne.s32.totalorder %s260, %s261
      %p272 = scmp.eq.s32.totalorder %s38, 0
      %p273 = por %p271, %p272
      %p274 = scmp.ne.s32.totalorder %s260, %s261
      %p275 = scmp.eq.s32.totalorder %s39, 1
      %p276 = por %p274, %p275
      %p278 = scmp.ne.s32.totalorder %s261, %s277
      %p279 = scmp.eq.s32.totalorder %s39, 0
      %p280 = por %p278, %p279
      %s281 = ssub.s32 %s33, %s40
      %p282 = scmp.eq.s32.totalorder %s281, 0
      %s284 = sadd.s32 %s283, 1
      %s285 = scalar_select %p282, %s283, %s284
      %p288 = pneg %p282
      %p289 = scmp.eq.s32.totalorder %s33, 1
      %p290 = por %p288, %p289
      %p291 = scmp.ne.s32.totalorder %s283, %s286
      %p292 = scmp.eq.s32.totalorder %s33, 0
      %p293 = por %p291, %p292
      %p294 = scmp.ne.s32.totalorder %s283, %s286
      %p295 = scmp.eq.s32.totalorder %s38, 1
      %p296 = por %p294, %p295
      %p297 = scmp.ne.s32.totalorder %s286, %s287
      %p298 = scmp.eq.s32.totalorder %s38, 0
      %p299 = por %p297, %p298
      %p300 = scmp.ne.s32.totalorder %s286, %s287
      %p301 = scmp.eq.s32.totalorder %s39, 1
      %p302 = por %p300, %p301
      %p304 = scmp.ne.s32.totalorder %s287, %s303
      %p305 = scmp.eq.s32.totalorder %s39, 0
      %p306 = por %p304, %p305
      %s307 = ssub.s32 %s33, %s40
      %p308 = scmp.eq.s32.totalorder %s307, 0
      %s310 = sadd.s32 %s309, 1
      %s311 = scalar_select %p308, %s309, %s310
      %p314 = pneg %p308
      %p315 = scmp.eq.s32.totalorder %s33, 1
      %p316 = por %p314, %p315
      %p317 = scmp.ne.s32.totalorder %s309, %s312
      %p318 = scmp.eq.s32.totalorder %s33, 0
      %p319 = por %p317, %p318
      %p320 = scmp.ne.s32.totalorder %s309, %s312
      %p321 = scmp.eq.s32.totalorder %s38, 1
      %p322 = por %p320, %p321
      %p323 = scmp.ne.s32.totalorder %s312, %s313
      %p324 = scmp.eq.s32.totalorder %s38, 0
      %p325 = por %p323, %p324
      %p326 = scmp.ne.s32.totalorder %s312, %s313
      %p327 = scmp.eq.s32.totalorder %s39, 1
      %p328 = por %p326, %p327
      %p330 = scmp.ne.s32.totalorder %s313, %s329
      %p331 = scmp.eq.s32.totalorder %s39, 0
      %p332 = por %p330, %p331
      %s333 = ssub.s32 %s33, %s40
      %p334 = scmp.eq.s32.totalorder %s333, 0
      %s336 = sadd.s32 %s335, 1
      %s337 = scalar_select %p334, %s335, %s336
      %p340 = pneg %p334
      %p341 = scmp.eq.s32.totalorder %s33, 1
      %p342 = por %p340, %p341
      %p343 = scmp.ne.s32.totalorder %s335, %s338
      %p344 = scmp.eq.s32.totalorder %s33, 0
      %p345 = por %p343, %p344
      %p346 = scmp.ne.s32.totalorder %s335, %s338
      %p347 = scmp.eq.s32.totalorder %s38, 1
      %p348 = por %p346, %p347
      %p349 = scmp.ne.s32.totalorder %s338, %s339
      %p350 = scmp.eq.s32.totalorder %s38, 0
      %p351 = por %p349, %p350
      %p352 = scmp.ne.s32.totalorder %s338, %s339
      %p353 = scmp.eq.s32.totalorder %s39, 1
      %p354 = por %p352, %p353
      %p356 = scmp.ne.s32.totalorder %s339, %s355
      %p357 = scmp.eq.s32.totalorder %s39, 0
      %p358 = por %p356, %p357
      %s359 = ssub.s32 %s33, %s40
      %p360 = scmp.eq.s32.totalorder %s359, 0
      %s362 = sadd.s32 %s361, 1
      %s363 = scalar_select %p360, %s361, %s362
      %p366 = pneg %p360
      %p367 = scmp.eq.s32.totalorder %s33, 1
      %p368 = por %p366, %p367
      %p369 = scmp.ne.s32.totalorder %s361, %s364
      %p370 = scmp.eq.s32.totalorder %s33, 0
      %p371 = por %p369, %p370
      %p372 = scmp.ne.s32.totalorder %s361, %s364
      %p373 = scmp.eq.s32.totalorder %s38, 1
      %p374 = por %p372, %p373
      %p375 = scmp.ne.s32.totalorder %s364, %s365
      %p376 = scmp.eq.s32.totalorder %s38, 0
      %p377 = por %p375, %p376
      %p378 = scmp.ne.s32.totalorder %s364, %s365
      %p379 = scmp.eq.s32.totalorder %s39, 1
      %p380 = por %p378, %p379
      %p382 = scmp.ne.s32.totalorder %s365, %s381
      %p383 = scmp.eq.s32.totalorder %s39, 0
      %p384 = por %p382, %p383
      %s385 = ssub.s32 %s33, %s40
      %p386 = scmp.eq.s32.totalorder %s385, 0
      %s388 = sadd.s32 %s387, 1
      %s389 = scalar_select %p386, %s387, %s388
      %p392 = pneg %p386
      %p393 = scmp.eq.s32.totalorder %s33, 1
      %p394 = por %p392, %p393
      %p395 = scmp.ne.s32.totalorder %s387, %s390
      %p396 = scmp.eq.s32.totalorder %s33, 0
      %p397 = por %p395, %p396
      %p398 = scmp.ne.s32.totalorder %s387, %s390
      %p399 = scmp.eq.s32.totalorder %s38, 1
      %p400 = por %p398, %p399
      %p401 = scmp.ne.s32.totalorder %s390, %s391
      %p402 = scmp.eq.s32.totalorder %s38, 0
      %p403 = por %p401, %p402
      %p404 = scmp.ne.s32.totalorder %s390, %s391
      %p405 = scmp.eq.s32.totalorder %s39, 1
      %p406 = por %p404, %p405
      %p408 = scmp.ne.s32.totalorder %s391, %s407
      %p409 = scmp.eq.s32.totalorder %s39, 0
      %p410 = por %p408, %p409
      %s411 = ssub.s32 %s33, %s40
      %p412 = scmp.eq.s32.totalorder %s411, 0
      %s414 = sadd.s32 %s413, 1
      %s415 = scalar_select %p412, %s413, %s414
      %p418 = pneg %p412
      %p419 = scmp.eq.s32.totalorder %s33, 1
      %p420 = por %p418, %p419
      %p421 = scmp.ne.s32.totalorder %s413, %s416
      %p422 = scmp.eq.s32.totalorder %s33, 0
      %p423 = por %p421, %p422
      %p424 = scmp.ne.s32.totalorder %s413, %s416
      %p425 = scmp.eq.s32.totalorder %s38, 1
      %p426 = por %p424, %p425
      %p427 = scmp.ne.s32.totalorder %s416, %s417
      %p428 = scmp.eq.s32.totalorder %s38, 0
      %p429 = por %p427, %p428
      %p430 = scmp.ne.s32.totalorder %s416, %s417
      %p431 = scmp.eq.s32.totalorder %s39, 1
      %p432 = por %p430, %p431
      %p434 = scmp.ne.s32.totalorder %s417, %s433
      %p435 = scmp.eq.s32.totalorder %s39, 0
      %p436 = por %p434, %p435
      %s438 = sadd.s32 %s437, 1
      %p441 = scmp.eq.s32.totalorder %s33, 1
      %p442 = scmp.ne.s32.totalorder %s437, %s439
      %p443 = scmp.eq.s32.totalorder %s33, 0
      %p444 = por %p442, %p443
      %p445 = scmp.ne.s32.totalorder %s437, %s439
      %p446 = scmp.eq.s32.totalorder %s38, 1
      %p447 = por %p445, %p446
      %p448 = scmp.ne.s32.totalorder %s439, %s440
      %p449 = scmp.eq.s32.totalorder %s38, 0
      %p450 = por %p448, %p449
      %p451 = scmp.ne.s32.totalorder %s439, %s440
      %p452 = scmp.eq.s32.totalorder %s39, 1
      %p453 = por %p451, %p452
      %p455 = scmp.ne.s32.totalorder %s440, %s454
      %p456 = scmp.eq.s32.totalorder %s39, 0
      %p457 = por %p455, %p456
      %s459 = sadd.s32 %s458, 1
      %p462 = scmp.eq.s32.totalorder %s33, 1
      %p463 = scmp.ne.s32.totalorder %s458, %s460
      %p464 = scmp.eq.s32.totalorder %s33, 0
      %p465 = por %p463, %p464
      %p466 = scmp.ne.s32.totalorder %s458, %s460
      %p467 = scmp.eq.s32.totalorder %s38, 1
      %p468 = por %p466, %p467
      %p469 = scmp.ne.s32.totalorder %s460, %s461
      %p470 = scmp.eq.s32.totalorder %s38, 0
      %p471 = por %p469, %p470
      %p472 = scmp.ne.s32.totalorder %s460, %s461
      %p473 = scmp.eq.s32.totalorder %s39, 1
      %p474 = por %p472, %p473
      %p476 = scmp.ne.s32.totalorder %s461, %s475
      %p477 = scmp.eq.s32.totalorder %s39, 0
      %p478 = por %p476, %p477
      %s480 = sadd.s32 %s479, 1
      %p483 = scmp.eq.s32.totalorder %s33, 1
      %p484 = scmp.ne.s32.totalorder %s479, %s481
      %p485 = scmp.eq.s32.totalorder %s33, 0
      %p486 = por %p484, %p485
      %p487 = scmp.ne.s32.totalorder %s479, %s481
      %p488 = scmp.eq.s32.totalorder %s38, 1
      %p489 = por %p487, %p488
      %p490 = scmp.ne.s32.totalorder %s481, %s482
      %p491 = scmp.eq.s32.totalorder %s38, 0
      %p492 = por %p490, %p491
      %p493 = scmp.ne.s32.totalorder %s481, %s482
      %p494 = scmp.eq.s32.totalorder %s39, 1
      %p495 = por %p493, %p494
      %p497 = scmp.ne.s32.totalorder %s482, %s496
      %p498 = scmp.eq.s32.totalorder %s39, 0
      %p499 = por %p497, %p498
      %s501 = sadd.s32 %s500, 1
      %p504 = scmp.eq.s32.totalorder %s33, 1
      %p505 = scmp.ne.s32.totalorder %s500, %s502
      %p506 = scmp.eq.s32.totalorder %s33, 0
      %p507 = por %p505, %p506
      %p508 = scmp.ne.s32.totalorder %s500, %s502
      %p509 = scmp.eq.s32.totalorder %s38, 1
      %p510 = por %p508, %p509
      %p511 = scmp.ne.s32.totalorder %s502, %s503
      %p512 = scmp.eq.s32.totalorder %s38, 0
      %p513 = por %p511, %p512
      %p514 = scmp.ne.s32.totalorder %s502, %s503
      %p515 = scmp.eq.s32.totalorder %s39, 1
      %p516 = por %p514, %p515
      %p518 = scmp.ne.s32.totalorder %s503, %s517
      %p519 = scmp.eq.s32.totalorder %s39, 0
      %p520 = por %p518, %p519
      %s522 = sadd.s32 %s521, 1
      %p525 = scmp.eq.s32.totalorder %s33, 1
      %p526 = scmp.ne.s32.totalorder %s521, %s523
      %p527 = scmp.eq.s32.totalorder %s33, 0
      %p528 = por %p526, %p527
      %p529 = scmp.ne.s32.totalorder %s521, %s523
      %p530 = scmp.eq.s32.totalorder %s38, 1
      %p531 = por %p529, %p530
      %p532 = scmp.ne.s32.totalorder %s523, %s524
      %p533 = scmp.eq.s32.totalorder %s38, 0
      %p534 = por %p532, %p533
      %p535 = scmp.ne.s32.totalorder %s523, %s524
      %p536 = scmp.eq.s32.totalorder %s39, 1
      %p537 = por %p535, %p536
      %p539 = scmp.ne.s32.totalorder %s524, %s538
      %p540 = scmp.eq.s32.totalorder %s39, 0
      %p541 = por %p539, %p540
      %p542 = scmp.le.s32.totalorder 1, %s33
      %p543 = scmp.lt.s32.totalorder %s33, 3
      %p544 = pnand %p542, %p543
      %p545 = pneg %p544
      // Predicated region
      $region9: #{question_encoder_forward.1} parent=5 // pred_check
        _
      $region10: #{question_encoder_forward.1} parent=5 // pred_check_branch
        %547 = sbr.rel (%p544) target = $region12
      $region11: #{question_encoder_forward.1} parent=5 // pred_region
        %s548 = ssub.s32 %s33, 1
        // Predicated region
        $region13: #{question_encoder_forward.1} parent=11 // pred_check
          %p549 = pneg %p54
        $region14: #{question_encoder_forward.1} parent=11 // pred_check_branch
          %551 = sbr.rel (%p549) target = $region16
        $region15: #{question_encoder_forward.1} parent=11 // pred_region
          _
        $region16: #{question_encoder_forward.1} parent=11 // pred_fallthru
          _
        // Predicated region
        $region17: #{question_encoder_forward.1} parent=11 // pred_check
          %p552 = pneg %p75
        $region18: #{question_encoder_forward.1} parent=11 // pred_check_branch
          %554 = sbr.rel (%p552) target = $region20
        $region19: #{question_encoder_forward.1} parent=11 // pred_region
          _
        $region20: #{question_encoder_forward.1} parent=11 // pred_fallthru
          _
        // Predicated region
        $region21: #{question_encoder_forward.1} parent=11 // pred_check
          %p555 = pneg %p96
        $region22: #{question_encoder_forward.1} parent=11 // pred_check_branch
          %557 = sbr.rel (%p555) target = $region24
        $region23: #{question_encoder_forward.1} parent=11 // pred_region
          _
        $region24: #{question_encoder_forward.1} parent=11 // pred_fallthru
          _
        // Predicated region
        $region25: #{question_encoder_forward.1} parent=11 // pred_check
          %p558 = pneg %p117
        $region26: #{question_encoder_forward.1} parent=11 // pred_check_branch
          %560 = sbr.rel (%p558) target = $region28
        $region27: #{question_encoder_forward.1} parent=11 // pred_region
          _
        $region28: #{question_encoder_forward.1} parent=11 // pred_fallthru
          _
        // Predicated region
        $region29: #{question_encoder_forward.1} parent=11 // pred_check
          %p561 = pneg %p450
        $region30: #{question_encoder_forward.1} parent=11 // pred_check_branch
          %563 = sbr.rel (%p561) target = $region32
        $region31: #{question_encoder_forward.1} parent=11 // pred_region
          _
        $region32: #{question_encoder_forward.1} parent=11 // pred_fallthru
          _
        // Predicated region
        $region33: #{question_encoder_forward.1} parent=11 // pred_check
          %p564 = pneg %p471
        $region34: #{question_encoder_forward.1} parent=11 // pred_check_branch
          %566 = sbr.rel (%p564) target = $region36
        $region35: #{question_encoder_forward.1} parent=11 // pred_region
          _
        $region36: #{question_encoder_forward.1} parent=11 // pred_fallthru
          _
        // Predicated region
        $region37: #{question_encoder_forward.1} parent=11 // pred_check
          %p567 = pneg %p492
        $region38: #{question_encoder_forward.1} parent=11 // pred_check_branch
          %569 = sbr.rel (%p567) target = $region40
        $region39: #{question_encoder_forward.1} parent=11 // pred_region
          _
        $region40: #{question_encoder_forward.1} parent=11 // pred_fallthru
          _
        // Predicated region
        $region41: #{question_encoder_forward.1} parent=11 // pred_check
          %p570 = pneg %p513
        $region42: #{question_encoder_forward.1} parent=11 // pred_check_branch
          %572 = sbr.rel (%p570) target = $region44
        $region43: #{question_encoder_forward.1} parent=11 // pred_region
          _
        $region44: #{question_encoder_forward.1} parent=11 // pred_fallthru
          _
      $region12: #{question_encoder_forward.1} parent=5 // pred_fallthru
        _
      %p573 = scmp.lt.s32.totalorder %s33, 2
      // Predicated region
      $region45: #{question_encoder_forward.1} parent=5 // pred_check
        %p574 = pneg %p573
      $region46: #{question_encoder_forward.1} parent=5 // pred_check_branch
        %576 = sbr.rel (%p574) target = $region48
      $region47: #{question_encoder_forward.1} parent=5 // pred_region
        // Predicated region
        $region49: #{question_encoder_forward.1} parent=47 // pred_check
          %p577 = pneg %p137
        $region50: #{question_encoder_forward.1} parent=47 // pred_check_branch
          %579 = sbr.rel (%p577) target = $region52
        $region51: #{question_encoder_forward.1} parent=47 // pred_region
          %s580 = sand.u32 %s127, 1
          %s581 = scalar_lea.sflag [#allocation4], %s580
          %s582 = sand.u32 %s127, 1
          %s583 = smul.addr %s582, 768
          %s584 = scalar_lea.vmem [#allocation3], %s583
          %s586 = ssub.s32 12288, 12288
          %587 = vsyncadd %s581, %s586
          %s588 = smul.addr %s33, 192
          %s589 = smul.addr %s588, 64
          %s590 = scalar_lea.hbm %s4, %s589
          %s591 = sshll.u32 %s584, 4
          %s592 = int_to_ptr.vmem [resolvable:$true] %s591
          %597 = dma.hbm_to_vmem [thread:$0]  %s590, 12288, %s592, %s581, 384, 384, 24
        $region52: #{question_encoder_forward.1} parent=47 // pred_fallthru
          _
        // Predicated region
        $region53: #{question_encoder_forward.1} parent=47 // pred_check
          %p598 = pneg %p163
        $region54: #{question_encoder_forward.1} parent=47 // pred_check_branch
          %600 = sbr.rel (%p598) target = $region56
        $region55: #{question_encoder_forward.1} parent=47 // pred_region
          %p601 = scmp.lt.s32.totalorder %s33, 1
          %s602 = scalar_select %p601, %s33, 1
          %s603 = smul.addr %s602, 6
          %s604 = scalar_lea.vmem %s5, %s603
        $region56: #{question_encoder_forward.1} parent=47 // pred_fallthru
          _
        // Predicated region
        $region57: #{question_encoder_forward.1} parent=47 // pred_check
          %p605 = pneg %p189
        $region58: #{question_encoder_forward.1} parent=47 // pred_check_branch
          %607 = sbr.rel (%p605) target = $region60
        $region59: #{question_encoder_forward.1} parent=47 // pred_region
          %p608 = scmp.lt.s32.totalorder %s33, 1
          %s609 = scalar_select %p608, %s33, 1
          %s610 = smul.addr %s609, 64
          %s611 = smul.addr %s610, 4
          %s612 = scalar_lea.vmem %s6, %s611
        $region60: #{question_encoder_forward.1} parent=47 // pred_fallthru
          _
        // Predicated region
        $region61: #{question_encoder_forward.1} parent=47 // pred_check
          %p613 = pneg %p215
        $region62: #{question_encoder_forward.1} parent=47 // pred_check_branch
          %615 = sbr.rel (%p613) target = $region64
        $region63: #{question_encoder_forward.1} parent=47 // pred_region
          %p616 = scmp.lt.s32.totalorder %s33, 1
          %s617 = scalar_select %p616, %s33, 1
          %s618 = smul.addr %s617, 2
          %s619 = scalar_lea.vmem %s7, %s618
        $region64: #{question_encoder_forward.1} parent=47 // pred_fallthru
          _
        // Predicated region
        $region65: #{question_encoder_forward.1} parent=47 // pred_check
          %p620 = pneg %p241
        $region66: #{question_encoder_forward.1} parent=47 // pred_check_branch
          %622 = sbr.rel (%p620) target = $region68
        $region67: #{question_encoder_forward.1} parent=47 // pred_region
          %p623 = scmp.lt.s32.totalorder %s33, 1
          %s624 = scalar_select %p623, %s33, 1
          %s625 = smul.addr %s624, 2
          %s626 = scalar_lea.vmem %s8, %s625
        $region68: #{question_encoder_forward.1} parent=47 // pred_fallthru
          _
        // Predicated region
        $region69: #{question_encoder_forward.1} parent=47 // pred_check
          %p627 = pneg %p267
        $region70: #{question_encoder_forward.1} parent=47 // pred_check_branch
          %629 = sbr.rel (%p627) target = $region72
        $region71: #{question_encoder_forward.1} parent=47 // pred_region
          %p630 = scmp.lt.s32.totalorder %s33, 1
          %s631 = scalar_select %p630, %s33, 1
          %s632 = smul.addr %s631, 2
          %s633 = scalar_lea.vmem %s9, %s632
        $region72: #{question_encoder_forward.1} parent=47 // pred_fallthru
          _
        // Predicated region
        $region73: #{question_encoder_forward.1} parent=47 // pred_check
          %p634 = pneg %p293
        $region74: #{question_encoder_forward.1} parent=47 // pred_check_branch
          %636 = sbr.rel (%p634) target = $region76
        $region75: #{question_encoder_forward.1} parent=47 // pred_region
          %s637 = sand.u32 %s33, 1
          %s638 = scalar_lea.sflag [#allocation7], %s637
          %s639 = sand.u32 %s283, 1
          %s640 = smul.addr %s639, 512
          %s641 = scalar_lea.vmem [#allocation6], %s640
          %s643 = ssub.s32 8192, 8192
          %644 = vsyncadd %s638, %s643
          %s645 = smul.addr %s33, 128
          %s646 = smul.addr %s645, 64
          %s647 = scalar_lea.hbm %s10, %s646
          %s648 = sshll.u32 %s641, 4
          %s649 = int_to_ptr.vmem [resolvable:$true] %s648
          %654 = dma.hbm_to_vmem [thread:$0]  %s647, 8192, %s649, %s638, 256, 256, 16
        $region76: #{question_encoder_forward.1} parent=47 // pred_fallthru
          _
        // Predicated region
        $region77: #{question_encoder_forward.1} parent=47 // pred_check
          %p655 = pneg %p319
        $region78: #{question_encoder_forward.1} parent=47 // pred_check_branch
          %657 = sbr.rel (%p655) target = $region80
        $region79: #{question_encoder_forward.1} parent=47 // pred_region
          %p658 = scmp.lt.s32.totalorder %s33, 1
          %s659 = scalar_select %p658, %s33, 1
          %s660 = smul.addr %s659, 4
          %s661 = scalar_lea.vmem %s11, %s660
        $region80: #{question_encoder_forward.1} parent=47 // pred_fallthru
          _
        // Predicated region
        $region81: #{question_encoder_forward.1} parent=47 // pred_check
          %p662 = pneg %p345
        $region82: #{question_encoder_forward.1} parent=47 // pred_check_branch
          %664 = sbr.rel (%p662) target = $region84
        $region83: #{question_encoder_forward.1} parent=47 // pred_region
          %s665 = sand.u32 %s33, 1
          %s666 = scalar_lea.sflag [#allocation7], %s665
          %s667 = sand.u32 %s335, 1
          %s668 = smul.addr %s667, 512
          %s669 = scalar_lea.vmem [#allocation8], %s668
          %s671 = ssub.s32 8192, 8192
          %672 = vsyncadd %s666, %s671
          %s673 = smul.addr %s33, 128
          %s674 = smul.addr %s673, 64
          %s675 = scalar_lea.hbm %s12, %s674
          %s676 = sshll.u32 %s669, 4
          %s677 = int_to_ptr.vmem [resolvable:$true] %s676
          %682 = dma.hbm_to_vmem [thread:$0]  %s675, 8192, %s677, %s666, 128, 128, 8
        $region84: #{question_encoder_forward.1} parent=47 // pred_fallthru
          _
        // Predicated region
        $region85: #{question_encoder_forward.1} parent=47 // pred_check
          %p683 = pneg %p371
        $region86: #{question_encoder_forward.1} parent=47 // pred_check_branch
          %685 = sbr.rel (%p683) target = $region88
        $region87: #{question_encoder_forward.1} parent=47 // pred_region
          %p686 = scmp.lt.s32.totalorder %s33, 1
          %s687 = scalar_select %p686, %s33, 1
          %s688 = smul.addr %s687, 2
          %s689 = scalar_lea.vmem %s13, %s688
        $region88: #{question_encoder_forward.1} parent=47 // pred_fallthru
          _
        // Predicated region
        $region89: #{question_encoder_forward.1} parent=47 // pred_check
          %p690 = pneg %p397
        $region90: #{question_encoder_forward.1} parent=47 // pred_check_branch
          %692 = sbr.rel (%p690) target = $region92
        $region91: #{question_encoder_forward.1} parent=47 // pred_region
          %p693 = scmp.lt.s32.totalorder %s33, 1
          %s694 = scalar_select %p693, %s33, 1
          %s695 = smul.addr %s694, 2
          %s696 = scalar_lea.vmem %s14, %s695
        $region92: #{question_encoder_forward.1} parent=47 // pred_fallthru
          _
        // Predicated region
        $region93: #{question_encoder_forward.1} parent=47 // pred_check
          %p697 = pneg %p423
        $region94: #{question_encoder_forward.1} parent=47 // pred_check_branch
          %699 = sbr.rel (%p697) target = $region96
        $region95: #{question_encoder_forward.1} parent=47 // pred_region
          %p700 = scmp.lt.s32.totalorder %s33, 1
          %s701 = scalar_select %p700, %s33, 1
          %s702 = smul.addr %s701, 2
          %s703 = scalar_lea.vmem %s15, %s702
        $region96: #{question_encoder_forward.1} parent=47 // pred_fallthru
          _
      $region48: #{question_encoder_forward.1} parent=5 // pred_fallthru
        _
      %p704 = scmp.le.s32.totalorder 1, %s33
      %p705 = scmp.lt.s32.totalorder %s33, 3
      %p706 = pnand %p704, %p705
      %p707 = pneg %p706
      // Predicated region
      $region97: #{question_encoder_forward.1} parent=5 // pred_check
        _
      $region98: #{question_encoder_forward.1} parent=5 // pred_check_branch
        %709 = sbr.rel (%p706) target = $region100
      $region99: #{question_encoder_forward.1} parent=5 // pred_region
        %s710 = ssub.s32 %s33, 1
        %s711 = sand.u32 %s130, 1
        %s712 = scalar_lea.sflag [#allocation4], %s711
        %s713 = sand.u32 %s130, 1
        %s714 = smul.addr %s713, 768
        %s715 = scalar_lea.vmem [#allocation3], %s714
        // Predicated region
        $region101: #{question_encoder_forward.1} parent=99 // pred_check
          %p716 = pneg %p143
        $region102: #{question_encoder_forward.1} parent=99 // pred_check_branch
          %718 = sbr.rel (%p716) target = $region104
        $region103: #{question_encoder_forward.1} parent=99 // pred_region
          %719 = dma.done %s712, 12288
        $region104: #{question_encoder_forward.1} parent=99 // pred_fallthru
          _
        %s720 = sand.u32 %s38, 1
        %s721 = scalar_lea.sflag [#allocation7], %s720
        %s722 = sand.u32 %s286, 1
        %s723 = smul.addr %s722, 512
        %s724 = scalar_lea.vmem [#allocation6], %s723
        // Predicated region
        $region105: #{question_encoder_forward.1} parent=99 // pred_check
          %p725 = pneg %p299
        $region106: #{question_encoder_forward.1} parent=99 // pred_check_branch
          %727 = sbr.rel (%p725) target = $region108
        $region107: #{question_encoder_forward.1} parent=99 // pred_region
          %728 = dma.done %s721, 8192
        $region108: #{question_encoder_forward.1} parent=99 // pred_fallthru
          _
        %s729 = sand.u32 %s38, 1
        %s730 = scalar_lea.sflag [#allocation7], %s729
        %s731 = sand.u32 %s338, 1
        %s732 = smul.addr %s731, 512
        %s733 = scalar_lea.vmem [#allocation8], %s732
        // Predicated region
        $region109: #{question_encoder_forward.1} parent=99 // pred_check
          %p734 = pneg %p351
        $region110: #{question_encoder_forward.1} parent=99 // pred_check_branch
          %736 = sbr.rel (%p734) target = $region112
        $region111: #{question_encoder_forward.1} parent=99 // pred_region
          %737 = dma.done %s730, 8192
        $region112: #{question_encoder_forward.1} parent=99 // pred_fallthru
          _
        %p738 = pneg %p54
        %p739 = pneg %p51
        %p740 = pneg %p75
        %p741 = pneg %p72
        %p742 = pneg %p96
        %p743 = pneg %p93
        %p744 = pneg %p117
        %p745 = pneg %p114
        %s746 = sand.u32 %s130, 1
        %s747 = scalar_lea.sflag [#allocation4], %s746
        %s748 = sand.u32 %s130, 1
        %s749 = smul.addr %s748, 768
        %s750 = scalar_lea.vmem [#allocation3], %s749
        %p751 = pneg %p143
        %p752 = pneg %p140
        %p753 = scmp.lt.s32.totalorder %s38, 1
        %s754 = scalar_select %p753, %s38, 1
        %s755 = smul.addr %s754, 6
        %s756 = scalar_lea.vmem %s5, %s755
        %p757 = pneg %p169
        %p758 = pneg %p166
        %p759 = scmp.lt.s32.totalorder %s38, 1
        %s760 = scalar_select %p759, %s38, 1
        %s761 = smul.addr %s760, 64
        %s762 = smul.addr %s761, 4
        %s763 = scalar_lea.vmem %s6, %s762
        %p764 = pneg %p195
        %p765 = pneg %p192
        %p766 = scmp.lt.s32.totalorder %s38, 1
        %s767 = scalar_select %p766, %s38, 1
        %s768 = smul.addr %s767, 2
        %s769 = scalar_lea.vmem %s7, %s768
        %p770 = pneg %p221
        %p771 = pneg %p218
        %p772 = scmp.lt.s32.totalorder %s38, 1
        %s773 = scalar_select %p772, %s38, 1
        %s774 = smul.addr %s773, 2
        %s775 = scalar_lea.vmem %s8, %s774
        %p776 = pneg %p247
        %p777 = pneg %p244
        %p778 = scmp.lt.s32.totalorder %s38, 1
        %s779 = scalar_select %p778, %s38, 1
        %s780 = smul.addr %s779, 2
        %s781 = scalar_lea.vmem %s9, %s780
        %p782 = pneg %p273
        %p783 = pneg %p270
        %s784 = sand.u32 %s38, 1
        %s785 = scalar_lea.sflag [#allocation7], %s784
        %s786 = sand.u32 %s286, 1
        %s787 = smul.addr %s786, 512
        %s788 = scalar_lea.vmem [#allocation6], %s787
        %p789 = pneg %p299
        %p790 = pneg %p296
        %p791 = scmp.lt.s32.totalorder %s38, 1
        %s792 = scalar_select %p791, %s38, 1
        %s793 = smul.addr %s792, 4
        %s794 = scalar_lea.vmem %s11, %s793
        %p795 = pneg %p325
        %p796 = pneg %p322
        %s797 = sand.u32 %s38, 1
        %s798 = scalar_lea.sflag [#allocation7], %s797
        %s799 = sand.u32 %s338, 1
        %s800 = smul.addr %s799, 512
        %s801 = scalar_lea.vmem [#allocation8], %s800
        %p802 = pneg %p351
        %p803 = pneg %p348
        %p804 = scmp.lt.s32.totalorder %s38, 1
        %s805 = scalar_select %p804, %s38, 1
        %s806 = smul.addr %s805, 2
        %s807 = scalar_lea.vmem %s13, %s806
        %p808 = pneg %p377
        %p809 = pneg %p374
        %p810 = scmp.lt.s32.totalorder %s38, 1
        %s811 = scalar_select %p810, %s38, 1
        %s812 = smul.addr %s811, 2
        %s813 = scalar_lea.vmem %s14, %s812
        %p814 = pneg %p403
        %p815 = pneg %p400
        %p816 = scmp.lt.s32.totalorder %s38, 1
        %s817 = scalar_select %p816, %s38, 1
        %s818 = smul.addr %s817, 2
        %s819 = scalar_lea.vmem %s15, %s818
        %p820 = pneg %p429
        %p821 = pneg %p426
        %p822 = pneg %p450
        %p823 = pneg %p447
        %p824 = pneg %p471
        %p825 = pneg %p468
        %p826 = pneg %p492
        %p827 = pneg %p489
        %p828 = pneg %p513
        %p829 = pneg %p510
        %p830 = pneg %p534
        %p831 = pneg %p531
        %p832 = scmp.lt.s32.totalorder %s38, 1
        %s833 = scalar_select %p832, %s38, 1
        %s834 = smul.addr %s833, 6
        %s835 = scalar_lea.vmem %s5, %s834
        %p836 = scmp.lt.s32.totalorder %s38, 1
        %s837 = scalar_select %p836, %s38, 1
        %s838 = smul.addr %s837, 64
        %s839 = smul.addr %s838, 4
        %s840 = scalar_lea.vmem %s6, %s839
        %p841 = scmp.lt.s32.totalorder %s38, 1
        %s842 = scalar_select %p841, %s38, 1
        %s843 = smul.addr %s842, 2
        %s844 = scalar_lea.vmem %s7, %s843
        %p845 = scmp.lt.s32.totalorder %s38, 1
        %s846 = scalar_select %p845, %s38, 1
        %s847 = smul.addr %s846, 2
        %s848 = scalar_lea.vmem %s8, %s847
        %p849 = scmp.lt.s32.totalorder %s38, 1
        %s850 = scalar_select %p849, %s38, 1
        %s851 = smul.addr %s850, 2
        %s852 = scalar_lea.vmem %s9, %s851
        %p853 = scmp.lt.s32.totalorder %s38, 1
        %s854 = scalar_select %p853, %s38, 1
        %s855 = smul.addr %s854, 4
        %s856 = scalar_lea.vmem %s11, %s855
        %p857 = scmp.lt.s32.totalorder %s38, 1
        %s858 = scalar_select %p857, %s38, 1
        %s859 = smul.addr %s858, 2
        %s860 = scalar_lea.vmem %s13, %s859
        %p861 = scmp.lt.s32.totalorder %s38, 1
        %s862 = scalar_select %p861, %s38, 1
        %s863 = smul.addr %s862, 2
        %s864 = scalar_lea.vmem %s14, %s863
        %p865 = scmp.lt.s32.totalorder %s38, 1
        %s866 = scalar_select %p865, %s38, 1
        %s867 = smul.addr %s866, 2
        %s868 = scalar_lea.vmem %s15, %s867
        %p870 = scmp.eq.s32.totalorder %s38, 0
        // Predicated region
        $region113: #{question_encoder_forward.1} parent=99 // pred_check
          %p871 = pneg %p870
        $region114: #{question_encoder_forward.1} parent=99 // pred_check_branch
          %873 = sbr.rel (%p871) target = $region116
        $region115: #{question_encoder_forward.1} parent=99 // pred_region
          %v874 = vld [vmem:[%s0] sm:$0xff]
          %v875 = vld [vmem:[%s0 + $0x8] sm:$0xff]
          %v876 = vld [vmem:[%s0 + $0x10] sm:$0xff]
          %v877 = vld [vmem:[%s0 + $0x18] sm:$0xff]
          %v878 = vld [vmem:[%s0 + $0x20] sm:$0xff]
          %v879 = vld [vmem:[%s0 + $0x28] sm:$0xff]
          %v880 = vld [vmem:[%s0 + $0x30] sm:$0xff]
          %v881 = vld [vmem:[%s0 + $0x38] sm:$0xff]
          %v882 = vld [vmem:[%s2] sm:$0x3]
          %v883 = vld [vmem:[%s3] sm:$0x3]
          %v884 = vadd.f32 %v874, %v875
          %885 = vadd.xlane.f32.xlu0 %v884
          %v886 = vpop.xlane.xlu0 %885
          %v887 = vadd.f32 %v876, %v877
          %888 = vadd.xlane.f32.xlu0 %v887
          %v889 = vpop.xlane.xlu0 %888
          %v890 = vadd.f32 %v878, %v879
          %891 = vadd.xlane.f32.xlu0 %v890
          %v892 = vpop.xlane.xlu0 %891
          %v893 = vadd.f32 %v880, %v881
          %894 = vadd.xlane.f32.xlu0 %v893
          %v895 = vpop.xlane.xlu0 %894
          %v896 = vrcp.pop 256.0
          %v897 = vmul.f32 %v886, %v896
          %v898 = vmul.f32 %v889, %v896
          %v899 = vmul.f32 %v892, %v896
          %v900 = vmul.f32 %v895, %v896
          %v901 = vsub.f32 %v874, %v897
          %v902 = vsub.f32 %v875, %v897
          %v903 = vsub.f32 %v876, %v898
          %v904 = vsub.f32 %v877, %v898
          %v905 = vsub.f32 %v878, %v899
          %v906 = vsub.f32 %v879, %v899
          %v907 = vsub.f32 %v880, %v900
          %v908 = vsub.f32 %v881, %v900
          %v909 = vmul.f32 %v901, %v901
          %v910 = vmul.f32 %v902, %v902
          %v911 = vmul.f32 %v903, %v903
          %v912 = vmul.f32 %v904, %v904
          %v913 = vmul.f32 %v905, %v905
          %v914 = vmul.f32 %v906, %v906
          %v915 = vmul.f32 %v907, %v907
          %v916 = vmul.f32 %v908, %v908
          %v917 = vadd.f32 %v909, %v910
          %918 = vadd.xlane.f32.xlu0 %v917
          %v919 = vpop.xlane.xlu0 %918
          %v920 = vadd.f32 %v911, %v912
          %921 = vadd.xlane.f32.xlu0 %v920
          %v922 = vpop.xlane.xlu0 %921
          %v923 = vadd.f32 %v913, %v914
          %924 = vadd.xlane.f32.xlu0 %v923
          %v925 = vpop.xlane.xlu0 %924
          %v926 = vadd.f32 %v915, %v916
          %927 = vadd.xlane.f32.xlu0 %v926
          %v928 = vpop.xlane.xlu0 %927
          %v929 = vmul.f32 %v919, %v896
          %v930 = vmul.f32 %v922, %v896
          %v931 = vmul.f32 %v925, %v896
          %v932 = vmul.f32 %v928, %v896
          %v933 = vadd.f32 %v929, 1e-12
          %v934 = vadd.f32 %v930, 1e-12
          %v935 = vadd.f32 %v931, 1e-12
          %v936 = vadd.f32 %v932, 1e-12
          %v937 = vrsqrt.pop %v933
          %v938 = vrsqrt.pop %v934
          %v939 = vrsqrt.pop %v935
          %v940 = vrsqrt.pop %v936
          %v941 = vmul.f32 %v901, %v937
          %v942 = vmul.f32 %v902, %v937
          %v943 = vmul.f32 %v903, %v938
          %v944 = vmul.f32 %v904, %v938
          %v945 = vmul.f32 %v905, %v939
          %v946 = vmul.f32 %v906, %v939
          %v947 = vmul.f32 %v907, %v940
          %v948 = vmul.f32 %v908, %v940
          %v950 = vlaneseq
          %v951 = vshrl.u32 %v950, 7
          %v952 = vsub.s32 0, %v951
          %v953 = vrot.slane %v882, %v952
          %v954 = vlaneseq
          %v955 = vshrl.u32 %v954, 7
          %v956 = vsub.s32 1, %v955
          %v957 = vrot.slane %v882, %v956
          %v960 = vmul.f32 %v941, %v953
          %v961 = vmul.f32 %v942, %v957
          %v962 = vmul.f32 %v943, %v953
          %v963 = vmul.f32 %v944, %v957
          %v964 = vmul.f32 %v945, %v953
          %v965 = vmul.f32 %v946, %v957
          %v966 = vmul.f32 %v947, %v953
          %v967 = vmul.f32 %v948, %v957
          %v969 = vlaneseq
          %v970 = vshrl.u32 %v969, 7
          %v971 = vsub.s32 0, %v970
          %v972 = vrot.slane %v883, %v971
          %v973 = vlaneseq
          %v974 = vshrl.u32 %v973, 7
          %v975 = vsub.s32 1, %v974
          %v976 = vrot.slane %v883, %v975
          %v979 = vadd.f32 %v960, %v972
          %v980 = vadd.f32 %v961, %v976
          %v981 = vadd.f32 %v962, %v972
          %v982 = vadd.f32 %v963, %v976
          %v983 = vadd.f32 %v964, %v972
          %v984 = vadd.f32 %v965, %v976
          %v985 = vadd.f32 %v966, %v972
          %v986 = vadd.f32 %v967, %v976
          %987 = vst [vmem:[#allocation2] sm:$0xff] %v979
          %988 = vst [vmem:[#allocation2 + $0x8] sm:$0xff] %v980
          %989 = vst [vmem:[#allocation2 + $0x10] sm:$0xff] %v981
          %990 = vst [vmem:[#allocation2 + $0x18] sm:$0xff] %v982
          %991 = vst [vmem:[#allocation2 + $0x20] sm:$0xff] %v983
          %992 = vst [vmem:[#allocation2 + $0x28] sm:$0xff] %v984
          %993 = vst [vmem:[#allocation2 + $0x30] sm:$0xff] %v985
          %994 = vst [vmem:[#allocation2 + $0x38] sm:$0xff] %v986
        $region116: #{question_encoder_forward.1} parent=99 // pred_fallthru
          _
        %v995 = vld [vmem:[#allocation2] sm:$0xff]
        %v996 = vld [vmem:[#allocation2 + $0x8] sm:$0xff]
        %v997 = vld [vmem:[#allocation2 + $0x10] sm:$0xff]
        %v998 = vld [vmem:[#allocation2 + $0x18] sm:$0xff]
        %v999 = vld [vmem:[#allocation2 + $0x20] sm:$0xff]
        %v1000 = vld [vmem:[#allocation2 + $0x28] sm:$0xff]
        %v1001 = vld [vmem:[#allocation2 + $0x30] sm:$0xff]
        %v1002 = vld [vmem:[#allocation2 + $0x38] sm:$0xff]
        %v1003 = vpack.c.bf16 %v997, %v995
        %v1004 = vpack.c.bf16 %v998, %v996
        %v1005 = vpack.c.bf16 %v1001, %v999
        %v1006 = vpack.c.bf16 %v1002, %v1000
        %v1007 = vld [vmem:[%s715] sm:$0xff]
        %v1008 = vld [vmem:[%s715 + $0x8] sm:$0xff]
        %v1009 = vld [vmem:[%s715 + $0x10] sm:$0xff]
        %v1010 = vld [vmem:[%s715 + $0x18] sm:$0xff]
        %v1011 = vld [vmem:[%s715 + $0x20] sm:$0xff]
        %v1012 = vld [vmem:[%s715 + $0x28] sm:$0xff]
        %v1013 = vld [vmem:[%s715 + $0x30] sm:$0xff]
        %v1014 = vld [vmem:[%s715 + $0x38] sm:$0xff]
        %v1015 = vld [vmem:[%s715 + $0x40] sm:$0xff]
        %v1016 = vld [vmem:[%s715 + $0x48] sm:$0xff]
        %v1017 = vld [vmem:[%s715 + $0x50] sm:$0xff]
        %v1018 = vld [vmem:[%s715 + $0x58] sm:$0xff]
        %v1019 = vld [vmem:[%s715 + $0x60] sm:$0xff]
        %v1020 = vld [vmem:[%s715 + $0x68] sm:$0xff]
        %v1021 = vld [vmem:[%s715 + $0x70] sm:$0xff]
        %v1022 = vld [vmem:[%s715 + $0x78] sm:$0xff]
        %v1023 = vld [vmem:[%s715 + $0x80] sm:$0xff]
        %v1024 = vld [vmem:[%s715 + $0x88] sm:$0xff]
        %v1025 = vld [vmem:[%s715 + $0x90] sm:$0xff]
        %v1026 = vld [vmem:[%s715 + $0x98] sm:$0xff]
        %v1027 = vld [vmem:[%s715 + $0xa0] sm:$0xff]
        %v1028 = vld [vmem:[%s715 + $0xa8] sm:$0xff]
        %v1029 = vld [vmem:[%s715 + $0xb0] sm:$0xff]
        %v1030 = vld [vmem:[%s715 + $0xb8] sm:$0xff]
        %v1031 = vld [vmem:[%s715 + $0xc0] sm:$0xff]
        %v1032 = vld [vmem:[%s715 + $0xc8] sm:$0xff]
        %v1033 = vld [vmem:[%s715 + $0xd0] sm:$0xff]
        %v1034 = vld [vmem:[%s715 + $0xd8] sm:$0xff]
        %v1035 = vld [vmem:[%s715 + $0xe0] sm:$0xff]
        %v1036 = vld [vmem:[%s715 + $0xe8] sm:$0xff]
        %v1037 = vld [vmem:[%s715 + $0xf0] sm:$0xff]
        %v1038 = vld [vmem:[%s715 + $0xf8] sm:$0xff]
        %v1039 = vld [vmem:[%s715 + $0x100] sm:$0xff]
        %v1040 = vld [vmem:[%s715 + $0x108] sm:$0xff]
        %v1041 = vld [vmem:[%s715 + $0x110] sm:$0xff]
        %v1042 = vld [vmem:[%s715 + $0x118] sm:$0xff]
        %v1043 = vld [vmem:[%s715 + $0x120] sm:$0xff]
        %v1044 = vld [vmem:[%s715 + $0x128] sm:$0xff]
        %v1045 = vld [vmem:[%s715 + $0x130] sm:$0xff]
        %v1046 = vld [vmem:[%s715 + $0x138] sm:$0xff]
        %v1047 = vld [vmem:[%s715 + $0x140] sm:$0xff]
        %v1048 = vld [vmem:[%s715 + $0x148] sm:$0xff]
        %v1049 = vld [vmem:[%s715 + $0x150] sm:$0xff]
        %v1050 = vld [vmem:[%s715 + $0x158] sm:$0xff]
        %v1051 = vld [vmem:[%s715 + $0x160] sm:$0xff]
        %v1052 = vld [vmem:[%s715 + $0x168] sm:$0xff]
        %v1053 = vld [vmem:[%s715 + $0x170] sm:$0xff]
        %v1054 = vld [vmem:[%s715 + $0x178] sm:$0xff]
        %v1055 = vld [vmem:[%s715 + $0x180] sm:$0xff]
        %v1056 = vld [vmem:[%s715 + $0x188] sm:$0xff]
        %v1057 = vld [vmem:[%s715 + $0x190] sm:$0xff]
        %v1058 = vld [vmem:[%s715 + $0x198] sm:$0xff]
        %v1059 = vld [vmem:[%s715 + $0x1a0] sm:$0xff]
        %v1060 = vld [vmem:[%s715 + $0x1a8] sm:$0xff]
        %v1061 = vld [vmem:[%s715 + $0x1b0] sm:$0xff]
        %v1062 = vld [vmem:[%s715 + $0x1b8] sm:$0xff]
        %v1063 = vld [vmem:[%s715 + $0x1c0] sm:$0xff]
        %v1064 = vld [vmem:[%s715 + $0x1c8] sm:$0xff]
        %v1065 = vld [vmem:[%s715 + $0x1d0] sm:$0xff]
        %v1066 = vld [vmem:[%s715 + $0x1d8] sm:$0xff]
        %v1067 = vld [vmem:[%s715 + $0x1e0] sm:$0xff]
        %v1068 = vld [vmem:[%s715 + $0x1e8] sm:$0xff]
        %v1069 = vld [vmem:[%s715 + $0x1f0] sm:$0xff]
        %v1070 = vld [vmem:[%s715 + $0x1f8] sm:$0xff]
        %v1071 = vld [vmem:[%s715 + $0x200] sm:$0xff]
        %v1072 = vld [vmem:[%s715 + $0x208] sm:$0xff]
        %v1073 = vld [vmem:[%s715 + $0x210] sm:$0xff]
        %v1074 = vld [vmem:[%s715 + $0x218] sm:$0xff]
        %v1075 = vld [vmem:[%s715 + $0x220] sm:$0xff]
        %v1076 = vld [vmem:[%s715 + $0x228] sm:$0xff]
        %v1077 = vld [vmem:[%s715 + $0x230] sm:$0xff]
        %v1078 = vld [vmem:[%s715 + $0x238] sm:$0xff]
        %v1079 = vld [vmem:[%s715 + $0x240] sm:$0xff]
        %v1080 = vld [vmem:[%s715 + $0x248] sm:$0xff]
        %v1081 = vld [vmem:[%s715 + $0x250] sm:$0xff]
        %v1082 = vld [vmem:[%s715 + $0x258] sm:$0xff]
        %v1083 = vld [vmem:[%s715 + $0x260] sm:$0xff]
        %v1084 = vld [vmem:[%s715 + $0x268] sm:$0xff]
        %v1085 = vld [vmem:[%s715 + $0x270] sm:$0xff]
        %v1086 = vld [vmem:[%s715 + $0x278] sm:$0xff]
        %v1087 = vld [vmem:[%s715 + $0x280] sm:$0xff]
        %v1088 = vld [vmem:[%s715 + $0x288] sm:$0xff]
        %v1089 = vld [vmem:[%s715 + $0x290] sm:$0xff]
        %v1090 = vld [vmem:[%s715 + $0x298] sm:$0xff]
        %v1091 = vld [vmem:[%s715 + $0x2a0] sm:$0xff]
        %v1092 = vld [vmem:[%s715 + $0x2a8] sm:$0xff]
        %v1093 = vld [vmem:[%s715 + $0x2b0] sm:$0xff]
        %v1094 = vld [vmem:[%s715 + $0x2b8] sm:$0xff]
        %v1095 = vld [vmem:[%s715 + $0x2c0] sm:$0xff]
        %v1096 = vld [vmem:[%s715 + $0x2c8] sm:$0xff]
        %v1097 = vld [vmem:[%s715 + $0x2d0] sm:$0xff]
        %v1098 = vld [vmem:[%s715 + $0x2d8] sm:$0xff]
        %v1099 = vld [vmem:[%s715 + $0x2e0] sm:$0xff]
        %v1100 = vld [vmem:[%s715 + $0x2e8] sm:$0xff]
        %v1101 = vld [vmem:[%s715 + $0x2f0] sm:$0xff]
        %v1102 = vld [vmem:[%s715 + $0x2f8] sm:$0xff]
        %v1103 = vld [vmem:[%s835] sm:$0x3f]
        %v1105 = vlaneseq
        %v1106 = vshrl.u32 %v1105, 7
        %v1107 = vsub.s32 0, %v1106
        %v1108 = vrot.slane %v1103, %v1107
        %v1109 = vlaneseq
        %v1110 = vshrl.u32 %v1109, 7
        %v1111 = vsub.s32 1, %v1110
        %v1112 = vrot.slane %v1103, %v1111
        %v1113 = vlaneseq
        %v1114 = vshrl.u32 %v1113, 7
        %v1115 = vsub.s32 2, %v1114
        %v1116 = vrot.slane %v1103, %v1115
        %v1117 = vlaneseq
        %v1118 = vshrl.u32 %v1117, 7
        %v1119 = vsub.s32 3, %v1118
        %v1120 = vrot.slane %v1103, %v1119
        %v1121 = vlaneseq
        %v1122 = vshrl.u32 %v1121, 7
        %v1123 = vsub.s32 4, %v1122
        %v1124 = vrot.slane %v1103, %v1123
        %v1125 = vlaneseq
        %v1126 = vshrl.u32 %v1125, 7
        %v1127 = vsub.s32 5, %v1126
        %v1128 = vrot.slane %v1103, %v1127
        %v1231 = vunpack.c.l.b16 %v1007
        %v1232 = vunpack.c.h.b16 %v1007
        %v1233 = vunpack.c.l.b16 %v1008
        %v1234 = vunpack.c.h.b16 %v1008
        %v1235 = vunpack.c.l.b16 %v1009
        %v1236 = vunpack.c.h.b16 %v1009
        %v1237 = vunpack.c.l.b16 %v1010
        %v1238 = vunpack.c.h.b16 %v1010
        %v1239 = vunpack.c.l.b16 %v1011
        %v1240 = vunpack.c.h.b16 %v1011
        %v1241 = vunpack.c.l.b16 %v1012
        %v1242 = vunpack.c.h.b16 %v1012
        %v1243 = vunpack.c.l.b16 %v1013
        %v1244 = vunpack.c.h.b16 %v1013
        %v1245 = vunpack.c.l.b16 %v1014
        %v1246 = vunpack.c.h.b16 %v1014
        %v1247 = vunpack.c.l.b16 %v1015
        %v1248 = vunpack.c.h.b16 %v1015
        %v1249 = vunpack.c.l.b16 %v1016
        %v1250 = vunpack.c.h.b16 %v1016
        %v1251 = vunpack.c.l.b16 %v1017
        %v1252 = vunpack.c.h.b16 %v1017
        %v1253 = vunpack.c.l.b16 %v1018
        %v1254 = vunpack.c.h.b16 %v1018
        %v1255 = vunpack.c.l.b16 %v1019
        %v1256 = vunpack.c.h.b16 %v1019
        %v1257 = vunpack.c.l.b16 %v1020
        %v1258 = vunpack.c.h.b16 %v1020
        %v1259 = vunpack.c.l.b16 %v1021
        %v1260 = vunpack.c.h.b16 %v1021
        %v1261 = vunpack.c.l.b16 %v1022
        %v1262 = vunpack.c.h.b16 %v1022
        %v1263 = vunpack.c.l.b16 %v1023
        %v1264 = vunpack.c.h.b16 %v1023
        %v1265 = vunpack.c.l.b16 %v1024
        %v1266 = vunpack.c.h.b16 %v1024
        %v1267 = vunpack.c.l.b16 %v1025
        %v1268 = vunpack.c.h.b16 %v1025
        %v1269 = vunpack.c.l.b16 %v1026
        %v1270 = vunpack.c.h.b16 %v1026
        %v1271 = vunpack.c.l.b16 %v1027
        %v1272 = vunpack.c.h.b16 %v1027
        %v1273 = vunpack.c.l.b16 %v1028
        %v1274 = vunpack.c.h.b16 %v1028
        %v1275 = vunpack.c.l.b16 %v1029
        %v1276 = vunpack.c.h.b16 %v1029
        %v1277 = vunpack.c.l.b16 %v1030
        %v1278 = vunpack.c.h.b16 %v1030
        %v1279 = vunpack.c.l.b16 %v1031
        %v1280 = vunpack.c.h.b16 %v1031
        %v1281 = vunpack.c.l.b16 %v1032
        %v1282 = vunpack.c.h.b16 %v1032
        %v1283 = vunpack.c.l.b16 %v1033
        %v1284 = vunpack.c.h.b16 %v1033
        %v1285 = vunpack.c.l.b16 %v1034
        %v1286 = vunpack.c.h.b16 %v1034
        %v1287 = vunpack.c.l.b16 %v1035
        %v1288 = vunpack.c.h.b16 %v1035
        %v1289 = vunpack.c.l.b16 %v1036
        %v1290 = vunpack.c.h.b16 %v1036
        %v1291 = vunpack.c.l.b16 %v1037
        %v1292 = vunpack.c.h.b16 %v1037
        %v1293 = vunpack.c.l.b16 %v1038
        %v1294 = vunpack.c.h.b16 %v1038
        %v1295 = vunpack.c.l.b16 %v1039
        %v1296 = vunpack.c.h.b16 %v1039
        %v1297 = vunpack.c.l.b16 %v1040
        %v1298 = vunpack.c.h.b16 %v1040
        %v1299 = vunpack.c.l.b16 %v1041
        %v1300 = vunpack.c.h.b16 %v1041
        %v1301 = vunpack.c.l.b16 %v1042
        %v1302 = vunpack.c.h.b16 %v1042
        %v1303 = vunpack.c.l.b16 %v1043
        %v1304 = vunpack.c.h.b16 %v1043
        %v1305 = vunpack.c.l.b16 %v1044
        %v1306 = vunpack.c.h.b16 %v1044
        %v1307 = vunpack.c.l.b16 %v1045
        %v1308 = vunpack.c.h.b16 %v1045
        %v1309 = vunpack.c.l.b16 %v1046
        %v1310 = vunpack.c.h.b16 %v1046
        %v1311 = vunpack.c.l.b16 %v1047
        %v1312 = vunpack.c.h.b16 %v1047
        %v1313 = vunpack.c.l.b16 %v1048
        %v1314 = vunpack.c.h.b16 %v1048
        %v1315 = vunpack.c.l.b16 %v1049
        %v1316 = vunpack.c.h.b16 %v1049
        %v1317 = vunpack.c.l.b16 %v1050
        %v1318 = vunpack.c.h.b16 %v1050
        %v1319 = vunpack.c.l.b16 %v1051
        %v1320 = vunpack.c.h.b16 %v1051
        %v1321 = vunpack.c.l.b16 %v1052
        %v1322 = vunpack.c.h.b16 %v1052
        %v1323 = vunpack.c.l.b16 %v1053
        %v1324 = vunpack.c.h.b16 %v1053
        %v1325 = vunpack.c.l.b16 %v1054
        %v1326 = vunpack.c.h.b16 %v1054
        %v1327 = vunpack.c.l.b16 %v1055
        %v1328 = vunpack.c.h.b16 %v1055
        %v1329 = vunpack.c.l.b16 %v1056
        %v1330 = vunpack.c.h.b16 %v1056
        %v1331 = vunpack.c.l.b16 %v1057
        %v1332 = vunpack.c.h.b16 %v1057
        %v1333 = vunpack.c.l.b16 %v1058
        %v1334 = vunpack.c.h.b16 %v1058
        %v1335 = vunpack.c.l.b16 %v1059
        %v1336 = vunpack.c.h.b16 %v1059
        %v1337 = vunpack.c.l.b16 %v1060
        %v1338 = vunpack.c.h.b16 %v1060
        %v1339 = vunpack.c.l.b16 %v1061
        %v1340 = vunpack.c.h.b16 %v1061
        %v1341 = vunpack.c.l.b16 %v1062
        %v1342 = vunpack.c.h.b16 %v1062
        %v1343 = vunpack.c.l.b16 %v1063
        %v1344 = vunpack.c.h.b16 %v1063
        %v1345 = vunpack.c.l.b16 %v1064
        %v1346 = vunpack.c.h.b16 %v1064
        %v1347 = vunpack.c.l.b16 %v1065
        %v1348 = vunpack.c.h.b16 %v1065
        %v1349 = vunpack.c.l.b16 %v1066
        %v1350 = vunpack.c.h.b16 %v1066
        %v1351 = vunpack.c.l.b16 %v1067
        %v1352 = vunpack.c.h.b16 %v1067
        %v1353 = vunpack.c.l.b16 %v1068
        %v1354 = vunpack.c.h.b16 %v1068
        %v1355 = vunpack.c.l.b16 %v1069
        %v1356 = vunpack.c.h.b16 %v1069
        %v1357 = vunpack.c.l.b16 %v1070
        %v1358 = vunpack.c.h.b16 %v1070
        %v1359 = vunpack.c.l.b16 %v1071
        %v1360 = vunpack.c.h.b16 %v1071
        %v1361 = vunpack.c.l.b16 %v1072
        %v1362 = vunpack.c.h.b16 %v1072
        %v1363 = vunpack.c.l.b16 %v1073
        %v1364 = vunpack.c.h.b16 %v1073
        %v1365 = vunpack.c.l.b16 %v1074
        %v1366 = vunpack.c.h.b16 %v1074
        %v1367 = vunpack.c.l.b16 %v1075
        %v1368 = vunpack.c.h.b16 %v1075
        %v1369 = vunpack.c.l.b16 %v1076
        %v1370 = vunpack.c.h.b16 %v1076
        %v1371 = vunpack.c.l.b16 %v1077
        %v1372 = vunpack.c.h.b16 %v1077
        %v1373 = vunpack.c.l.b16 %v1078
        %v1374 = vunpack.c.h.b16 %v1078
        %v1375 = vunpack.c.l.b16 %v1079
        %v1376 = vunpack.c.h.b16 %v1079
        %v1377 = vunpack.c.l.b16 %v1080
        %v1378 = vunpack.c.h.b16 %v1080
        %v1379 = vunpack.c.l.b16 %v1081
        %v1380 = vunpack.c.h.b16 %v1081
        %v1381 = vunpack.c.l.b16 %v1082
        %v1382 = vunpack.c.h.b16 %v1082
        %v1383 = vunpack.c.l.b16 %v1083
        %v1384 = vunpack.c.h.b16 %v1083
        %v1385 = vunpack.c.l.b16 %v1084
        %v1386 = vunpack.c.h.b16 %v1084
        %v1387 = vunpack.c.l.b16 %v1085
        %v1388 = vunpack.c.h.b16 %v1085
        %v1389 = vunpack.c.l.b16 %v1086
        %v1390 = vunpack.c.h.b16 %v1086
        %v1391 = vunpack.c.l.b16 %v1087
        %v1392 = vunpack.c.h.b16 %v1087
        %v1393 = vunpack.c.l.b16 %v1088
        %v1394 = vunpack.c.h.b16 %v1088
        %v1395 = vunpack.c.l.b16 %v1089
        %v1396 = vunpack.c.h.b16 %v1089
        %v1397 = vunpack.c.l.b16 %v1090
        %v1398 = vunpack.c.h.b16 %v1090
        %v1399 = vunpack.c.l.b16 %v1091
        %v1400 = vunpack.c.h.b16 %v1091
        %v1401 = vunpack.c.l.b16 %v1092
        %v1402 = vunpack.c.h.b16 %v1092
        %v1403 = vunpack.c.l.b16 %v1093
        %v1404 = vunpack.c.h.b16 %v1093
        %v1405 = vunpack.c.l.b16 %v1094
        %v1406 = vunpack.c.h.b16 %v1094
        %v1407 = vunpack.c.l.b16 %v1095
        %v1408 = vunpack.c.h.b16 %v1095
        %v1409 = vunpack.c.l.b16 %v1096
        %v1410 = vunpack.c.h.b16 %v1096
        %v1411 = vunpack.c.l.b16 %v1097
        %v1412 = vunpack.c.h.b16 %v1097
        %v1413 = vunpack.c.l.b16 %v1098
        %v1414 = vunpack.c.h.b16 %v1098
        %v1415 = vunpack.c.l.b16 %v1099
        %v1416 = vunpack.c.h.b16 %v1099
        %v1417 = vunpack.c.l.b16 %v1100
        %v1418 = vunpack.c.h.b16 %v1100
        %v1419 = vunpack.c.l.b16 %v1101
        %v1420 = vunpack.c.h.b16 %v1101
        %v1421 = vunpack.c.l.b16 %v1102
        %v1422 = vunpack.c.h.b16 %v1102
        %v1423 = vpack.c.b16 %v1237, %v1231
        %v1424 = vpack.c.b16 %v1238, %v1232
        %v1425 = vpack.c.b16 %v1239, %v1233
        %v1426 = vpack.c.b16 %v1240, %v1234
        %v1427 = vpack.c.b16 %v1241, %v1235
        %v1428 = vpack.c.b16 %v1242, %v1236
        %v1429 = vpack.c.b16 %v1249, %v1243
        %v1430 = vpack.c.b16 %v1250, %v1244
        %v1431 = vpack.c.b16 %v1251, %v1245
        %v1432 = vpack.c.b16 %v1252, %v1246
        %v1433 = vpack.c.b16 %v1253, %v1247
        %v1434 = vpack.c.b16 %v1254, %v1248
        %v1435 = vpack.c.b16 %v1261, %v1255
        %v1436 = vpack.c.b16 %v1262, %v1256
        %v1437 = vpack.c.b16 %v1263, %v1257
        %v1438 = vpack.c.b16 %v1264, %v1258
        %v1439 = vpack.c.b16 %v1265, %v1259
        %v1440 = vpack.c.b16 %v1266, %v1260
        %v1441 = vpack.c.b16 %v1273, %v1267
        %v1442 = vpack.c.b16 %v1274, %v1268
        %v1443 = vpack.c.b16 %v1275, %v1269
        %v1444 = vpack.c.b16 %v1276, %v1270
        %v1445 = vpack.c.b16 %v1277, %v1271
        %v1446 = vpack.c.b16 %v1278, %v1272
        %v1447 = vpack.c.b16 %v1285, %v1279
        %v1448 = vpack.c.b16 %v1286, %v1280
        %v1449 = vpack.c.b16 %v1287, %v1281
        %v1450 = vpack.c.b16 %v1288, %v1282
        %v1451 = vpack.c.b16 %v1289, %v1283
        %v1452 = vpack.c.b16 %v1290, %v1284
        %v1453 = vpack.c.b16 %v1297, %v1291
        %v1454 = vpack.c.b16 %v1298, %v1292
        %v1455 = vpack.c.b16 %v1299, %v1293
        %v1456 = vpack.c.b16 %v1300, %v1294
        %v1457 = vpack.c.b16 %v1301, %v1295
        %v1458 = vpack.c.b16 %v1302, %v1296
        %v1459 = vpack.c.b16 %v1309, %v1303
        %v1460 = vpack.c.b16 %v1310, %v1304
        %v1461 = vpack.c.b16 %v1311, %v1305
        %v1462 = vpack.c.b16 %v1312, %v1306
        %v1463 = vpack.c.b16 %v1313, %v1307
        %v1464 = vpack.c.b16 %v1314, %v1308
        %v1465 = vpack.c.b16 %v1321, %v1315
        %v1466 = vpack.c.b16 %v1322, %v1316
        %v1467 = vpack.c.b16 %v1323, %v1317
        %v1468 = vpack.c.b16 %v1324, %v1318
        %v1469 = vpack.c.b16 %v1325, %v1319
        %v1470 = vpack.c.b16 %v1326, %v1320
        %v1471 = vpack.c.b16 %v1333, %v1327
        %v1472 = vpack.c.b16 %v1334, %v1328
        %v1473 = vpack.c.b16 %v1335, %v1329
        %v1474 = vpack.c.b16 %v1336, %v1330
        %v1475 = vpack.c.b16 %v1337, %v1331
        %v1476 = vpack.c.b16 %v1338, %v1332
        %v1477 = vpack.c.b16 %v1345, %v1339
        %v1478 = vpack.c.b16 %v1346, %v1340
        %v1479 = vpack.c.b16 %v1347, %v1341
        %v1480 = vpack.c.b16 %v1348, %v1342
        %v1481 = vpack.c.b16 %v1349, %v1343
        %v1482 = vpack.c.b16 %v1350, %v1344
        %v1483 = vpack.c.b16 %v1357, %v1351
        %v1484 = vpack.c.b16 %v1358, %v1352
        %v1485 = vpack.c.b16 %v1359, %v1353
        %v1486 = vpack.c.b16 %v1360, %v1354
        %v1487 = vpack.c.b16 %v1361, %v1355
        %v1488 = vpack.c.b16 %v1362, %v1356
        %v1489 = vpack.c.b16 %v1369, %v1363
        %v1490 = vpack.c.b16 %v1370, %v1364
        %v1491 = vpack.c.b16 %v1371, %v1365
        %v1492 = vpack.c.b16 %v1372, %v1366
        %v1493 = vpack.c.b16 %v1373, %v1367
        %v1494 = vpack.c.b16 %v1374, %v1368
        %v1495 = vpack.c.b16 %v1381, %v1375
        %v1496 = vpack.c.b16 %v1382, %v1376
        %v1497 = vpack.c.b16 %v1383, %v1377
        %v1498 = vpack.c.b16 %v1384, %v1378
        %v1499 = vpack.c.b16 %v1385, %v1379
        %v1500 = vpack.c.b16 %v1386, %v1380
        %v1501 = vpack.c.b16 %v1393, %v1387
        %v1502 = vpack.c.b16 %v1394, %v1388
        %v1503 = vpack.c.b16 %v1395, %v1389
        %v1504 = vpack.c.b16 %v1396, %v1390
        %v1505 = vpack.c.b16 %v1397, %v1391
        %v1506 = vpack.c.b16 %v1398, %v1392
        %v1507 = vpack.c.b16 %v1405, %v1399
        %v1508 = vpack.c.b16 %v1406, %v1400
        %v1509 = vpack.c.b16 %v1407, %v1401
        %v1510 = vpack.c.b16 %v1408, %v1402
        %v1511 = vpack.c.b16 %v1409, %v1403
        %v1512 = vpack.c.b16 %v1410, %v1404
        %v1513 = vpack.c.b16 %v1417, %v1411
        %v1514 = vpack.c.b16 %v1418, %v1412
        %v1515 = vpack.c.b16 %v1419, %v1413
        %v1516 = vpack.c.b16 %v1420, %v1414
        %v1517 = vpack.c.b16 %v1421, %v1415
        %v1518 = vpack.c.b16 %v1422, %v1416
        %1615 = vmatprep.subr.bf16.mxu0 %v1466
        %1616 = vmatpush1.bf16.msra.mxu0 %v1465
        %1617 = vmatprep.subr.bf16.mxu0 %v1460
        %1618 = vmatpush1.bf16.msra.mxu0 %v1459
        %1619 = vmatprep.subr.bf16.mxu0 %v1454
        %1620 = vmatpush1.bf16.msra.mxu0 %v1453
        %1621 = vmatprep.subr.bf16.mxu0 %v1448
        %1622 = vmatpush1.bf16.msra.mxu0 %v1447
        %1623 = vmatprep.subr.bf16.mxu0 %v1442
        %1624 = vmatpush1.bf16.msra.mxu0 %v1441
        %1625 = vmatprep.subr.bf16.mxu0 %v1436
        %1626 = vmatpush1.bf16.msra.mxu0 %v1435
        %1627 = vmatprep.subr.bf16.mxu0 %v1430
        %1628 = vmatpush1.bf16.msra.mxu0 %v1429
        %1629 = vmatprep.subr.bf16.mxu0 %v1424
        %1630 = vmatpush1.bf16.msra.mxu0 %v1423
        %1631 = vmatprep.subr.bf16.mxu0 %v1514
        %1632 = vmatpush2.bf16.msra.mxu0 %v1513
        %1633 = vmatprep.subr.bf16.mxu0 %v1508
        %1634 = vmatpush2.bf16.msra.mxu0 %v1507
        %1635 = vmatprep.subr.bf16.mxu0 %v1502
        %1636 = vmatpush2.bf16.msra.mxu0 %v1501
        %1637 = vmatprep.subr.bf16.mxu0 %v1496
        %1638 = vmatpush2.bf16.msra.mxu0 %v1495
        %1639 = vmatprep.subr.bf16.mxu0 %v1490
        %1640 = vmatpush2.bf16.msra.mxu0 %v1489
        %1641 = vmatprep.subr.bf16.mxu0 %v1484
        %1642 = vmatpush2.bf16.msra.mxu0 %v1483
        %1643 = vmatprep.subr.bf16.mxu0 %v1478
        %1644 = vmatpush2.bf16.msra.mxu0 %v1477
        %1645 = vmatprep.subr.bf16.mxu0 %v1472
        %1646 = vmatpush2.bf16.msra.mxu0 %v1471
        %1647 = vmatprep.mubr.bf16.mxu0 %v1004
        %1648 = vmatmul.mubr.bf16.gmra.mxu0 %v1003
        %v1649 = vpop.f32.mrf.mxu0
        %v1650 = vadd.f32 %v1108, %v1649
        %v1651 = vpop.f32.mrf.mxu0
        %v1652 = vadd.f32 %v1112, %v1651
        %v1653 = vpop.f32.mrf.mxu0
        %v1654 = vadd.f32 %v1108, %v1653
        %v1655 = vpop.f32.mrf.mxu0
        %v1656 = vadd.f32 %v1112, %v1655
        %1657 = vmatprep.mubr.bf16.mxu0 %v1006
        %1658 = vmatmul.mubr.bf16.gmra.mxu0 %v1005
        %v1659 = vpop.f32.mrf.mxu0
        %v1660 = vadd.f32 %v1108, %v1659
        %v1661 = vpop.f32.mrf.mxu0
        %v1662 = vadd.f32 %v1112, %v1661
        %v1663 = vpop.f32.mrf.mxu0
        %v1664 = vadd.f32 %v1108, %v1663
        %v1665 = vpop.f32.mrf.mxu0
        %v1666 = vadd.f32 %v1112, %v1665
        %1667 = vdwg.mxu0
        %1668 = vmatprep.subr.bf16.mxu0 %v1468
        %1669 = vmatpush1.bf16.msra.mxu0 %v1467
        %1670 = vmatprep.subr.bf16.mxu0 %v1462
        %1671 = vmatpush1.bf16.msra.mxu0 %v1461
        %1672 = vmatprep.subr.bf16.mxu0 %v1456
        %1673 = vmatpush1.bf16.msra.mxu0 %v1455
        %1674 = vmatprep.subr.bf16.mxu0 %v1450
        %1675 = vmatpush1.bf16.msra.mxu0 %v1449
        %1676 = vmatprep.subr.bf16.mxu0 %v1444
        %1677 = vmatpush1.bf16.msra.mxu0 %v1443
        %1678 = vmatprep.subr.bf16.mxu0 %v1438
        %1679 = vmatpush1.bf16.msra.mxu0 %v1437
        %1680 = vmatprep.subr.bf16.mxu0 %v1432
        %1681 = vmatpush1.bf16.msra.mxu0 %v1431
        %1682 = vmatprep.subr.bf16.mxu0 %v1426
        %1683 = vmatpush1.bf16.msra.mxu0 %v1425
        %1684 = vmatprep.subr.bf16.mxu0 %v1516
        %1685 = vmatpush2.bf16.msra.mxu0 %v1515
        %1686 = vmatprep.subr.bf16.mxu0 %v1510
        %1687 = vmatpush2.bf16.msra.mxu0 %v1509
        %1688 = vmatprep.subr.bf16.mxu0 %v1504
        %1689 = vmatpush2.bf16.msra.mxu0 %v1503
        %1690 = vmatprep.subr.bf16.mxu0 %v1498
        %1691 = vmatpush2.bf16.msra.mxu0 %v1497
        %1692 = vmatprep.subr.bf16.mxu0 %v1492
        %1693 = vmatpush2.bf16.msra.mxu0 %v1491
        %1694 = vmatprep.subr.bf16.mxu0 %v1486
        %1695 = vmatpush2.bf16.msra.mxu0 %v1485
        %1696 = vmatprep.subr.bf16.mxu0 %v1480
        %1697 = vmatpush2.bf16.msra.mxu0 %v1479
        %1698 = vmatprep.subr.bf16.mxu0 %v1474
        %1699 = vmatpush2.bf16.msra.mxu0 %v1473
        %1700 = vmatprep.mubr.bf16.mxu0 %v1004
        %1701 = vmatmul.mubr.bf16.gmra.mxu0 %v1003
        %v1702 = vpop.f32.mrf.mxu0
        %v1703 = vadd.f32 %v1116, %v1702
        %v1704 = vpop.f32.mrf.mxu0
        %v1705 = vadd.f32 %v1120, %v1704
        %v1706 = vpop.f32.mrf.mxu0
        %v1707 = vadd.f32 %v1116, %v1706
        %v1708 = vpop.f32.mrf.mxu0
        %v1709 = vadd.f32 %v1120, %v1708
        %1710 = vmatprep.mubr.bf16.mxu0 %v1006
        %1711 = vmatmul.mubr.bf16.gmra.mxu0 %v1005
        %v1712 = vpop.f32.mrf.mxu0
        %v1713 = vadd.f32 %v1116, %v1712
        %v1714 = vpop.f32.mrf.mxu0
        %v1715 = vadd.f32 %v1120, %v1714
        %v1716 = vpop.f32.mrf.mxu0
        %v1717 = vadd.f32 %v1116, %v1716
        %v1718 = vpop.f32.mrf.mxu0
        %v1719 = vadd.f32 %v1120, %v1718
        %1720 = vdwg.mxu0
        %1721 = vmatprep.subr.bf16.mxu0 %v1470
        %1722 = vmatpush1.bf16.msra.mxu0 %v1469
        %1723 = vmatprep.subr.bf16.mxu0 %v1464
        %1724 = vmatpush1.bf16.msra.mxu0 %v1463
        %1725 = vmatprep.subr.bf16.mxu0 %v1458
        %1726 = vmatpush1.bf16.msra.mxu0 %v1457
        %1727 = vmatprep.subr.bf16.mxu0 %v1452
        %1728 = vmatpush1.bf16.msra.mxu0 %v1451
        %1729 = vmatprep.subr.bf16.mxu0 %v1446
        %1730 = vmatpush1.bf16.msra.mxu0 %v1445
        %1731 = vmatprep.subr.bf16.mxu0 %v1440
        %1732 = vmatpush1.bf16.msra.mxu0 %v1439
        %1733 = vmatprep.subr.bf16.mxu0 %v1434
        %1734 = vmatpush1.bf16.msra.mxu0 %v1433
        %1735 = vmatprep.subr.bf16.mxu0 %v1428
        %1736 = vmatpush1.bf16.msra.mxu0 %v1427
        %1737 = vmatprep.subr.bf16.mxu0 %v1518
        %1738 = vmatpush2.bf16.msra.mxu0 %v1517
        %1739 = vmatprep.subr.bf16.mxu0 %v1512
        %1740 = vmatpush2.bf16.msra.mxu0 %v1511
        %1741 = vmatprep.subr.bf16.mxu0 %v1506
        %1742 = vmatpush2.bf16.msra.mxu0 %v1505
        %1743 = vmatprep.subr.bf16.mxu0 %v1500
        %1744 = vmatpush2.bf16.msra.mxu0 %v1499
        %1745 = vmatprep.subr.bf16.mxu0 %v1494
        %1746 = vmatpush2.bf16.msra.mxu0 %v1493
        %1747 = vmatprep.subr.bf16.mxu0 %v1488
        %1748 = vmatpush2.bf16.msra.mxu0 %v1487
        %1749 = vmatprep.subr.bf16.mxu0 %v1482
        %1750 = vmatpush2.bf16.msra.mxu0 %v1481
        %1751 = vmatprep.subr.bf16.mxu0 %v1476
        %1752 = vmatpush2.bf16.msra.mxu0 %v1475
        %1753 = vmatprep.mubr.bf16.mxu0 %v1004
        %1754 = vmatmul.mubr.bf16.gmra.mxu0 %v1003
        %v1755 = vpop.f32.mrf.mxu0
        %v1756 = vadd.f32 %v1124, %v1755
        %v1757 = vpop.f32.mrf.mxu0
        %v1758 = vadd.f32 %v1128, %v1757
        %v1759 = vpop.f32.mrf.mxu0
        %v1760 = vadd.f32 %v1124, %v1759
        %v1761 = vpop.f32.mrf.mxu0
        %v1762 = vadd.f32 %v1128, %v1761
        %1763 = vmatprep.mubr.bf16.mxu0 %v1006
        %1764 = vmatmul.mubr.bf16.gmra.mxu0 %v1005
        %v1765 = vpop.f32.mrf.mxu0
        %v1766 = vadd.f32 %v1124, %v1765
        %v1767 = vpop.f32.mrf.mxu0
        %v1768 = vadd.f32 %v1128, %v1767
        %v1769 = vpop.f32.mrf.mxu0
        %v1770 = vadd.f32 %v1124, %v1769
        %v1771 = vpop.f32.mrf.mxu0
        %v1772 = vadd.f32 %v1128, %v1771
        %1773 = vdwg.mxu0
        %v1774 = vpack.c.bf16 %v1654, %v1650
        %v1775 = vpack.c.bf16 %v1656, %v1652
        %v1776 = vpack.c.bf16 %v1707, %v1703
        %v1777 = vpack.c.bf16 %v1709, %v1705
        %v1778 = vpack.c.bf16 %v1760, %v1756
        %v1779 = vpack.c.bf16 %v1762, %v1758
        %v1780 = vpack.c.bf16 %v1664, %v1660
        %v1781 = vpack.c.bf16 %v1666, %v1662
        %v1782 = vpack.c.bf16 %v1717, %v1713
        %v1783 = vpack.c.bf16 %v1719, %v1715
        %v1784 = vpack.c.bf16 %v1770, %v1766
        %v1785 = vpack.c.bf16 %v1772, %v1768
        %v1786 = vld [vmem:[%s1] sm:$0xff]
        %v1787 = vld [vmem:[%s1 + $0x8] sm:$0xff]
        %v1788 = vld [vmem:[%s1 + $0x10] sm:$0xff]
        %v1789 = vld [vmem:[%s1 + $0x18] sm:$0xff]
        %1790 = vmatprep.subr.bf16.mxu0 0
        %1791 = vmatpush1.bf16.xpose.msra.mxu0 0
        %1792 = vmatprep.subr.bf16.mxu0 0
        %1793 = vmatpush1.bf16.xpose.msra.mxu0 0
        %1794 = vmatprep.subr.bf16.mxu0 0
        %1795 = vmatpush1.bf16.xpose.msra.mxu0 0
        %1796 = vmatprep.subr.bf16.mxu0 0
        %1797 = vmatpush1.bf16.xpose.msra.mxu0 0
        %1798 = vmatprep.subr.bf16.mxu0 0
        %1799 = vmatpush1.bf16.xpose.msra.mxu0 0
        %1800 = vmatprep.subr.bf16.mxu0 0
        %1801 = vmatpush1.bf16.xpose.msra.mxu0 0
        %1802 = vmatprep.subr.bf16.mxu0 0
        %1803 = vmatpush1.bf16.xpose.msra.mxu0 %v1782
        %1804 = vmatprep.subr.bf16.mxu0 0
        %1805 = vmatpush1.bf16.xpose.msra.mxu0 %v1776
        %1806 = vmatprep.subr.bf16.mxu0 0
        %1807 = vmatpush2.bf16.xpose.msra.mxu0 0
        %1808 = vmatprep.subr.bf16.mxu0 0
        %1809 = vmatpush2.bf16.xpose.msra.mxu0 0
        %1810 = vmatprep.subr.bf16.mxu0 0
        %1811 = vmatpush2.bf16.xpose.msra.mxu0 0
        %1812 = vmatprep.subr.bf16.mxu0 0
        %1813 = vmatpush2.bf16.xpose.msra.mxu0 0
        %1814 = vmatprep.subr.bf16.mxu0 0
        %1815 = vmatpush2.bf16.xpose.msra.mxu0 0
        %1816 = vmatprep.subr.bf16.mxu0 0
        %1817 = vmatpush2.bf16.xpose.msra.mxu0 0
        %1818 = vmatprep.subr.bf16.mxu0 0
        %1819 = vmatpush2.bf16.xpose.msra.mxu0 0
        %1820 = vmatprep.subr.bf16.mxu0 0
        %1821 = vmatpush2.bf16.xpose.msra.mxu0 0
        %1822 = vmatprep.mubr.bf16.mxu0 0
        %1823 = vmatmul.mubr.bf16.gmra.mxu0 %v1774
        %v1824 = vpop.f32.mrf.mxu0
        %v1825 = vadd.f32 0.0, %v1824
        %v1826 = vpop.f32.mrf.mxu0
        %v1827 = vpop.f32.mrf.mxu0
        %v1828 = vadd.f32 0.0, %v1827
        %v1829 = vpop.f32.mrf.mxu0
        %1830 = vmatprep.mubr.bf16.mxu0 0
        %1831 = vmatmul.mubr.bf16.gmra.mxu0 %v1780
        %v1832 = vpop.f32.mrf.mxu0
        %v1833 = vadd.f32 0.0, %v1832
        %v1834 = vpop.f32.mrf.mxu0
        %v1835 = vpop.f32.mrf.mxu0
        %v1836 = vadd.f32 0.0, %v1835
        %v1837 = vpop.f32.mrf.mxu0
        %1838 = vdwg.mxu0
        %v1839 = vmul.f32 %v1825, 0.088388346
        %v1840 = vmul.f32 %v1828, 0.088388346
        %v1841 = vmul.f32 %v1833, 0.088388346
        %v1842 = vmul.f32 %v1836, 0.088388346
        %v1843 = vadd.f32 %v1839, %v1786
        %v1844 = vadd.f32 %v1840, %v1787
        %v1845 = vadd.f32 %v1841, %v1788
        %v1846 = vadd.f32 %v1842, %v1789
        %vm1847 = vcmask 261120
        %v1848 = vsel %vm1847, %v1843, -inf
        %1849 = vmax.xlane.f32.xlu0 %v1848
        %v1850 = vpop.xlane.xlu0 %1849
        %v1851 = vsel %vm1847, %v1844, -inf
        %1852 = vmax.xlane.f32.xlu0 %v1851
        %v1853 = vpop.xlane.xlu0 %1852
        %v1854 = vsel %vm1847, %v1845, -inf
        %1855 = vmax.xlane.f32.xlu0 %v1854
        %v1856 = vpop.xlane.xlu0 %1855
        %v1857 = vsel %vm1847, %v1846, -inf
        %1858 = vmax.xlane.f32.xlu0 %v1857
        %v1859 = vpop.xlane.xlu0 %1858
        %v1860 = vsub.f32 %v1843, %v1850
        %v1861 = vsub.f32 %v1844, %v1853
        %v1862 = vsub.f32 %v1845, %v1856
        %v1863 = vsub.f32 %v1846, %v1859
        %v1864 = vmul.f32 %v1860, 1.442695
        %v1865 = vpow.pop %v1864
        %v1866 = vmul.f32 %v1861, 1.442695
        %v1867 = vpow.pop %v1866
        %v1868 = vmul.f32 %v1862, 1.442695
        %v1869 = vpow.pop %v1868
        %v1870 = vmul.f32 %v1863, 1.442695
        %v1871 = vpow.pop %v1870
        %v1872 = vsel %vm1847, %v1865, 0.0
        %1873 = vadd.xlane.f32.xlu0 %v1872
        %v1874 = vpop.xlane.xlu0 %1873
        %v1875 = vsel %vm1847, %v1867, 0.0
        %1876 = vadd.xlane.f32.xlu0 %v1875
        %v1877 = vpop.xlane.xlu0 %1876
        %v1878 = vsel %vm1847, %v1869, 0.0
        %1879 = vadd.xlane.f32.xlu0 %v1878
        %v1880 = vpop.xlane.xlu0 %1879
        %v1881 = vsel %vm1847, %v1871, 0.0
        %1882 = vadd.xlane.f32.xlu0 %v1881
        %v1883 = vpop.xlane.xlu0 %1882
        %v1884 = vrcp.pop %v1874
        %v1885 = vrcp.pop %v1877
        %v1886 = vrcp.pop %v1880
        %v1887 = vrcp.pop %v1883
        %v1888 = vmul.f32 %v1865, %v1884
        %v1889 = vmul.f32 %v1867, %v1885
        %v1890 = vmul.f32 %v1869, %v1886
        %v1891 = vmul.f32 %v1871, %v1887
        %v1892 = vpack.c.bf16 %v1889, %v1888
        %v1893 = vpack.c.bf16 %v1891, %v1890
        %v1895 = vsel %vm1847, %v1892, 0
        %v1898 = vsel %vm1847, %v1893, 0
        %1900 = vmatprep.subr.bf16.mxu0 0
        %1901 = vmatpush1.bf16.msra.mxu0 0
        %1902 = vmatprep.subr.bf16.mxu0 0
        %1903 = vmatpush1.bf16.msra.mxu0 0
        %1904 = vmatprep.subr.bf16.mxu0 0
        %1905 = vmatpush1.bf16.msra.mxu0 0
        %1906 = vmatprep.subr.bf16.mxu0 0
        %1907 = vmatpush1.bf16.msra.mxu0 0
        %1908 = vmatprep.subr.bf16.mxu0 0
        %1909 = vmatpush1.bf16.msra.mxu0 0
        %1910 = vmatprep.subr.bf16.mxu0 0
        %1911 = vmatpush1.bf16.msra.mxu0 0
        %1912 = vmatprep.subr.bf16.mxu0 0
        %1913 = vmatpush1.bf16.msra.mxu0 %v1784
        %1914 = vmatprep.subr.bf16.mxu0 0
        %1915 = vmatpush1.bf16.msra.mxu0 %v1778
        %1916 = vmatprep.subr.bf16.mxu0 0
        %1917 = vmatpush2.bf16.msra.mxu0 0
        %1918 = vmatprep.subr.bf16.mxu0 0
        %1919 = vmatpush2.bf16.msra.mxu0 0
        %1920 = vmatprep.subr.bf16.mxu0 0
        %1921 = vmatpush2.bf16.msra.mxu0 0
        %1922 = vmatprep.subr.bf16.mxu0 0
        %1923 = vmatpush2.bf16.msra.mxu0 0
        %1924 = vmatprep.subr.bf16.mxu0 0
        %1925 = vmatpush2.bf16.msra.mxu0 0
        %1926 = vmatprep.subr.bf16.mxu0 0
        %1927 = vmatpush2.bf16.msra.mxu0 0
        %1928 = vmatprep.subr.bf16.mxu0 0
        %1929 = vmatpush2.bf16.msra.mxu0 0
        %1930 = vmatprep.subr.bf16.mxu0 0
        %1931 = vmatpush2.bf16.msra.mxu0 0
        %1932 = vmatprep.mubr.bf16.mxu0 0
        %1933 = vmatmul.mubr.bf16.gmra.mxu0 %v1895
        %v1934 = vpop.f32.mrf.mxu0
        %v1935 = vadd.f32 0.0, %v1934
        %v1936 = vpop.f32.mrf.mxu0
        %v1937 = vpop.f32.mrf.mxu0
        %v1938 = vadd.f32 0.0, %v1937
        %v1939 = vpop.f32.mrf.mxu0
        %1940 = vmatprep.mubr.bf16.mxu0 0
        %1941 = vmatmul.mubr.bf16.gmra.mxu0 %v1898
        %v1942 = vpop.f32.mrf.mxu0
        %v1943 = vadd.f32 0.0, %v1942
        %v1944 = vpop.f32.mrf.mxu0
        %v1945 = vpop.f32.mrf.mxu0
        %v1946 = vadd.f32 0.0, %v1945
        %v1947 = vpop.f32.mrf.mxu0
        %1948 = vdwg.mxu0
        %v1949 = vpack.c.bf16 %v1938, %v1935
        %v1950 = vpack.c.bf16 %v1946, %v1943
        %v1951 = vld [vmem:[%s840] sm:$0xff]
        %v1952 = vld [vmem:[%s840 + $0x8] sm:$0xff]
        %v1953 = vld [vmem:[%s840 + $0x10] sm:$0xff]
        %v1954 = vld [vmem:[%s840 + $0x18] sm:$0xff]
        %v1955 = vld [vmem:[%s840 + $0x20] sm:$0xff]
        %v1956 = vld [vmem:[%s840 + $0x28] sm:$0xff]
        %v1957 = vld [vmem:[%s840 + $0x30] sm:$0xff]
        %v1958 = vld [vmem:[%s840 + $0x38] sm:$0xff]
        %v1959 = vld [vmem:[%s840 + $0x40] sm:$0xff]
        %v1960 = vld [vmem:[%s840 + $0x48] sm:$0xff]
        %v1961 = vld [vmem:[%s840 + $0x50] sm:$0xff]
        %v1962 = vld [vmem:[%s840 + $0x58] sm:$0xff]
        %v1963 = vld [vmem:[%s840 + $0x60] sm:$0xff]
        %v1964 = vld [vmem:[%s840 + $0x68] sm:$0xff]
        %v1965 = vld [vmem:[%s840 + $0x70] sm:$0xff]
        %v1966 = vld [vmem:[%s840 + $0x78] sm:$0xff]
        %1967 = vmatprep.subr.bf16.mxu0 0
        %1968 = vmatpush1.bf16.xpose.msra.mxu0 0
        %1969 = vmatprep.subr.bf16.mxu0 0
        %1970 = vmatpush1.bf16.xpose.msra.mxu0 0
        %1971 = vmatprep.subr.bf16.mxu0 0
        %1972 = vmatpush1.bf16.xpose.msra.mxu0 0
        %1973 = vmatprep.subr.bf16.mxu0 0
        %1974 = vmatpush1.bf16.xpose.msra.mxu0 0
        %1975 = vmatprep.subr.bf16.mxu0 0
        %1976 = vmatpush1.bf16.xpose.msra.mxu0 0
        %1977 = vmatprep.subr.bf16.mxu0 0
        %1978 = vmatpush1.bf16.xpose.msra.mxu0 0
        %1979 = vmatprep.subr.bf16.mxu0 0
        %1980 = vmatpush1.bf16.xpose.msra.mxu0 %v1783
        %1981 = vmatprep.subr.bf16.mxu0 0
        %1982 = vmatpush1.bf16.xpose.msra.mxu0 %v1777
        %1983 = vmatprep.subr.bf16.mxu0 0
        %1984 = vmatpush2.bf16.xpose.msra.mxu0 0
        %1985 = vmatprep.subr.bf16.mxu0 0
        %1986 = vmatpush2.bf16.xpose.msra.mxu0 0
        %1987 = vmatprep.subr.bf16.mxu0 0
        %1988 = vmatpush2.bf16.xpose.msra.mxu0 0
        %1989 = vmatprep.subr.bf16.mxu0 0
        %1990 = vmatpush2.bf16.xpose.msra.mxu0 0
        %1991 = vmatprep.subr.bf16.mxu0 0
        %1992 = vmatpush2.bf16.xpose.msra.mxu0 0
        %1993 = vmatprep.subr.bf16.mxu0 0
        %1994 = vmatpush2.bf16.xpose.msra.mxu0 0
        %1995 = vmatprep.subr.bf16.mxu0 0
        %1996 = vmatpush2.bf16.xpose.msra.mxu0 0
        %1997 = vmatprep.subr.bf16.mxu0 0
        %1998 = vmatpush2.bf16.xpose.msra.mxu0 0
        %1999 = vmatprep.mubr.bf16.mxu0 0
        %2000 = vmatmul.mubr.bf16.gmra.mxu0 %v1775
        %v2001 = vpop.f32.mrf.mxu0
        %v2002 = vadd.f32 0.0, %v2001
        %v2003 = vpop.f32.mrf.mxu0
        %v2004 = vpop.f32.mrf.mxu0
        %v2005 = vadd.f32 0.0, %v2004
        %v2006 = vpop.f32.mrf.mxu0
        %2007 = vmatprep.mubr.bf16.mxu0 0
        %2008 = vmatmul.mubr.bf16.gmra.mxu0 %v1781
        %v2009 = vpop.f32.mrf.mxu0
        %v2010 = vadd.f32 0.0, %v2009
        %v2011 = vpop.f32.mrf.mxu0
        %v2012 = vpop.f32.mrf.mxu0
        %v2013 = vadd.f32 0.0, %v2012
        %v2014 = vpop.f32.mrf.mxu0
        %2015 = vdwg.mxu0
        %v2016 = vmul.f32 %v2002, 0.088388346
        %v2017 = vmul.f32 %v2005, 0.088388346
        %v2018 = vmul.f32 %v2010, 0.088388346
        %v2019 = vmul.f32 %v2013, 0.088388346
        %v2020 = vadd.f32 %v2016, %v1786
        %v2021 = vadd.f32 %v2017, %v1787
        %v2022 = vadd.f32 %v2018, %v1788
        %v2023 = vadd.f32 %v2019, %v1789
        %v2024 = vsel %vm1847, %v2020, -inf
        %2025 = vmax.xlane.f32.xlu0 %v2024
        %v2026 = vpop.xlane.xlu0 %2025
        %v2027 = vsel %vm1847, %v2021, -inf
        %2028 = vmax.xlane.f32.xlu0 %v2027
        %v2029 = vpop.xlane.xlu0 %2028
        %v2030 = vsel %vm1847, %v2022, -inf
        %2031 = vmax.xlane.f32.xlu0 %v2030
        %v2032 = vpop.xlane.xlu0 %2031
        %v2033 = vsel %vm1847, %v2023, -inf
        %2034 = vmax.xlane.f32.xlu0 %v2033
        %v2035 = vpop.xlane.xlu0 %2034
        %v2036 = vsub.f32 %v2020, %v2026
        %v2037 = vsub.f32 %v2021, %v2029
        %v2038 = vsub.f32 %v2022, %v2032
        %v2039 = vsub.f32 %v2023, %v2035
        %v2040 = vmul.f32 %v2036, 1.442695
        %v2041 = vpow.pop %v2040
        %v2042 = vmul.f32 %v2037, 1.442695
        %v2043 = vpow.pop %v2042
        %v2044 = vmul.f32 %v2038, 1.442695
        %v2045 = vpow.pop %v2044
        %v2046 = vmul.f32 %v2039, 1.442695
        %v2047 = vpow.pop %v2046
        %v2048 = vsel %vm1847, %v2041, 0.0
        %2049 = vadd.xlane.f32.xlu0 %v2048
        %v2050 = vpop.xlane.xlu0 %2049
        %v2051 = vsel %vm1847, %v2043, 0.0
        %2052 = vadd.xlane.f32.xlu0 %v2051
        %v2053 = vpop.xlane.xlu0 %2052
        %v2054 = vsel %vm1847, %v2045, 0.0
        %2055 = vadd.xlane.f32.xlu0 %v2054
        %v2056 = vpop.xlane.xlu0 %2055
        %v2057 = vsel %vm1847, %v2047, 0.0
        %2058 = vadd.xlane.f32.xlu0 %v2057
        %v2059 = vpop.xlane.xlu0 %2058
        %v2060 = vrcp.pop %v2050
        %v2061 = vrcp.pop %v2053
        %v2062 = vrcp.pop %v2056
        %v2063 = vrcp.pop %v2059
        %v2064 = vmul.f32 %v2041, %v2060
        %v2065 = vmul.f32 %v2043, %v2061
        %v2066 = vmul.f32 %v2045, %v2062
        %v2067 = vmul.f32 %v2047, %v2063
        %v2068 = vpack.c.bf16 %v2065, %v2064
        %v2069 = vpack.c.bf16 %v2067, %v2066
        %v2071 = vsel %vm1847, %v2068, 0
        %v2074 = vsel %vm1847, %v2069, 0
        %2076 = vmatprep.subr.bf16.mxu0 0
        %2077 = vmatpush1.bf16.msra.mxu0 0
        %2078 = vmatprep.subr.bf16.mxu0 0
        %2079 = vmatpush1.bf16.msra.mxu0 0
        %2080 = vmatprep.subr.bf16.mxu0 0
        %2081 = vmatpush1.bf16.msra.mxu0 0
        %2082 = vmatprep.subr.bf16.mxu0 0
        %2083 = vmatpush1.bf16.msra.mxu0 0
        %2084 = vmatprep.subr.bf16.mxu0 0
        %2085 = vmatpush1.bf16.msra.mxu0 0
        %2086 = vmatprep.subr.bf16.mxu0 0
        %2087 = vmatpush1.bf16.msra.mxu0 0
        %2088 = vmatprep.subr.bf16.mxu0 0
        %2089 = vmatpush1.bf16.msra.mxu0 %v1785
        %2090 = vmatprep.subr.bf16.mxu0 0
        %2091 = vmatpush1.bf16.msra.mxu0 %v1779
        %2092 = vmatprep.subr.bf16.mxu0 0
        %2093 = vmatpush2.bf16.msra.mxu0 0
        %2094 = vmatprep.subr.bf16.mxu0 0
        %2095 = vmatpush2.bf16.msra.mxu0 0
        %2096 = vmatprep.subr.bf16.mxu0 0
        %2097 = vmatpush2.bf16.msra.mxu0 0
        %2098 = vmatprep.subr.bf16.mxu0 0
        %2099 = vmatpush2.bf16.msra.mxu0 0
        %2100 = vmatprep.subr.bf16.mxu0 0
        %2101 = vmatpush2.bf16.msra.mxu0 0
        %2102 = vmatprep.subr.bf16.mxu0 0
        %2103 = vmatpush2.bf16.msra.mxu0 0
        %2104 = vmatprep.subr.bf16.mxu0 0
        %2105 = vmatpush2.bf16.msra.mxu0 0
        %2106 = vmatprep.subr.bf16.mxu0 0
        %2107 = vmatpush2.bf16.msra.mxu0 0
        %2108 = vmatprep.mubr.bf16.mxu0 0
        %2109 = vmatmul.mubr.bf16.gmra.mxu0 %v2071
        %v2110 = vpop.f32.mrf.mxu0
        %v2111 = vadd.f32 0.0, %v2110
        %v2112 = vpop.f32.mrf.mxu0
        %v2113 = vpop.f32.mrf.mxu0
        %v2114 = vadd.f32 0.0, %v2113
        %v2115 = vpop.f32.mrf.mxu0
        %2116 = vmatprep.mubr.bf16.mxu0 0
        %2117 = vmatmul.mubr.bf16.gmra.mxu0 %v2074
        %v2118 = vpop.f32.mrf.mxu0
        %v2119 = vadd.f32 0.0, %v2118
        %v2120 = vpop.f32.mrf.mxu0
        %v2121 = vpop.f32.mrf.mxu0
        %v2122 = vadd.f32 0.0, %v2121
        %v2123 = vpop.f32.mrf.mxu0
        %2124 = vdwg.mxu0
        %v2125 = vpack.c.bf16 %v2114, %v2111
        %v2126 = vpack.c.bf16 %v2122, %v2119
        %v2127 = vld [vmem:[%s840 + $0x80] sm:$0xff]
        %v2128 = vld [vmem:[%s840 + $0x88] sm:$0xff]
        %v2129 = vld [vmem:[%s840 + $0x90] sm:$0xff]
        %v2130 = vld [vmem:[%s840 + $0x98] sm:$0xff]
        %v2131 = vld [vmem:[%s840 + $0xa0] sm:$0xff]
        %v2132 = vld [vmem:[%s840 + $0xa8] sm:$0xff]
        %v2133 = vld [vmem:[%s840 + $0xb0] sm:$0xff]
        %v2134 = vld [vmem:[%s840 + $0xb8] sm:$0xff]
        %v2135 = vld [vmem:[%s840 + $0xc0] sm:$0xff]
        %v2136 = vld [vmem:[%s840 + $0xc8] sm:$0xff]
        %v2137 = vld [vmem:[%s840 + $0xd0] sm:$0xff]
        %v2138 = vld [vmem:[%s840 + $0xd8] sm:$0xff]
        %v2139 = vld [vmem:[%s840 + $0xe0] sm:$0xff]
        %v2140 = vld [vmem:[%s840 + $0xe8] sm:$0xff]
        %v2141 = vld [vmem:[%s840 + $0xf0] sm:$0xff]
        %v2142 = vld [vmem:[%s840 + $0xf8] sm:$0xff]
        %v2159 = vunpack.c.l.b16 %v2127
        %v2160 = vunpack.c.h.b16 %v2127
        %v2161 = vunpack.c.l.b16 %v2128
        %v2162 = vunpack.c.h.b16 %v2128
        %v2163 = vunpack.c.l.b16 %v2129
        %v2164 = vunpack.c.h.b16 %v2129
        %v2165 = vunpack.c.l.b16 %v2130
        %v2166 = vunpack.c.h.b16 %v2130
        %v2167 = vunpack.c.l.b16 %v2131
        %v2168 = vunpack.c.h.b16 %v2131
        %v2169 = vunpack.c.l.b16 %v2132
        %v2170 = vunpack.c.h.b16 %v2132
        %v2171 = vunpack.c.l.b16 %v2133
        %v2172 = vunpack.c.h.b16 %v2133
        %v2173 = vunpack.c.l.b16 %v2134
        %v2174 = vunpack.c.h.b16 %v2134
        %v2175 = vunpack.c.l.b16 %v2135
        %v2176 = vunpack.c.h.b16 %v2135
        %v2177 = vunpack.c.l.b16 %v2136
        %v2178 = vunpack.c.h.b16 %v2136
        %v2179 = vunpack.c.l.b16 %v2137
        %v2180 = vunpack.c.h.b16 %v2137
        %v2181 = vunpack.c.l.b16 %v2138
        %v2182 = vunpack.c.h.b16 %v2138
        %v2183 = vunpack.c.l.b16 %v2139
        %v2184 = vunpack.c.h.b16 %v2139
        %v2185 = vunpack.c.l.b16 %v2140
        %v2186 = vunpack.c.h.b16 %v2140
        %v2187 = vunpack.c.l.b16 %v2141
        %v2188 = vunpack.c.h.b16 %v2141
        %v2189 = vunpack.c.l.b16 %v2142
        %v2190 = vunpack.c.h.b16 %v2142
        %v2191 = vpack.c.b16 %v2161, %v2159
        %v2192 = vpack.c.b16 %v2162, %v2160
        %v2193 = vpack.c.b16 %v2165, %v2163
        %v2194 = vpack.c.b16 %v2166, %v2164
        %v2195 = vpack.c.b16 %v2169, %v2167
        %v2196 = vpack.c.b16 %v2170, %v2168
        %v2197 = vpack.c.b16 %v2173, %v2171
        %v2198 = vpack.c.b16 %v2174, %v2172
        %v2199 = vpack.c.b16 %v2177, %v2175
        %v2200 = vpack.c.b16 %v2178, %v2176
        %v2201 = vpack.c.b16 %v2181, %v2179
        %v2202 = vpack.c.b16 %v2182, %v2180
        %v2203 = vpack.c.b16 %v2185, %v2183
        %v2204 = vpack.c.b16 %v2186, %v2184
        %v2205 = vpack.c.b16 %v2189, %v2187
        %v2206 = vpack.c.b16 %v2190, %v2188
        %2223 = vmatprep.subr.bf16.mxu0 %v2206
        %2224 = vmatpush1.bf16.msra.mxu0 %v2205
        %2225 = vmatprep.subr.bf16.mxu0 %v2204
        %2226 = vmatpush1.bf16.msra.mxu0 %v2203
        %2227 = vmatprep.subr.bf16.mxu0 %v2202
        %2228 = vmatpush1.bf16.msra.mxu0 %v2201
        %2229 = vmatprep.subr.bf16.mxu0 %v2200
        %2230 = vmatpush1.bf16.msra.mxu0 %v2199
        %2231 = vmatprep.subr.bf16.mxu0 %v2198
        %2232 = vmatpush1.bf16.msra.mxu0 %v2197
        %2233 = vmatprep.subr.bf16.mxu0 %v2196
        %2234 = vmatpush1.bf16.msra.mxu0 %v2195
        %2235 = vmatprep.subr.bf16.mxu0 %v2194
        %2236 = vmatpush1.bf16.msra.mxu0 %v2193
        %2237 = vmatprep.subr.bf16.mxu0 %v2192
        %2238 = vmatpush1.bf16.msra.mxu0 %v2191
        %2239 = vmatprep.subr.bf16.mxu0 0
        %2240 = vmatpush2.bf16.msra.mxu0 0
        %2241 = vmatprep.subr.bf16.mxu0 0
        %2242 = vmatpush2.bf16.msra.mxu0 0
        %2243 = vmatprep.subr.bf16.mxu0 0
        %2244 = vmatpush2.bf16.msra.mxu0 0
        %2245 = vmatprep.subr.bf16.mxu0 0
        %2246 = vmatpush2.bf16.msra.mxu0 0
        %2247 = vmatprep.subr.bf16.mxu0 0
        %2248 = vmatpush2.bf16.msra.mxu0 0
        %2249 = vmatprep.subr.bf16.mxu0 0
        %2250 = vmatpush2.bf16.msra.mxu0 0
        %2251 = vmatprep.subr.bf16.mxu0 0
        %2252 = vmatpush2.bf16.msra.mxu0 0
        %2253 = vmatprep.subr.bf16.mxu0 0
        %2254 = vmatpush2.bf16.msra.mxu0 0
        %2255 = vmatprep.mubr.bf16.mxu0 0
        %2256 = vmatmul.mubr.bf16.gmra.mxu0 %v2125
        %v2257 = vpop.f32.mrf.mxu0
        %v2258 = vadd.f32 0.0, %v2257
        %v2259 = vpop.f32.mrf.mxu0
        %v2260 = vadd.f32 0.0, %v2259
        %v2261 = vpop.f32.mrf.mxu0
        %v2262 = vadd.f32 0.0, %v2261
        %v2263 = vpop.f32.mrf.mxu0
        %v2264 = vadd.f32 0.0, %v2263
        %2265 = vmatprep.mubr.bf16.mxu0 0
        %2266 = vmatmul.mubr.bf16.gmra.mxu0 %v2126
        %v2267 = vpop.f32.mrf.mxu0
        %v2268 = vadd.f32 0.0, %v2267
        %v2269 = vpop.f32.mrf.mxu0
        %v2270 = vadd.f32 0.0, %v2269
        %v2271 = vpop.f32.mrf.mxu0
        %v2272 = vadd.f32 0.0, %v2271
        %v2273 = vpop.f32.mrf.mxu0
        %v2274 = vadd.f32 0.0, %v2273
        %2275 = vdwg.mxu0
        %v2292 = vunpack.c.l.b16 %v1951
        %v2293 = vunpack.c.h.b16 %v1951
        %v2294 = vunpack.c.l.b16 %v1952
        %v2295 = vunpack.c.h.b16 %v1952
        %v2296 = vunpack.c.l.b16 %v1953
        %v2297 = vunpack.c.h.b16 %v1953
        %v2298 = vunpack.c.l.b16 %v1954
        %v2299 = vunpack.c.h.b16 %v1954
        %v2300 = vunpack.c.l.b16 %v1955
        %v2301 = vunpack.c.h.b16 %v1955
        %v2302 = vunpack.c.l.b16 %v1956
        %v2303 = vunpack.c.h.b16 %v1956
        %v2304 = vunpack.c.l.b16 %v1957
        %v2305 = vunpack.c.h.b16 %v1957
        %v2306 = vunpack.c.l.b16 %v1958
        %v2307 = vunpack.c.h.b16 %v1958
        %v2308 = vunpack.c.l.b16 %v1959
        %v2309 = vunpack.c.h.b16 %v1959
        %v2310 = vunpack.c.l.b16 %v1960
        %v2311 = vunpack.c.h.b16 %v1960
        %v2312 = vunpack.c.l.b16 %v1961
        %v2313 = vunpack.c.h.b16 %v1961
        %v2314 = vunpack.c.l.b16 %v1962
        %v2315 = vunpack.c.h.b16 %v1962
        %v2316 = vunpack.c.l.b16 %v1963
        %v2317 = vunpack.c.h.b16 %v1963
        %v2318 = vunpack.c.l.b16 %v1964
        %v2319 = vunpack.c.h.b16 %v1964
        %v2320 = vunpack.c.l.b16 %v1965
        %v2321 = vunpack.c.h.b16 %v1965
        %v2322 = vunpack.c.l.b16 %v1966
        %v2323 = vunpack.c.h.b16 %v1966
        %v2324 = vpack.c.b16 %v2294, %v2292
        %v2325 = vpack.c.b16 %v2295, %v2293
        %v2326 = vpack.c.b16 %v2298, %v2296
        %v2327 = vpack.c.b16 %v2299, %v2297
        %v2328 = vpack.c.b16 %v2302, %v2300
        %v2329 = vpack.c.b16 %v2303, %v2301
        %v2330 = vpack.c.b16 %v2306, %v2304
        %v2331 = vpack.c.b16 %v2307, %v2305
        %v2332 = vpack.c.b16 %v2310, %v2308
        %v2333 = vpack.c.b16 %v2311, %v2309
        %v2334 = vpack.c.b16 %v2314, %v2312
        %v2335 = vpack.c.b16 %v2315, %v2313
        %v2336 = vpack.c.b16 %v2318, %v2316
        %v2337 = vpack.c.b16 %v2319, %v2317
        %v2338 = vpack.c.b16 %v2322, %v2320
        %v2339 = vpack.c.b16 %v2323, %v2321
        %2356 = vmatprep.subr.bf16.mxu0 %v2339
        %2357 = vmatpush1.bf16.msra.mxu0 %v2338
        %2358 = vmatprep.subr.bf16.mxu0 %v2337
        %2359 = vmatpush1.bf16.msra.mxu0 %v2336
        %2360 = vmatprep.subr.bf16.mxu0 %v2335
        %2361 = vmatpush1.bf16.msra.mxu0 %v2334
        %2362 = vmatprep.subr.bf16.mxu0 %v2333
        %2363 = vmatpush1.bf16.msra.mxu0 %v2332
        %2364 = vmatprep.subr.bf16.mxu0 %v2331
        %2365 = vmatpush1.bf16.msra.mxu0 %v2330
        %2366 = vmatprep.subr.bf16.mxu0 %v2329
        %2367 = vmatpush1.bf16.msra.mxu0 %v2328
        %2368 = vmatprep.subr.bf16.mxu0 %v2327
        %2369 = vmatpush1.bf16.msra.mxu0 %v2326
        %2370 = vmatprep.subr.bf16.mxu0 %v2325
        %2371 = vmatpush1.bf16.msra.mxu0 %v2324
        %2372 = vmatprep.subr.bf16.mxu0 0
        %2373 = vmatpush2.bf16.msra.mxu0 0
        %2374 = vmatprep.subr.bf16.mxu0 0
        %2375 = vmatpush2.bf16.msra.mxu0 0
        %2376 = vmatprep.subr.bf16.mxu0 0
        %2377 = vmatpush2.bf16.msra.mxu0 0
        %2378 = vmatprep.subr.bf16.mxu0 0
        %2379 = vmatpush2.bf16.msra.mxu0 0
        %2380 = vmatprep.subr.bf16.mxu0 0
        %2381 = vmatpush2.bf16.msra.mxu0 0
        %2382 = vmatprep.subr.bf16.mxu0 0
        %2383 = vmatpush2.bf16.msra.mxu0 0
        %2384 = vmatprep.subr.bf16.mxu0 0
        %2385 = vmatpush2.bf16.msra.mxu0 0
        %2386 = vmatprep.subr.bf16.mxu0 0
        %2387 = vmatpush2.bf16.msra.mxu0 0
        %2388 = vmatprep.mubr.bf16.mxu0 0
        %2389 = vmatmul.mubr.bf16.gmra.mxu0 %v1949
        %v2390 = vpop.f32.mrf.mxu0
        %v2391 = vadd.f32 %v2258, %v2390
        %v2392 = vpop.f32.mrf.mxu0
        %v2393 = vadd.f32 %v2260, %v2392
        %v2394 = vpop.f32.mrf.mxu0
        %v2395 = vadd.f32 %v2262, %v2394
        %v2396 = vpop.f32.mrf.mxu0
        %v2397 = vadd.f32 %v2264, %v2396
        %2398 = vmatprep.mubr.bf16.mxu0 0
        %2399 = vmatmul.mubr.bf16.gmra.mxu0 %v1950
        %v2400 = vpop.f32.mrf.mxu0
        %v2401 = vadd.f32 %v2268, %v2400
        %v2402 = vpop.f32.mrf.mxu0
        %v2403 = vadd.f32 %v2270, %v2402
        %v2404 = vpop.f32.mrf.mxu0
        %v2405 = vadd.f32 %v2272, %v2404
        %v2406 = vpop.f32.mrf.mxu0
        %v2407 = vadd.f32 %v2274, %v2406
        %2408 = vdwg.mxu0
        %v2409 = vld [vmem:[%s844] sm:$0x3]
        %v2411 = vlaneseq
        %v2412 = vshrl.u32 %v2411, 7
        %v2413 = vsub.s32 0, %v2412
        %v2414 = vrot.slane %v2409, %v2413
        %v2415 = vlaneseq
        %v2416 = vshrl.u32 %v2415, 7
        %v2417 = vsub.s32 1, %v2416
        %v2418 = vrot.slane %v2409, %v2417
        %v2421 = vadd.f32 %v2391, %v2414
        %v2422 = vadd.f32 %v2393, %v2418
        %v2423 = vadd.f32 %v2395, %v2414
        %v2424 = vadd.f32 %v2397, %v2418
        %v2425 = vadd.f32 %v2401, %v2414
        %v2426 = vadd.f32 %v2403, %v2418
        %v2427 = vadd.f32 %v2405, %v2414
        %v2428 = vadd.f32 %v2407, %v2418
        %v2429 = vadd.f32 %v2421, %v995
        %v2430 = vadd.f32 %v2422, %v996
        %v2431 = vadd.f32 %v2423, %v997
        %v2432 = vadd.f32 %v2424, %v998
        %v2433 = vadd.f32 %v2425, %v999
        %v2434 = vadd.f32 %v2426, %v1000
        %v2435 = vadd.f32 %v2427, %v1001
        %v2436 = vadd.f32 %v2428, %v1002
        %v2437 = vld [vmem:[%s848] sm:$0x3]
        %v2438 = vld [vmem:[%s852] sm:$0x3]
        %v2439 = vadd.f32 %v2429, %v2430
        %2440 = vadd.xlane.f32.xlu0 %v2439
        %v2441 = vpop.xlane.xlu0 %2440
        %v2442 = vadd.f32 %v2431, %v2432
        %2443 = vadd.xlane.f32.xlu0 %v2442
        %v2444 = vpop.xlane.xlu0 %2443
        %v2445 = vadd.f32 %v2433, %v2434
        %2446 = vadd.xlane.f32.xlu0 %v2445
        %v2447 = vpop.xlane.xlu0 %2446
        %v2448 = vadd.f32 %v2435, %v2436
        %2449 = vadd.xlane.f32.xlu0 %v2448
        %v2450 = vpop.xlane.xlu0 %2449
        %v2451 = vrcp.pop 256.0
        %v2452 = vmul.f32 %v2441, %v2451
        %v2453 = vmul.f32 %v2444, %v2451
        %v2454 = vmul.f32 %v2447, %v2451
        %v2455 = vmul.f32 %v2450, %v2451
        %v2456 = vsub.f32 %v2429, %v2452
        %v2457 = vsub.f32 %v2430, %v2452
        %v2458 = vsub.f32 %v2431, %v2453
        %v2459 = vsub.f32 %v2432, %v2453
        %v2460 = vsub.f32 %v2433, %v2454
        %v2461 = vsub.f32 %v2434, %v2454
        %v2462 = vsub.f32 %v2435, %v2455
        %v2463 = vsub.f32 %v2436, %v2455
        %v2464 = vmul.f32 %v2456, %v2456
        %v2465 = vmul.f32 %v2457, %v2457
        %v2466 = vmul.f32 %v2458, %v2458
        %v2467 = vmul.f32 %v2459, %v2459
        %v2468 = vmul.f32 %v2460, %v2460
        %v2469 = vmul.f32 %v2461, %v2461
        %v2470 = vmul.f32 %v2462, %v2462
        %v2471 = vmul.f32 %v2463, %v2463
        %v2472 = vadd.f32 %v2464, %v2465
        %2473 = vadd.xlane.f32.xlu0 %v2472
        %v2474 = vpop.xlane.xlu0 %2473
        %v2475 = vadd.f32 %v2466, %v2467
        %2476 = vadd.xlane.f32.xlu0 %v2475
        %v2477 = vpop.xlane.xlu0 %2476
        %v2478 = vadd.f32 %v2468, %v2469
        %2479 = vadd.xlane.f32.xlu0 %v2478
        %v2480 = vpop.xlane.xlu0 %2479
        %v2481 = vadd.f32 %v2470, %v2471
        %2482 = vadd.xlane.f32.xlu0 %v2481
        %v2483 = vpop.xlane.xlu0 %2482
        %v2484 = vmul.f32 %v2474, %v2451
        %v2485 = vmul.f32 %v2477, %v2451
        %v2486 = vmul.f32 %v2480, %v2451
        %v2487 = vmul.f32 %v2483, %v2451
        %v2488 = vadd.f32 %v2484, 1e-12
        %v2489 = vadd.f32 %v2485, 1e-12
        %v2490 = vadd.f32 %v2486, 1e-12
        %v2491 = vadd.f32 %v2487, 1e-12
        %v2492 = vrsqrt.pop %v2488
        %v2493 = vrsqrt.pop %v2489
        %v2494 = vrsqrt.pop %v2490
        %v2495 = vrsqrt.pop %v2491
        %v2496 = vmul.f32 %v2456, %v2492
        %v2497 = vmul.f32 %v2457, %v2492
        %v2498 = vmul.f32 %v2458, %v2493
        %v2499 = vmul.f32 %v2459, %v2493
        %v2500 = vmul.f32 %v2460, %v2494
        %v2501 = vmul.f32 %v2461, %v2494
        %v2502 = vmul.f32 %v2462, %v2495
        %v2503 = vmul.f32 %v2463, %v2495
        %v2505 = vlaneseq
        %v2506 = vshrl.u32 %v2505, 7
        %v2507 = vsub.s32 0, %v2506
        %v2508 = vrot.slane %v2437, %v2507
        %v2509 = vlaneseq
        %v2510 = vshrl.u32 %v2509, 7
        %v2511 = vsub.s32 1, %v2510
        %v2512 = vrot.slane %v2437, %v2511
        %v2515 = vmul.f32 %v2496, %v2508
        %v2516 = vmul.f32 %v2497, %v2512
        %v2517 = vmul.f32 %v2498, %v2508
        %v2518 = vmul.f32 %v2499, %v2512
        %v2519 = vmul.f32 %v2500, %v2508
        %v2520 = vmul.f32 %v2501, %v2512
        %v2521 = vmul.f32 %v2502, %v2508
        %v2522 = vmul.f32 %v2503, %v2512
        %v2524 = vlaneseq
        %v2525 = vshrl.u32 %v2524, 7
        %v2526 = vsub.s32 0, %v2525
        %v2527 = vrot.slane %v2438, %v2526
        %v2528 = vlaneseq
        %v2529 = vshrl.u32 %v2528, 7
        %v2530 = vsub.s32 1, %v2529
        %v2531 = vrot.slane %v2438, %v2530
        %v2534 = vadd.f32 %v2515, %v2527
        %v2535 = vadd.f32 %v2516, %v2531
        %v2536 = vadd.f32 %v2517, %v2527
        %v2537 = vadd.f32 %v2518, %v2531
        %v2538 = vadd.f32 %v2519, %v2527
        %v2539 = vadd.f32 %v2520, %v2531
        %v2540 = vadd.f32 %v2521, %v2527
        %v2541 = vadd.f32 %v2522, %v2531
        %v2542 = vpack.c.bf16 %v2536, %v2534
        %v2543 = vpack.c.bf16 %v2537, %v2535
        %v2544 = vpack.c.bf16 %v2540, %v2538
        %v2545 = vpack.c.bf16 %v2541, %v2539
        %v2546 = vld [vmem:[%s724] sm:$0xff]
        %v2547 = vld [vmem:[%s724 + $0x8] sm:$0xff]
        %v2548 = vld [vmem:[%s724 + $0x10] sm:$0xff]
        %v2549 = vld [vmem:[%s724 + $0x18] sm:$0xff]
        %v2550 = vld [vmem:[%s724 + $0x20] sm:$0xff]
        %v2551 = vld [vmem:[%s724 + $0x28] sm:$0xff]
        %v2552 = vld [vmem:[%s724 + $0x30] sm:$0xff]
        %v2553 = vld [vmem:[%s724 + $0x38] sm:$0xff]
        %v2554 = vld [vmem:[%s724 + $0x40] sm:$0xff]
        %v2555 = vld [vmem:[%s724 + $0x48] sm:$0xff]
        %v2556 = vld [vmem:[%s724 + $0x50] sm:$0xff]
        %v2557 = vld [vmem:[%s724 + $0x58] sm:$0xff]
        %v2558 = vld [vmem:[%s724 + $0x60] sm:$0xff]
        %v2559 = vld [vmem:[%s724 + $0x68] sm:$0xff]
        %v2560 = vld [vmem:[%s724 + $0x70] sm:$0xff]
        %v2561 = vld [vmem:[%s724 + $0x78] sm:$0xff]
        %v2562 = vld [vmem:[%s724 + $0x80] sm:$0xff]
        %v2563 = vld [vmem:[%s724 + $0x88] sm:$0xff]
        %v2564 = vld [vmem:[%s724 + $0x90] sm:$0xff]
        %v2565 = vld [vmem:[%s724 + $0x98] sm:$0xff]
        %v2566 = vld [vmem:[%s724 + $0xa0] sm:$0xff]
        %v2567 = vld [vmem:[%s724 + $0xa8] sm:$0xff]
        %v2568 = vld [vmem:[%s724 + $0xb0] sm:$0xff]
        %v2569 = vld [vmem:[%s724 + $0xb8] sm:$0xff]
        %v2570 = vld [vmem:[%s724 + $0xc0] sm:$0xff]
        %v2571 = vld [vmem:[%s724 + $0xc8] sm:$0xff]
        %v2572 = vld [vmem:[%s724 + $0xd0] sm:$0xff]
        %v2573 = vld [vmem:[%s724 + $0xd8] sm:$0xff]
        %v2574 = vld [vmem:[%s724 + $0xe0] sm:$0xff]
        %v2575 = vld [vmem:[%s724 + $0xe8] sm:$0xff]
        %v2576 = vld [vmem:[%s724 + $0xf0] sm:$0xff]
        %v2577 = vld [vmem:[%s724 + $0xf8] sm:$0xff]
        %v2578 = vld [vmem:[%s724 + $0x100] sm:$0xff]
        %v2579 = vld [vmem:[%s724 + $0x108] sm:$0xff]
        %v2580 = vld [vmem:[%s724 + $0x110] sm:$0xff]
        %v2581 = vld [vmem:[%s724 + $0x118] sm:$0xff]
        %v2582 = vld [vmem:[%s724 + $0x120] sm:$0xff]
        %v2583 = vld [vmem:[%s724 + $0x128] sm:$0xff]
        %v2584 = vld [vmem:[%s724 + $0x130] sm:$0xff]
        %v2585 = vld [vmem:[%s724 + $0x138] sm:$0xff]
        %v2586 = vld [vmem:[%s724 + $0x140] sm:$0xff]
        %v2587 = vld [vmem:[%s724 + $0x148] sm:$0xff]
        %v2588 = vld [vmem:[%s724 + $0x150] sm:$0xff]
        %v2589 = vld [vmem:[%s724 + $0x158] sm:$0xff]
        %v2590 = vld [vmem:[%s724 + $0x160] sm:$0xff]
        %v2591 = vld [vmem:[%s724 + $0x168] sm:$0xff]
        %v2592 = vld [vmem:[%s724 + $0x170] sm:$0xff]
        %v2593 = vld [vmem:[%s724 + $0x178] sm:$0xff]
        %v2594 = vld [vmem:[%s724 + $0x180] sm:$0xff]
        %v2595 = vld [vmem:[%s724 + $0x188] sm:$0xff]
        %v2596 = vld [vmem:[%s724 + $0x190] sm:$0xff]
        %v2597 = vld [vmem:[%s724 + $0x198] sm:$0xff]
        %v2598 = vld [vmem:[%s724 + $0x1a0] sm:$0xff]
        %v2599 = vld [vmem:[%s724 + $0x1a8] sm:$0xff]
        %v2600 = vld [vmem:[%s724 + $0x1b0] sm:$0xff]
        %v2601 = vld [vmem:[%s724 + $0x1b8] sm:$0xff]
        %v2602 = vld [vmem:[%s724 + $0x1c0] sm:$0xff]
        %v2603 = vld [vmem:[%s724 + $0x1c8] sm:$0xff]
        %v2604 = vld [vmem:[%s724 + $0x1d0] sm:$0xff]
        %v2605 = vld [vmem:[%s724 + $0x1d8] sm:$0xff]
        %v2606 = vld [vmem:[%s724 + $0x1e0] sm:$0xff]
        %v2607 = vld [vmem:[%s724 + $0x1e8] sm:$0xff]
        %v2608 = vld [vmem:[%s724 + $0x1f0] sm:$0xff]
        %v2609 = vld [vmem:[%s724 + $0x1f8] sm:$0xff]
        %v2610 = vld [vmem:[%s856] sm:$0xf]
        %v2612 = vlaneseq
        %v2613 = vshrl.u32 %v2612, 7
        %v2614 = vsub.s32 0, %v2613
        %v2615 = vrot.slane %v2610, %v2614
        %v2616 = vlaneseq
        %v2617 = vshrl.u32 %v2616, 7
        %v2618 = vsub.s32 1, %v2617
        %v2619 = vrot.slane %v2610, %v2618
        %v2620 = vlaneseq
        %v2621 = vshrl.u32 %v2620, 7
        %v2622 = vsub.s32 2, %v2621
        %v2623 = vrot.slane %v2610, %v2622
        %v2624 = vlaneseq
        %v2625 = vshrl.u32 %v2624, 7
        %v2626 = vsub.s32 3, %v2625
        %v2627 = vrot.slane %v2610, %v2626
        %v2696 = vunpack.c.l.b16 %v2546
        %v2697 = vunpack.c.h.b16 %v2546
        %v2698 = vunpack.c.l.b16 %v2547
        %v2699 = vunpack.c.h.b16 %v2547
        %v2700 = vunpack.c.l.b16 %v2548
        %v2701 = vunpack.c.h.b16 %v2548
        %v2702 = vunpack.c.l.b16 %v2549
        %v2703 = vunpack.c.h.b16 %v2549
        %v2704 = vunpack.c.l.b16 %v2550
        %v2705 = vunpack.c.h.b16 %v2550
        %v2706 = vunpack.c.l.b16 %v2551
        %v2707 = vunpack.c.h.b16 %v2551
        %v2708 = vunpack.c.l.b16 %v2552
        %v2709 = vunpack.c.h.b16 %v2552
        %v2710 = vunpack.c.l.b16 %v2553
        %v2711 = vunpack.c.h.b16 %v2553
        %v2712 = vunpack.c.l.b16 %v2554
        %v2713 = vunpack.c.h.b16 %v2554
        %v2714 = vunpack.c.l.b16 %v2555
        %v2715 = vunpack.c.h.b16 %v2555
        %v2716 = vunpack.c.l.b16 %v2556
        %v2717 = vunpack.c.h.b16 %v2556
        %v2718 = vunpack.c.l.b16 %v2557
        %v2719 = vunpack.c.h.b16 %v2557
        %v2720 = vunpack.c.l.b16 %v2558
        %v2721 = vunpack.c.h.b16 %v2558
        %v2722 = vunpack.c.l.b16 %v2559
        %v2723 = vunpack.c.h.b16 %v2559
        %v2724 = vunpack.c.l.b16 %v2560
        %v2725 = vunpack.c.h.b16 %v2560
        %v2726 = vunpack.c.l.b16 %v2561
        %v2727 = vunpack.c.h.b16 %v2561
        %v2728 = vunpack.c.l.b16 %v2562
        %v2729 = vunpack.c.h.b16 %v2562
        %v2730 = vunpack.c.l.b16 %v2563
        %v2731 = vunpack.c.h.b16 %v2563
        %v2732 = vunpack.c.l.b16 %v2564
        %v2733 = vunpack.c.h.b16 %v2564
        %v2734 = vunpack.c.l.b16 %v2565
        %v2735 = vunpack.c.h.b16 %v2565
        %v2736 = vunpack.c.l.b16 %v2566
        %v2737 = vunpack.c.h.b16 %v2566
        %v2738 = vunpack.c.l.b16 %v2567
        %v2739 = vunpack.c.h.b16 %v2567
        %v2740 = vunpack.c.l.b16 %v2568
        %v2741 = vunpack.c.h.b16 %v2568
        %v2742 = vunpack.c.l.b16 %v2569
        %v2743 = vunpack.c.h.b16 %v2569
        %v2744 = vunpack.c.l.b16 %v2570
        %v2745 = vunpack.c.h.b16 %v2570
        %v2746 = vunpack.c.l.b16 %v2571
        %v2747 = vunpack.c.h.b16 %v2571
        %v2748 = vunpack.c.l.b16 %v2572
        %v2749 = vunpack.c.h.b16 %v2572
        %v2750 = vunpack.c.l.b16 %v2573
        %v2751 = vunpack.c.h.b16 %v2573
        %v2752 = vunpack.c.l.b16 %v2574
        %v2753 = vunpack.c.h.b16 %v2574
        %v2754 = vunpack.c.l.b16 %v2575
        %v2755 = vunpack.c.h.b16 %v2575
        %v2756 = vunpack.c.l.b16 %v2576
        %v2757 = vunpack.c.h.b16 %v2576
        %v2758 = vunpack.c.l.b16 %v2577
        %v2759 = vunpack.c.h.b16 %v2577
        %v2760 = vunpack.c.l.b16 %v2578
        %v2761 = vunpack.c.h.b16 %v2578
        %v2762 = vunpack.c.l.b16 %v2579
        %v2763 = vunpack.c.h.b16 %v2579
        %v2764 = vunpack.c.l.b16 %v2580
        %v2765 = vunpack.c.h.b16 %v2580
        %v2766 = vunpack.c.l.b16 %v2581
        %v2767 = vunpack.c.h.b16 %v2581
        %v2768 = vunpack.c.l.b16 %v2582
        %v2769 = vunpack.c.h.b16 %v2582
        %v2770 = vunpack.c.l.b16 %v2583
        %v2771 = vunpack.c.h.b16 %v2583
        %v2772 = vunpack.c.l.b16 %v2584
        %v2773 = vunpack.c.h.b16 %v2584
        %v2774 = vunpack.c.l.b16 %v2585
        %v2775 = vunpack.c.h.b16 %v2585
        %v2776 = vunpack.c.l.b16 %v2586
        %v2777 = vunpack.c.h.b16 %v2586
        %v2778 = vunpack.c.l.b16 %v2587
        %v2779 = vunpack.c.h.b16 %v2587
        %v2780 = vunpack.c.l.b16 %v2588
        %v2781 = vunpack.c.h.b16 %v2588
        %v2782 = vunpack.c.l.b16 %v2589
        %v2783 = vunpack.c.h.b16 %v2589
        %v2784 = vunpack.c.l.b16 %v2590
        %v2785 = vunpack.c.h.b16 %v2590
        %v2786 = vunpack.c.l.b16 %v2591
        %v2787 = vunpack.c.h.b16 %v2591
        %v2788 = vunpack.c.l.b16 %v2592
        %v2789 = vunpack.c.h.b16 %v2592
        %v2790 = vunpack.c.l.b16 %v2593
        %v2791 = vunpack.c.h.b16 %v2593
        %v2792 = vunpack.c.l.b16 %v2594
        %v2793 = vunpack.c.h.b16 %v2594
        %v2794 = vunpack.c.l.b16 %v2595
        %v2795 = vunpack.c.h.b16 %v2595
        %v2796 = vunpack.c.l.b16 %v2596
        %v2797 = vunpack.c.h.b16 %v2596
        %v2798 = vunpack.c.l.b16 %v2597
        %v2799 = vunpack.c.h.b16 %v2597
        %v2800 = vunpack.c.l.b16 %v2598
        %v2801 = vunpack.c.h.b16 %v2598
        %v2802 = vunpack.c.l.b16 %v2599
        %v2803 = vunpack.c.h.b16 %v2599
        %v2804 = vunpack.c.l.b16 %v2600
        %v2805 = vunpack.c.h.b16 %v2600
        %v2806 = vunpack.c.l.b16 %v2601
        %v2807 = vunpack.c.h.b16 %v2601
        %v2808 = vunpack.c.l.b16 %v2602
        %v2809 = vunpack.c.h.b16 %v2602
        %v2810 = vunpack.c.l.b16 %v2603
        %v2811 = vunpack.c.h.b16 %v2603
        %v2812 = vunpack.c.l.b16 %v2604
        %v2813 = vunpack.c.h.b16 %v2604
        %v2814 = vunpack.c.l.b16 %v2605
        %v2815 = vunpack.c.h.b16 %v2605
        %v2816 = vunpack.c.l.b16 %v2606
        %v2817 = vunpack.c.h.b16 %v2606
        %v2818 = vunpack.c.l.b16 %v2607
        %v2819 = vunpack.c.h.b16 %v2607
        %v2820 = vunpack.c.l.b16 %v2608
        %v2821 = vunpack.c.h.b16 %v2608
        %v2822 = vunpack.c.l.b16 %v2609
        %v2823 = vunpack.c.h.b16 %v2609
        %v2824 = vpack.c.b16 %v2700, %v2696
        %v2825 = vpack.c.b16 %v2701, %v2697
        %v2826 = vpack.c.b16 %v2702, %v2698
        %v2827 = vpack.c.b16 %v2703, %v2699
        %v2828 = vpack.c.b16 %v2708, %v2704
        %v2829 = vpack.c.b16 %v2709, %v2705
        %v2830 = vpack.c.b16 %v2710, %v2706
        %v2831 = vpack.c.b16 %v2711, %v2707
        %v2832 = vpack.c.b16 %v2716, %v2712
        %v2833 = vpack.c.b16 %v2717, %v2713
        %v2834 = vpack.c.b16 %v2718, %v2714
        %v2835 = vpack.c.b16 %v2719, %v2715
        %v2836 = vpack.c.b16 %v2724, %v2720
        %v2837 = vpack.c.b16 %v2725, %v2721
        %v2838 = vpack.c.b16 %v2726, %v2722
        %v2839 = vpack.c.b16 %v2727, %v2723
        %v2840 = vpack.c.b16 %v2732, %v2728
        %v2841 = vpack.c.b16 %v2733, %v2729
        %v2842 = vpack.c.b16 %v2734, %v2730
        %v2843 = vpack.c.b16 %v2735, %v2731
        %v2844 = vpack.c.b16 %v2740, %v2736
        %v2845 = vpack.c.b16 %v2741, %v2737
        %v2846 = vpack.c.b16 %v2742, %v2738
        %v2847 = vpack.c.b16 %v2743, %v2739
        %v2848 = vpack.c.b16 %v2748, %v2744
        %v2849 = vpack.c.b16 %v2749, %v2745
        %v2850 = vpack.c.b16 %v2750, %v2746
        %v2851 = vpack.c.b16 %v2751, %v2747
        %v2852 = vpack.c.b16 %v2756, %v2752
        %v2853 = vpack.c.b16 %v2757, %v2753
        %v2854 = vpack.c.b16 %v2758, %v2754
        %v2855 = vpack.c.b16 %v2759, %v2755
        %v2856 = vpack.c.b16 %v2764, %v2760
        %v2857 = vpack.c.b16 %v2765, %v2761
        %v2858 = vpack.c.b16 %v2766, %v2762
        %v2859 = vpack.c.b16 %v2767, %v2763
        %v2860 = vpack.c.b16 %v2772, %v2768
        %v2861 = vpack.c.b16 %v2773, %v2769
        %v2862 = vpack.c.b16 %v2774, %v2770
        %v2863 = vpack.c.b16 %v2775, %v2771
        %v2864 = vpack.c.b16 %v2780, %v2776
        %v2865 = vpack.c.b16 %v2781, %v2777
        %v2866 = vpack.c.b16 %v2782, %v2778
        %v2867 = vpack.c.b16 %v2783, %v2779
        %v2868 = vpack.c.b16 %v2788, %v2784
        %v2869 = vpack.c.b16 %v2789, %v2785
        %v2870 = vpack.c.b16 %v2790, %v2786
        %v2871 = vpack.c.b16 %v2791, %v2787
        %v2872 = vpack.c.b16 %v2796, %v2792
        %v2873 = vpack.c.b16 %v2797, %v2793
        %v2874 = vpack.c.b16 %v2798, %v2794
        %v2875 = vpack.c.b16 %v2799, %v2795
        %v2876 = vpack.c.b16 %v2804, %v2800
        %v2877 = vpack.c.b16 %v2805, %v2801
        %v2878 = vpack.c.b16 %v2806, %v2802
        %v2879 = vpack.c.b16 %v2807, %v2803
        %v2880 = vpack.c.b16 %v2812, %v2808
        %v2881 = vpack.c.b16 %v2813, %v2809
        %v2882 = vpack.c.b16 %v2814, %v2810
        %v2883 = vpack.c.b16 %v2815, %v2811
        %v2884 = vpack.c.b16 %v2820, %v2816
        %v2885 = vpack.c.b16 %v2821, %v2817
        %v2886 = vpack.c.b16 %v2822, %v2818
        %v2887 = vpack.c.b16 %v2823, %v2819
        %2952 = vmatprep.subr.bf16.mxu0 %v2853
        %2953 = vmatpush1.bf16.msra.mxu0 %v2852
        %2954 = vmatprep.subr.bf16.mxu0 %v2849
        %2955 = vmatpush1.bf16.msra.mxu0 %v2848
        %2956 = vmatprep.subr.bf16.mxu0 %v2845
        %2957 = vmatpush1.bf16.msra.mxu0 %v2844
        %2958 = vmatprep.subr.bf16.mxu0 %v2841
        %2959 = vmatpush1.bf16.msra.mxu0 %v2840
        %2960 = vmatprep.subr.bf16.mxu0 %v2837
        %2961 = vmatpush1.bf16.msra.mxu0 %v2836
        %2962 = vmatprep.subr.bf16.mxu0 %v2833
        %2963 = vmatpush1.bf16.msra.mxu0 %v2832
        %2964 = vmatprep.subr.bf16.mxu0 %v2829
        %2965 = vmatpush1.bf16.msra.mxu0 %v2828
        %2966 = vmatprep.subr.bf16.mxu0 %v2825
        %2967 = vmatpush1.bf16.msra.mxu0 %v2824
        %2968 = vmatprep.subr.bf16.mxu0 %v2885
        %2969 = vmatpush2.bf16.msra.mxu0 %v2884
        %2970 = vmatprep.subr.bf16.mxu0 %v2881
        %2971 = vmatpush2.bf16.msra.mxu0 %v2880
        %2972 = vmatprep.subr.bf16.mxu0 %v2877
        %2973 = vmatpush2.bf16.msra.mxu0 %v2876
        %2974 = vmatprep.subr.bf16.mxu0 %v2873
        %2975 = vmatpush2.bf16.msra.mxu0 %v2872
        %2976 = vmatprep.subr.bf16.mxu0 %v2869
        %2977 = vmatpush2.bf16.msra.mxu0 %v2868
        %2978 = vmatprep.subr.bf16.mxu0 %v2865
        %2979 = vmatpush2.bf16.msra.mxu0 %v2864
        %2980 = vmatprep.subr.bf16.mxu0 %v2861
        %2981 = vmatpush2.bf16.msra.mxu0 %v2860
        %2982 = vmatprep.subr.bf16.mxu0 %v2857
        %2983 = vmatpush2.bf16.msra.mxu0 %v2856
        %2984 = vmatprep.mubr.bf16.mxu0 %v2543
        %2985 = vmatmul.mubr.bf16.gmra.mxu0 %v2542
        %v2986 = vpop.f32.mrf.mxu0
        %v2987 = vadd.f32 %v2615, %v2986
        %v2988 = vpop.f32.mrf.mxu0
        %v2989 = vadd.f32 %v2619, %v2988
        %v2990 = vpop.f32.mrf.mxu0
        %v2991 = vadd.f32 %v2615, %v2990
        %v2992 = vpop.f32.mrf.mxu0
        %v2993 = vadd.f32 %v2619, %v2992
        %2994 = vmatprep.mubr.bf16.mxu0 %v2545
        %2995 = vmatmul.mubr.bf16.gmra.mxu0 %v2544
        %v2996 = vpop.f32.mrf.mxu0
        %v2997 = vadd.f32 %v2615, %v2996
        %v2998 = vpop.f32.mrf.mxu0
        %v2999 = vadd.f32 %v2619, %v2998
        %v3000 = vpop.f32.mrf.mxu0
        %v3001 = vadd.f32 %v2615, %v3000
        %v3002 = vpop.f32.mrf.mxu0
        %v3003 = vadd.f32 %v2619, %v3002
        %3004 = vdwg.mxu0
        %3005 = vmatprep.subr.bf16.mxu0 %v2855
        %3006 = vmatpush1.bf16.msra.mxu0 %v2854
        %3007 = vmatprep.subr.bf16.mxu0 %v2851
        %3008 = vmatpush1.bf16.msra.mxu0 %v2850
        %3009 = vmatprep.subr.bf16.mxu0 %v2847
        %3010 = vmatpush1.bf16.msra.mxu0 %v2846
        %3011 = vmatprep.subr.bf16.mxu0 %v2843
        %3012 = vmatpush1.bf16.msra.mxu0 %v2842
        %3013 = vmatprep.subr.bf16.mxu0 %v2839
        %3014 = vmatpush1.bf16.msra.mxu0 %v2838
        %3015 = vmatprep.subr.bf16.mxu0 %v2835
        %3016 = vmatpush1.bf16.msra.mxu0 %v2834
        %3017 = vmatprep.subr.bf16.mxu0 %v2831
        %3018 = vmatpush1.bf16.msra.mxu0 %v2830
        %3019 = vmatprep.subr.bf16.mxu0 %v2827
        %3020 = vmatpush1.bf16.msra.mxu0 %v2826
        %3021 = vmatprep.subr.bf16.mxu0 %v2887
        %3022 = vmatpush2.bf16.msra.mxu0 %v2886
        %3023 = vmatprep.subr.bf16.mxu0 %v2883
        %3024 = vmatpush2.bf16.msra.mxu0 %v2882
        %3025 = vmatprep.subr.bf16.mxu0 %v2879
        %3026 = vmatpush2.bf16.msra.mxu0 %v2878
        %3027 = vmatprep.subr.bf16.mxu0 %v2875
        %3028 = vmatpush2.bf16.msra.mxu0 %v2874
        %3029 = vmatprep.subr.bf16.mxu0 %v2871
        %3030 = vmatpush2.bf16.msra.mxu0 %v2870
        %3031 = vmatprep.subr.bf16.mxu0 %v2867
        %3032 = vmatpush2.bf16.msra.mxu0 %v2866
        %3033 = vmatprep.subr.bf16.mxu0 %v2863
        %3034 = vmatpush2.bf16.msra.mxu0 %v2862
        %3035 = vmatprep.subr.bf16.mxu0 %v2859
        %3036 = vmatpush2.bf16.msra.mxu0 %v2858
        %3037 = vmatprep.mubr.bf16.mxu0 %v2543
        %3038 = vmatmul.mubr.bf16.gmra.mxu0 %v2542
        %v3039 = vpop.f32.mrf.mxu0
        %v3040 = vadd.f32 %v2623, %v3039
        %v3041 = vpop.f32.mrf.mxu0
        %v3042 = vadd.f32 %v2627, %v3041
        %v3043 = vpop.f32.mrf.mxu0
        %v3044 = vadd.f32 %v2623, %v3043
        %v3045 = vpop.f32.mrf.mxu0
        %v3046 = vadd.f32 %v2627, %v3045
        %3047 = vmatprep.mubr.bf16.mxu0 %v2545
        %3048 = vmatmul.mubr.bf16.gmra.mxu0 %v2544
        %v3049 = vpop.f32.mrf.mxu0
        %v3050 = vadd.f32 %v2623, %v3049
        %v3051 = vpop.f32.mrf.mxu0
        %v3052 = vadd.f32 %v2627, %v3051
        %v3053 = vpop.f32.mrf.mxu0
        %v3054 = vadd.f32 %v2623, %v3053
        %v3055 = vpop.f32.mrf.mxu0
        %v3056 = vadd.f32 %v2627, %v3055
        %3057 = vdwg.mxu0
        %v3058 = vmul.f32 %v2987, %v2987
        %v3059 = vmul.f32 %v2989, %v2989
        %v3060 = vmul.f32 %v3040, %v3040
        %v3061 = vmul.f32 %v3042, %v3042
        %v3062 = vmul.f32 %v2991, %v2991
        %v3063 = vmul.f32 %v2993, %v2993
        %v3064 = vmul.f32 %v3044, %v3044
        %v3065 = vmul.f32 %v3046, %v3046
        %v3066 = vmul.f32 %v2997, %v2997
        %v3067 = vmul.f32 %v2999, %v2999
        %v3068 = vmul.f32 %v3050, %v3050
        %v3069 = vmul.f32 %v3052, %v3052
        %v3070 = vmul.f32 %v3001, %v3001
        %v3071 = vmul.f32 %v3003, %v3003
        %v3072 = vmul.f32 %v3054, %v3054
        %v3073 = vmul.f32 %v3056, %v3056
        %v3074 = vmul.f32 %v2987, %v3058
        %v3075 = vmul.f32 %v2989, %v3059
        %v3076 = vmul.f32 %v3040, %v3060
        %v3077 = vmul.f32 %v3042, %v3061
        %v3078 = vmul.f32 %v2991, %v3062
        %v3079 = vmul.f32 %v2993, %v3063
        %v3080 = vmul.f32 %v3044, %v3064
        %v3081 = vmul.f32 %v3046, %v3065
        %v3082 = vmul.f32 %v2997, %v3066
        %v3083 = vmul.f32 %v2999, %v3067
        %v3084 = vmul.f32 %v3050, %v3068
        %v3085 = vmul.f32 %v3052, %v3069
        %v3086 = vmul.f32 %v3001, %v3070
        %v3087 = vmul.f32 %v3003, %v3071
        %v3088 = vmul.f32 %v3054, %v3072
        %v3089 = vmul.f32 %v3056, %v3073
        %v3090 = vmul.f32 %v3074, 0.044715
        %v3091 = vmul.f32 %v3075, 0.044715
        %v3092 = vmul.f32 %v3076, 0.044715
        %v3093 = vmul.f32 %v3077, 0.044715
        %v3094 = vmul.f32 %v3078, 0.044715
        %v3095 = vmul.f32 %v3079, 0.044715
        %v3096 = vmul.f32 %v3080, 0.044715
        %v3097 = vmul.f32 %v3081, 0.044715
        %v3098 = vmul.f32 %v3082, 0.044715
        %v3099 = vmul.f32 %v3083, 0.044715
        %v3100 = vmul.f32 %v3084, 0.044715
        %v3101 = vmul.f32 %v3085, 0.044715
        %v3102 = vmul.f32 %v3086, 0.044715
        %v3103 = vmul.f32 %v3087, 0.044715
        %v3104 = vmul.f32 %v3088, 0.044715
        %v3105 = vmul.f32 %v3089, 0.044715
        %v3106 = vadd.f32 %v2987, %v3090
        %v3107 = vadd.f32 %v2989, %v3091
        %v3108 = vadd.f32 %v3040, %v3092
        %v3109 = vadd.f32 %v3042, %v3093
        %v3110 = vadd.f32 %v2991, %v3094
        %v3111 = vadd.f32 %v2993, %v3095
        %v3112 = vadd.f32 %v3044, %v3096
        %v3113 = vadd.f32 %v3046, %v3097
        %v3114 = vadd.f32 %v2997, %v3098
        %v3115 = vadd.f32 %v2999, %v3099
        %v3116 = vadd.f32 %v3050, %v3100
        %v3117 = vadd.f32 %v3052, %v3101
        %v3118 = vadd.f32 %v3001, %v3102
        %v3119 = vadd.f32 %v3003, %v3103
        %v3120 = vadd.f32 %v3054, %v3104
        %v3121 = vadd.f32 %v3056, %v3105
        %v3122 = vmul.f32 %v3106, 0.7978846
        %v3123 = vmul.f32 %v3107, 0.7978846
        %v3124 = vmul.f32 %v3108, 0.7978846
        %v3125 = vmul.f32 %v3109, 0.7978846
        %v3126 = vmul.f32 %v3110, 0.7978846
        %v3127 = vmul.f32 %v3111, 0.7978846
        %v3128 = vmul.f32 %v3112, 0.7978846
        %v3129 = vmul.f32 %v3113, 0.7978846
        %v3130 = vmul.f32 %v3114, 0.7978846
        %v3131 = vmul.f32 %v3115, 0.7978846
        %v3132 = vmul.f32 %v3116, 0.7978846
        %v3133 = vmul.f32 %v3117, 0.7978846
        %v3134 = vmul.f32 %v3118, 0.7978846
        %v3135 = vmul.f32 %v3119, 0.7978846
        %v3136 = vmul.f32 %v3120, 0.7978846
        %v3137 = vmul.f32 %v3121, 0.7978846
        %v3138 = vtanh.pop %v3122
        %v3139 = vtanh.pop %v3123
        %v3140 = vtanh.pop %v3124
        %v3141 = vtanh.pop %v3125
        %v3142 = vtanh.pop %v3126
        %v3143 = vtanh.pop %v3127
        %v3144 = vtanh.pop %v3128
        %v3145 = vtanh.pop %v3129
        %v3146 = vtanh.pop %v3130
        %v3147 = vtanh.pop %v3131
        %v3148 = vtanh.pop %v3132
        %v3149 = vtanh.pop %v3133
        %v3150 = vtanh.pop %v3134
        %v3151 = vtanh.pop %v3135
        %v3152 = vtanh.pop %v3136
        %v3153 = vtanh.pop %v3137
        %v3154 = vadd.f32 %v3138, 1.0
        %v3155 = vadd.f32 %v3139, 1.0
        %v3156 = vadd.f32 %v3140, 1.0
        %v3157 = vadd.f32 %v3141, 1.0
        %v3158 = vadd.f32 %v3142, 1.0
        %v3159 = vadd.f32 %v3143, 1.0
        %v3160 = vadd.f32 %v3144, 1.0
        %v3161 = vadd.f32 %v3145, 1.0
        %v3162 = vadd.f32 %v3146, 1.0
        %v3163 = vadd.f32 %v3147, 1.0
        %v3164 = vadd.f32 %v3148, 1.0
        %v3165 = vadd.f32 %v3149, 1.0
        %v3166 = vadd.f32 %v3150, 1.0
        %v3167 = vadd.f32 %v3151, 1.0
        %v3168 = vadd.f32 %v3152, 1.0
        %v3169 = vadd.f32 %v3153, 1.0
        %v3170 = vmul.f32 %v3154, 0.5
        %v3171 = vmul.f32 %v3155, 0.5
        %v3172 = vmul.f32 %v3156, 0.5
        %v3173 = vmul.f32 %v3157, 0.5
        %v3174 = vmul.f32 %v3158, 0.5
        %v3175 = vmul.f32 %v3159, 0.5
        %v3176 = vmul.f32 %v3160, 0.5
        %v3177 = vmul.f32 %v3161, 0.5
        %v3178 = vmul.f32 %v3162, 0.5
        %v3179 = vmul.f32 %v3163, 0.5
        %v3180 = vmul.f32 %v3164, 0.5
        %v3181 = vmul.f32 %v3165, 0.5
        %v3182 = vmul.f32 %v3166, 0.5
        %v3183 = vmul.f32 %v3167, 0.5
        %v3184 = vmul.f32 %v3168, 0.5
        %v3185 = vmul.f32 %v3169, 0.5
        %v3186 = vmul.f32 %v2987, %v3170
        %v3187 = vmul.f32 %v2989, %v3171
        %v3188 = vmul.f32 %v3040, %v3172
        %v3189 = vmul.f32 %v3042, %v3173
        %v3190 = vmul.f32 %v2991, %v3174
        %v3191 = vmul.f32 %v2993, %v3175
        %v3192 = vmul.f32 %v3044, %v3176
        %v3193 = vmul.f32 %v3046, %v3177
        %v3194 = vmul.f32 %v2997, %v3178
        %v3195 = vmul.f32 %v2999, %v3179
        %v3196 = vmul.f32 %v3050, %v3180
        %v3197 = vmul.f32 %v3052, %v3181
        %v3198 = vmul.f32 %v3001, %v3182
        %v3199 = vmul.f32 %v3003, %v3183
        %v3200 = vmul.f32 %v3054, %v3184
        %v3201 = vmul.f32 %v3056, %v3185
        %v3202 = vpack.c.bf16 %v3190, %v3186
        %v3203 = vpack.c.bf16 %v3191, %v3187
        %v3204 = vpack.c.bf16 %v3192, %v3188
        %v3205 = vpack.c.bf16 %v3193, %v3189
        %v3206 = vpack.c.bf16 %v3198, %v3194
        %v3207 = vpack.c.bf16 %v3199, %v3195
        %v3208 = vpack.c.bf16 %v3200, %v3196
        %v3209 = vpack.c.bf16 %v3201, %v3197
        %v3210 = vld [vmem:[%s733] sm:$0xff]
        %v3211 = vld [vmem:[%s733 + $0x8] sm:$0xff]
        %v3212 = vld [vmem:[%s733 + $0x10] sm:$0xff]
        %v3213 = vld [vmem:[%s733 + $0x18] sm:$0xff]
        %v3214 = vld [vmem:[%s733 + $0x20] sm:$0xff]
        %v3215 = vld [vmem:[%s733 + $0x28] sm:$0xff]
        %v3216 = vld [vmem:[%s733 + $0x30] sm:$0xff]
        %v3217 = vld [vmem:[%s733 + $0x38] sm:$0xff]
        %v3218 = vld [vmem:[%s733 + $0x40] sm:$0xff]
        %v3219 = vld [vmem:[%s733 + $0x48] sm:$0xff]
        %v3220 = vld [vmem:[%s733 + $0x50] sm:$0xff]
        %v3221 = vld [vmem:[%s733 + $0x58] sm:$0xff]
        %v3222 = vld [vmem:[%s733 + $0x60] sm:$0xff]
        %v3223 = vld [vmem:[%s733 + $0x68] sm:$0xff]
        %v3224 = vld [vmem:[%s733 + $0x70] sm:$0xff]
        %v3225 = vld [vmem:[%s733 + $0x78] sm:$0xff]
        %v3226 = vld [vmem:[%s733 + $0x80] sm:$0xff]
        %v3227 = vld [vmem:[%s733 + $0x88] sm:$0xff]
        %v3228 = vld [vmem:[%s733 + $0x90] sm:$0xff]
        %v3229 = vld [vmem:[%s733 + $0x98] sm:$0xff]
        %v3230 = vld [vmem:[%s733 + $0xa0] sm:$0xff]
        %v3231 = vld [vmem:[%s733 + $0xa8] sm:$0xff]
        %v3232 = vld [vmem:[%s733 + $0xb0] sm:$0xff]
        %v3233 = vld [vmem:[%s733 + $0xb8] sm:$0xff]
        %v3234 = vld [vmem:[%s733 + $0xc0] sm:$0xff]
        %v3235 = vld [vmem:[%s733 + $0xc8] sm:$0xff]
        %v3236 = vld [vmem:[%s733 + $0xd0] sm:$0xff]
        %v3237 = vld [vmem:[%s733 + $0xd8] sm:$0xff]
        %v3238 = vld [vmem:[%s733 + $0xe0] sm:$0xff]
        %v3239 = vld [vmem:[%s733 + $0xe8] sm:$0xff]
        %v3240 = vld [vmem:[%s733 + $0xf0] sm:$0xff]
        %v3241 = vld [vmem:[%s733 + $0xf8] sm:$0xff]
        %v3242 = vld [vmem:[%s733 + $0x100] sm:$0xff]
        %v3243 = vld [vmem:[%s733 + $0x108] sm:$0xff]
        %v3244 = vld [vmem:[%s733 + $0x110] sm:$0xff]
        %v3245 = vld [vmem:[%s733 + $0x118] sm:$0xff]
        %v3246 = vld [vmem:[%s733 + $0x120] sm:$0xff]
        %v3247 = vld [vmem:[%s733 + $0x128] sm:$0xff]
        %v3248 = vld [vmem:[%s733 + $0x130] sm:$0xff]
        %v3249 = vld [vmem:[%s733 + $0x138] sm:$0xff]
        %v3250 = vld [vmem:[%s733 + $0x140] sm:$0xff]
        %v3251 = vld [vmem:[%s733 + $0x148] sm:$0xff]
        %v3252 = vld [vmem:[%s733 + $0x150] sm:$0xff]
        %v3253 = vld [vmem:[%s733 + $0x158] sm:$0xff]
        %v3254 = vld [vmem:[%s733 + $0x160] sm:$0xff]
        %v3255 = vld [vmem:[%s733 + $0x168] sm:$0xff]
        %v3256 = vld [vmem:[%s733 + $0x170] sm:$0xff]
        %v3257 = vld [vmem:[%s733 + $0x178] sm:$0xff]
        %v3258 = vld [vmem:[%s733 + $0x180] sm:$0xff]
        %v3259 = vld [vmem:[%s733 + $0x188] sm:$0xff]
        %v3260 = vld [vmem:[%s733 + $0x190] sm:$0xff]
        %v3261 = vld [vmem:[%s733 + $0x198] sm:$0xff]
        %v3262 = vld [vmem:[%s733 + $0x1a0] sm:$0xff]
        %v3263 = vld [vmem:[%s733 + $0x1a8] sm:$0xff]
        %v3264 = vld [vmem:[%s733 + $0x1b0] sm:$0xff]
        %v3265 = vld [vmem:[%s733 + $0x1b8] sm:$0xff]
        %v3266 = vld [vmem:[%s733 + $0x1c0] sm:$0xff]
        %v3267 = vld [vmem:[%s733 + $0x1c8] sm:$0xff]
        %v3268 = vld [vmem:[%s733 + $0x1d0] sm:$0xff]
        %v3269 = vld [vmem:[%s733 + $0x1d8] sm:$0xff]
        %v3270 = vld [vmem:[%s733 + $0x1e0] sm:$0xff]
        %v3271 = vld [vmem:[%s733 + $0x1e8] sm:$0xff]
        %v3272 = vld [vmem:[%s733 + $0x1f0] sm:$0xff]
        %v3273 = vld [vmem:[%s733 + $0x1f8] sm:$0xff]
        %v3274 = vld [vmem:[%s860] sm:$0x3]
        %v3276 = vlaneseq
        %v3277 = vshrl.u32 %v3276, 7
        %v3278 = vsub.s32 0, %v3277
        %v3279 = vrot.slane %v3274, %v3278
        %v3280 = vlaneseq
        %v3281 = vshrl.u32 %v3280, 7
        %v3282 = vsub.s32 1, %v3281
        %v3283 = vrot.slane %v3274, %v3282
        %v3350 = vunpack.c.l.b16 %v3210
        %v3351 = vunpack.c.h.b16 %v3210
        %v3352 = vunpack.c.l.b16 %v3211
        %v3353 = vunpack.c.h.b16 %v3211
        %v3354 = vunpack.c.l.b16 %v3212
        %v3355 = vunpack.c.h.b16 %v3212
        %v3356 = vunpack.c.l.b16 %v3213
        %v3357 = vunpack.c.h.b16 %v3213
        %v3358 = vunpack.c.l.b16 %v3214
        %v3359 = vunpack.c.h.b16 %v3214
        %v3360 = vunpack.c.l.b16 %v3215
        %v3361 = vunpack.c.h.b16 %v3215
        %v3362 = vunpack.c.l.b16 %v3216
        %v3363 = vunpack.c.h.b16 %v3216
        %v3364 = vunpack.c.l.b16 %v3217
        %v3365 = vunpack.c.h.b16 %v3217
        %v3366 = vunpack.c.l.b16 %v3218
        %v3367 = vunpack.c.h.b16 %v3218
        %v3368 = vunpack.c.l.b16 %v3219
        %v3369 = vunpack.c.h.b16 %v3219
        %v3370 = vunpack.c.l.b16 %v3220
        %v3371 = vunpack.c.h.b16 %v3220
        %v3372 = vunpack.c.l.b16 %v3221
        %v3373 = vunpack.c.h.b16 %v3221
        %v3374 = vunpack.c.l.b16 %v3222
        %v3375 = vunpack.c.h.b16 %v3222
        %v3376 = vunpack.c.l.b16 %v3223
        %v3377 = vunpack.c.h.b16 %v3223
        %v3378 = vunpack.c.l.b16 %v3224
        %v3379 = vunpack.c.h.b16 %v3224
        %v3380 = vunpack.c.l.b16 %v3225
        %v3381 = vunpack.c.h.b16 %v3225
        %v3382 = vunpack.c.l.b16 %v3226
        %v3383 = vunpack.c.h.b16 %v3226
        %v3384 = vunpack.c.l.b16 %v3227
        %v3385 = vunpack.c.h.b16 %v3227
        %v3386 = vunpack.c.l.b16 %v3228
        %v3387 = vunpack.c.h.b16 %v3228
        %v3388 = vunpack.c.l.b16 %v3229
        %v3389 = vunpack.c.h.b16 %v3229
        %v3390 = vunpack.c.l.b16 %v3230
        %v3391 = vunpack.c.h.b16 %v3230
        %v3392 = vunpack.c.l.b16 %v3231
        %v3393 = vunpack.c.h.b16 %v3231
        %v3394 = vunpack.c.l.b16 %v3232
        %v3395 = vunpack.c.h.b16 %v3232
        %v3396 = vunpack.c.l.b16 %v3233
        %v3397 = vunpack.c.h.b16 %v3233
        %v3398 = vunpack.c.l.b16 %v3234
        %v3399 = vunpack.c.h.b16 %v3234
        %v3400 = vunpack.c.l.b16 %v3235
        %v3401 = vunpack.c.h.b16 %v3235
        %v3402 = vunpack.c.l.b16 %v3236
        %v3403 = vunpack.c.h.b16 %v3236
        %v3404 = vunpack.c.l.b16 %v3237
        %v3405 = vunpack.c.h.b16 %v3237
        %v3406 = vunpack.c.l.b16 %v3238
        %v3407 = vunpack.c.h.b16 %v3238
        %v3408 = vunpack.c.l.b16 %v3239
        %v3409 = vunpack.c.h.b16 %v3239
        %v3410 = vunpack.c.l.b16 %v3240
        %v3411 = vunpack.c.h.b16 %v3240
        %v3412 = vunpack.c.l.b16 %v3241
        %v3413 = vunpack.c.h.b16 %v3241
        %v3414 = vunpack.c.l.b16 %v3242
        %v3415 = vunpack.c.h.b16 %v3242
        %v3416 = vunpack.c.l.b16 %v3243
        %v3417 = vunpack.c.h.b16 %v3243
        %v3418 = vunpack.c.l.b16 %v3244
        %v3419 = vunpack.c.h.b16 %v3244
        %v3420 = vunpack.c.l.b16 %v3245
        %v3421 = vunpack.c.h.b16 %v3245
        %v3422 = vunpack.c.l.b16 %v3246
        %v3423 = vunpack.c.h.b16 %v3246
        %v3424 = vunpack.c.l.b16 %v3247
        %v3425 = vunpack.c.h.b16 %v3247
        %v3426 = vunpack.c.l.b16 %v3248
        %v3427 = vunpack.c.h.b16 %v3248
        %v3428 = vunpack.c.l.b16 %v3249
        %v3429 = vunpack.c.h.b16 %v3249
        %v3430 = vunpack.c.l.b16 %v3250
        %v3431 = vunpack.c.h.b16 %v3250
        %v3432 = vunpack.c.l.b16 %v3251
        %v3433 = vunpack.c.h.b16 %v3251
        %v3434 = vunpack.c.l.b16 %v3252
        %v3435 = vunpack.c.h.b16 %v3252
        %v3436 = vunpack.c.l.b16 %v3253
        %v3437 = vunpack.c.h.b16 %v3253
        %v3438 = vunpack.c.l.b16 %v3254
        %v3439 = vunpack.c.h.b16 %v3254
        %v3440 = vunpack.c.l.b16 %v3255
        %v3441 = vunpack.c.h.b16 %v3255
        %v3442 = vunpack.c.l.b16 %v3256
        %v3443 = vunpack.c.h.b16 %v3256
        %v3444 = vunpack.c.l.b16 %v3257
        %v3445 = vunpack.c.h.b16 %v3257
        %v3446 = vunpack.c.l.b16 %v3258
        %v3447 = vunpack.c.h.b16 %v3258
        %v3448 = vunpack.c.l.b16 %v3259
        %v3449 = vunpack.c.h.b16 %v3259
        %v3450 = vunpack.c.l.b16 %v3260
        %v3451 = vunpack.c.h.b16 %v3260
        %v3452 = vunpack.c.l.b16 %v3261
        %v3453 = vunpack.c.h.b16 %v3261
        %v3454 = vunpack.c.l.b16 %v3262
        %v3455 = vunpack.c.h.b16 %v3262
        %v3456 = vunpack.c.l.b16 %v3263
        %v3457 = vunpack.c.h.b16 %v3263
        %v3458 = vunpack.c.l.b16 %v3264
        %v3459 = vunpack.c.h.b16 %v3264
        %v3460 = vunpack.c.l.b16 %v3265
        %v3461 = vunpack.c.h.b16 %v3265
        %v3462 = vunpack.c.l.b16 %v3266
        %v3463 = vunpack.c.h.b16 %v3266
        %v3464 = vunpack.c.l.b16 %v3267
        %v3465 = vunpack.c.h.b16 %v3267
        %v3466 = vunpack.c.l.b16 %v3268
        %v3467 = vunpack.c.h.b16 %v3268
        %v3468 = vunpack.c.l.b16 %v3269
        %v3469 = vunpack.c.h.b16 %v3269
        %v3470 = vunpack.c.l.b16 %v3270
        %v3471 = vunpack.c.h.b16 %v3270
        %v3472 = vunpack.c.l.b16 %v3271
        %v3473 = vunpack.c.h.b16 %v3271
        %v3474 = vunpack.c.l.b16 %v3272
        %v3475 = vunpack.c.h.b16 %v3272
        %v3476 = vunpack.c.l.b16 %v3273
        %v3477 = vunpack.c.h.b16 %v3273
        %v3478 = vpack.c.b16 %v3352, %v3350
        %v3479 = vpack.c.b16 %v3353, %v3351
        %v3480 = vpack.c.b16 %v3356, %v3354
        %v3481 = vpack.c.b16 %v3357, %v3355
        %v3482 = vpack.c.b16 %v3360, %v3358
        %v3483 = vpack.c.b16 %v3361, %v3359
        %v3484 = vpack.c.b16 %v3364, %v3362
        %v3485 = vpack.c.b16 %v3365, %v3363
        %v3486 = vpack.c.b16 %v3368, %v3366
        %v3487 = vpack.c.b16 %v3369, %v3367
        %v3488 = vpack.c.b16 %v3372, %v3370
        %v3489 = vpack.c.b16 %v3373, %v3371
        %v3490 = vpack.c.b16 %v3376, %v3374
        %v3491 = vpack.c.b16 %v3377, %v3375
        %v3492 = vpack.c.b16 %v3380, %v3378
        %v3493 = vpack.c.b16 %v3381, %v3379
        %v3494 = vpack.c.b16 %v3384, %v3382
        %v3495 = vpack.c.b16 %v3385, %v3383
        %v3496 = vpack.c.b16 %v3388, %v3386
        %v3497 = vpack.c.b16 %v3389, %v3387
        %v3498 = vpack.c.b16 %v3392, %v3390
        %v3499 = vpack.c.b16 %v3393, %v3391
        %v3500 = vpack.c.b16 %v3396, %v3394
        %v3501 = vpack.c.b16 %v3397, %v3395
        %v3502 = vpack.c.b16 %v3400, %v3398
        %v3503 = vpack.c.b16 %v3401, %v3399
        %v3504 = vpack.c.b16 %v3404, %v3402
        %v3505 = vpack.c.b16 %v3405, %v3403
        %v3506 = vpack.c.b16 %v3408, %v3406
        %v3507 = vpack.c.b16 %v3409, %v3407
        %v3508 = vpack.c.b16 %v3412, %v3410
        %v3509 = vpack.c.b16 %v3413, %v3411
        %v3510 = vpack.c.b16 %v3416, %v3414
        %v3511 = vpack.c.b16 %v3417, %v3415
        %v3512 = vpack.c.b16 %v3420, %v3418
        %v3513 = vpack.c.b16 %v3421, %v3419
        %v3514 = vpack.c.b16 %v3424, %v3422
        %v3515 = vpack.c.b16 %v3425, %v3423
        %v3516 = vpack.c.b16 %v3428, %v3426
        %v3517 = vpack.c.b16 %v3429, %v3427
        %v3518 = vpack.c.b16 %v3432, %v3430
        %v3519 = vpack.c.b16 %v3433, %v3431
        %v3520 = vpack.c.b16 %v3436, %v3434
        %v3521 = vpack.c.b16 %v3437, %v3435
        %v3522 = vpack.c.b16 %v3440, %v3438
        %v3523 = vpack.c.b16 %v3441, %v3439
        %v3524 = vpack.c.b16 %v3444, %v3442
        %v3525 = vpack.c.b16 %v3445, %v3443
        %v3526 = vpack.c.b16 %v3448, %v3446
        %v3527 = vpack.c.b16 %v3449, %v3447
        %v3528 = vpack.c.b16 %v3452, %v3450
        %v3529 = vpack.c.b16 %v3453, %v3451
        %v3530 = vpack.c.b16 %v3456, %v3454
        %v3531 = vpack.c.b16 %v3457, %v3455
        %v3532 = vpack.c.b16 %v3460, %v3458
        %v3533 = vpack.c.b16 %v3461, %v3459
        %v3534 = vpack.c.b16 %v3464, %v3462
        %v3535 = vpack.c.b16 %v3465, %v3463
        %v3536 = vpack.c.b16 %v3468, %v3466
        %v3537 = vpack.c.b16 %v3469, %v3467
        %v3538 = vpack.c.b16 %v3472, %v3470
        %v3539 = vpack.c.b16 %v3473, %v3471
        %v3540 = vpack.c.b16 %v3476, %v3474
        %v3541 = vpack.c.b16 %v3477, %v3475
        %3606 = vmatprep.subr.bf16.mxu0 %v3493
        %3607 = vmatpush1.bf16.msra.mxu0 %v3492
        %3608 = vmatprep.subr.bf16.mxu0 %v3491
        %3609 = vmatpush1.bf16.msra.mxu0 %v3490
        %3610 = vmatprep.subr.bf16.mxu0 %v3489
        %3611 = vmatpush1.bf16.msra.mxu0 %v3488
        %3612 = vmatprep.subr.bf16.mxu0 %v3487
        %3613 = vmatpush1.bf16.msra.mxu0 %v3486
        %3614 = vmatprep.subr.bf16.mxu0 %v3485
        %3615 = vmatpush1.bf16.msra.mxu0 %v3484
        %3616 = vmatprep.subr.bf16.mxu0 %v3483
        %3617 = vmatpush1.bf16.msra.mxu0 %v3482
        %3618 = vmatprep.subr.bf16.mxu0 %v3481
        %3619 = vmatpush1.bf16.msra.mxu0 %v3480
        %3620 = vmatprep.subr.bf16.mxu0 %v3479
        %3621 = vmatpush1.bf16.msra.mxu0 %v3478
        %3622 = vmatprep.subr.bf16.mxu0 %v3509
        %3623 = vmatpush2.bf16.msra.mxu0 %v3508
        %3624 = vmatprep.subr.bf16.mxu0 %v3507
        %3625 = vmatpush2.bf16.msra.mxu0 %v3506
        %3626 = vmatprep.subr.bf16.mxu0 %v3505
        %3627 = vmatpush2.bf16.msra.mxu0 %v3504
        %3628 = vmatprep.subr.bf16.mxu0 %v3503
        %3629 = vmatpush2.bf16.msra.mxu0 %v3502
        %3630 = vmatprep.subr.bf16.mxu0 %v3501
        %3631 = vmatpush2.bf16.msra.mxu0 %v3500
        %3632 = vmatprep.subr.bf16.mxu0 %v3499
        %3633 = vmatpush2.bf16.msra.mxu0 %v3498
        %3634 = vmatprep.subr.bf16.mxu0 %v3497
        %3635 = vmatpush2.bf16.msra.mxu0 %v3496
        %3636 = vmatprep.subr.bf16.mxu0 %v3495
        %3637 = vmatpush2.bf16.msra.mxu0 %v3494
        %3638 = vmatprep.mubr.bf16.mxu0 %v3203
        %3639 = vmatmul.mubr.bf16.gmra.mxu0 %v3202
        %v3640 = vpop.f32.mrf.mxu0
        %v3641 = vadd.f32 %v3279, %v3640
        %v3642 = vpop.f32.mrf.mxu0
        %v3643 = vadd.f32 %v3283, %v3642
        %v3644 = vpop.f32.mrf.mxu0
        %v3645 = vadd.f32 %v3279, %v3644
        %v3646 = vpop.f32.mrf.mxu0
        %v3647 = vadd.f32 %v3283, %v3646
        %3648 = vmatprep.mubr.bf16.mxu0 %v3207
        %3649 = vmatmul.mubr.bf16.gmra.mxu0 %v3206
        %v3650 = vpop.f32.mrf.mxu0
        %v3651 = vadd.f32 %v3279, %v3650
        %v3652 = vpop.f32.mrf.mxu0
        %v3653 = vadd.f32 %v3283, %v3652
        %v3654 = vpop.f32.mrf.mxu0
        %v3655 = vadd.f32 %v3279, %v3654
        %v3656 = vpop.f32.mrf.mxu0
        %v3657 = vadd.f32 %v3283, %v3656
        %3658 = vdwg.mxu0
        %3659 = vmatprep.subr.bf16.mxu0 %v3525
        %3660 = vmatpush1.bf16.msra.mxu0 %v3524
        %3661 = vmatprep.subr.bf16.mxu0 %v3523
        %3662 = vmatpush1.bf16.msra.mxu0 %v3522
        %3663 = vmatprep.subr.bf16.mxu0 %v3521
        %3664 = vmatpush1.bf16.msra.mxu0 %v3520
        %3665 = vmatprep.subr.bf16.mxu0 %v3519
        %3666 = vmatpush1.bf16.msra.mxu0 %v3518
        %3667 = vmatprep.subr.bf16.mxu0 %v3517
        %3668 = vmatpush1.bf16.msra.mxu0 %v3516
        %3669 = vmatprep.subr.bf16.mxu0 %v3515
        %3670 = vmatpush1.bf16.msra.mxu0 %v3514
        %3671 = vmatprep.subr.bf16.mxu0 %v3513
        %3672 = vmatpush1.bf16.msra.mxu0 %v3512
        %3673 = vmatprep.subr.bf16.mxu0 %v3511
        %3674 = vmatpush1.bf16.msra.mxu0 %v3510
        %3675 = vmatprep.subr.bf16.mxu0 %v3541
        %3676 = vmatpush2.bf16.msra.mxu0 %v3540
        %3677 = vmatprep.subr.bf16.mxu0 %v3539
        %3678 = vmatpush2.bf16.msra.mxu0 %v3538
        %3679 = vmatprep.subr.bf16.mxu0 %v3537
        %3680 = vmatpush2.bf16.msra.mxu0 %v3536
        %3681 = vmatprep.subr.bf16.mxu0 %v3535
        %3682 = vmatpush2.bf16.msra.mxu0 %v3534
        %3683 = vmatprep.subr.bf16.mxu0 %v3533
        %3684 = vmatpush2.bf16.msra.mxu0 %v3532
        %3685 = vmatprep.subr.bf16.mxu0 %v3531
        %3686 = vmatpush2.bf16.msra.mxu0 %v3530
        %3687 = vmatprep.subr.bf16.mxu0 %v3529
        %3688 = vmatpush2.bf16.msra.mxu0 %v3528
        %3689 = vmatprep.subr.bf16.mxu0 %v3527
        %3690 = vmatpush2.bf16.msra.mxu0 %v3526
        %3691 = vmatprep.mubr.bf16.mxu0 %v3205
        %3692 = vmatmul.mubr.bf16.gmra.mxu0 %v3204
        %v3693 = vpop.f32.mrf.mxu0
        %v3694 = vadd.f32 %v3641, %v3693
        %v3695 = vpop.f32.mrf.mxu0
        %v3696 = vadd.f32 %v3643, %v3695
        %v3697 = vpop.f32.mrf.mxu0
        %v3698 = vadd.f32 %v3645, %v3697
        %v3699 = vpop.f32.mrf.mxu0
        %v3700 = vadd.f32 %v3647, %v3699
        %3701 = vmatprep.mubr.bf16.mxu0 %v3209
        %3702 = vmatmul.mubr.bf16.gmra.mxu0 %v3208
        %v3703 = vpop.f32.mrf.mxu0
        %v3704 = vadd.f32 %v3651, %v3703
        %v3705 = vpop.f32.mrf.mxu0
        %v3706 = vadd.f32 %v3653, %v3705
        %v3707 = vpop.f32.mrf.mxu0
        %v3708 = vadd.f32 %v3655, %v3707
        %v3709 = vpop.f32.mrf.mxu0
        %v3710 = vadd.f32 %v3657, %v3709
        %3711 = vdwg.mxu0
        %v3712 = vadd.f32 %v3694, %v2534
        %v3713 = vadd.f32 %v3696, %v2535
        %v3714 = vadd.f32 %v3698, %v2536
        %v3715 = vadd.f32 %v3700, %v2537
        %v3716 = vadd.f32 %v3704, %v2538
        %v3717 = vadd.f32 %v3706, %v2539
        %v3718 = vadd.f32 %v3708, %v2540
        %v3719 = vadd.f32 %v3710, %v2541
        %v3720 = vld [vmem:[%s864] sm:$0x3]
        %v3721 = vld [vmem:[%s868] sm:$0x3]
        %v3722 = vadd.f32 %v3712, %v3713
        %3723 = vadd.xlane.f32.xlu0 %v3722
        %v3724 = vpop.xlane.xlu0 %3723
        %v3725 = vadd.f32 %v3714, %v3715
        %3726 = vadd.xlane.f32.xlu0 %v3725
        %v3727 = vpop.xlane.xlu0 %3726
        %v3728 = vadd.f32 %v3716, %v3717
        %3729 = vadd.xlane.f32.xlu0 %v3728
        %v3730 = vpop.xlane.xlu0 %3729
        %v3731 = vadd.f32 %v3718, %v3719
        %3732 = vadd.xlane.f32.xlu0 %v3731
        %v3733 = vpop.xlane.xlu0 %3732
        %v3734 = vmul.f32 %v3724, %v2451
        %v3735 = vmul.f32 %v3727, %v2451
        %v3736 = vmul.f32 %v3730, %v2451
        %v3737 = vmul.f32 %v3733, %v2451
        %v3738 = vsub.f32 %v3712, %v3734
        %v3739 = vsub.f32 %v3713, %v3734
        %v3740 = vsub.f32 %v3714, %v3735
        %v3741 = vsub.f32 %v3715, %v3735
        %v3742 = vsub.f32 %v3716, %v3736
        %v3743 = vsub.f32 %v3717, %v3736
        %v3744 = vsub.f32 %v3718, %v3737
        %v3745 = vsub.f32 %v3719, %v3737
        %v3746 = vmul.f32 %v3738, %v3738
        %v3747 = vmul.f32 %v3739, %v3739
        %v3748 = vmul.f32 %v3740, %v3740
        %v3749 = vmul.f32 %v3741, %v3741
        %v3750 = vmul.f32 %v3742, %v3742
        %v3751 = vmul.f32 %v3743, %v3743
        %v3752 = vmul.f32 %v3744, %v3744
        %v3753 = vmul.f32 %v3745, %v3745
        %v3754 = vadd.f32 %v3746, %v3747
        %3755 = vadd.xlane.f32.xlu0 %v3754
        %v3756 = vpop.xlane.xlu0 %3755
        %v3757 = vadd.f32 %v3748, %v3749
        %3758 = vadd.xlane.f32.xlu0 %v3757
        %v3759 = vpop.xlane.xlu0 %3758
        %v3760 = vadd.f32 %v3750, %v3751
        %3761 = vadd.xlane.f32.xlu0 %v3760
        %v3762 = vpop.xlane.xlu0 %3761
        %v3763 = vadd.f32 %v3752, %v3753
        %3764 = vadd.xlane.f32.xlu0 %v3763
        %v3765 = vpop.xlane.xlu0 %3764
        %v3766 = vmul.f32 %v3756, %v2451
        %v3767 = vmul.f32 %v3759, %v2451
        %v3768 = vmul.f32 %v3762, %v2451
        %v3769 = vmul.f32 %v3765, %v2451
        %v3770 = vadd.f32 %v3766, 1e-12
        %v3771 = vadd.f32 %v3767, 1e-12
        %v3772 = vadd.f32 %v3768, 1e-12
        %v3773 = vadd.f32 %v3769, 1e-12
        %v3774 = vrsqrt.pop %v3770
        %v3775 = vrsqrt.pop %v3771
        %v3776 = vrsqrt.pop %v3772
        %v3777 = vrsqrt.pop %v3773
        %v3778 = vmul.f32 %v3738, %v3774
        %v3779 = vmul.f32 %v3739, %v3774
        %v3780 = vmul.f32 %v3740, %v3775
        %v3781 = vmul.f32 %v3741, %v3775
        %v3782 = vmul.f32 %v3742, %v3776
        %v3783 = vmul.f32 %v3743, %v3776
        %v3784 = vmul.f32 %v3744, %v3777
        %v3785 = vmul.f32 %v3745, %v3777
        %v3787 = vlaneseq
        %v3788 = vshrl.u32 %v3787, 7
        %v3789 = vsub.s32 0, %v3788
        %v3790 = vrot.slane %v3720, %v3789
        %v3791 = vlaneseq
        %v3792 = vshrl.u32 %v3791, 7
        %v3793 = vsub.s32 1, %v3792
        %v3794 = vrot.slane %v3720, %v3793
        %v3797 = vmul.f32 %v3778, %v3790
        %v3798 = vmul.f32 %v3779, %v3794
        %v3799 = vmul.f32 %v3780, %v3790
        %v3800 = vmul.f32 %v3781, %v3794
        %v3801 = vmul.f32 %v3782, %v3790
        %v3802 = vmul.f32 %v3783, %v3794
        %v3803 = vmul.f32 %v3784, %v3790
        %v3804 = vmul.f32 %v3785, %v3794
        %v3806 = vlaneseq
        %v3807 = vshrl.u32 %v3806, 7
        %v3808 = vsub.s32 0, %v3807
        %v3809 = vrot.slane %v3721, %v3808
        %v3810 = vlaneseq
        %v3811 = vshrl.u32 %v3810, 7
        %v3812 = vsub.s32 1, %v3811
        %v3813 = vrot.slane %v3721, %v3812
        %v3816 = vadd.f32 %v3797, %v3809
        %v3817 = vadd.f32 %v3798, %v3813
        %v3818 = vadd.f32 %v3799, %v3809
        %v3819 = vadd.f32 %v3800, %v3813
        %v3820 = vadd.f32 %v3801, %v3809
        %v3821 = vadd.f32 %v3802, %v3813
        %v3822 = vadd.f32 %v3803, %v3809
        %v3823 = vadd.f32 %v3804, %v3813
        %3824 = vst [vmem:[#allocation2] sm:$0xff] %v3816
        %3825 = vst [vmem:[#allocation2 + $0x8] sm:$0xff] %v3817
        %3826 = vst [vmem:[#allocation2 + $0x10] sm:$0xff] %v3818
        %3827 = vst [vmem:[#allocation2 + $0x18] sm:$0xff] %v3819
        %3828 = vst [vmem:[#allocation2 + $0x20] sm:$0xff] %v3820
        %3829 = vst [vmem:[#allocation2 + $0x28] sm:$0xff] %v3821
        %3830 = vst [vmem:[#allocation2 + $0x30] sm:$0xff] %v3822
        %3831 = vst [vmem:[#allocation2 + $0x38] sm:$0xff] %v3823
        %p3832 = scmp.eq.s32.totalorder %s38, 1
        // Predicated region
        $region117: #{question_encoder_forward.1} parent=99 // pred_check
          %p3833 = pneg %p3832
        $region118: #{question_encoder_forward.1} parent=99 // pred_check_branch
          %3835 = sbr.rel (%p3833) target = $region120
        $region119: #{question_encoder_forward.1} parent=99 // pred_region
          %v3836 = vpack.c.bf16 %v3816, %v3816
          %v3837 = vpack.c.bf16 %v3817, %v3817
          %v3838 = vpack.c.bf16 %v3820, %v3820
          %v3839 = vpack.c.bf16 %v3821, %v3821
          %v3840 = vld [vmem:[%s16] sm:$0xff]
          %v3841 = vld [vmem:[%s16 + $0x8] sm:$0xff]
          %v3842 = vld [vmem:[%s16 + $0x10] sm:$0xff]
          %v3843 = vld [vmem:[%s16 + $0x18] sm:$0xff]
          %v3844 = vld [vmem:[%s16 + $0x20] sm:$0xff]
          %v3845 = vld [vmem:[%s16 + $0x28] sm:$0xff]
          %v3846 = vld [vmem:[%s16 + $0x30] sm:$0xff]
          %v3847 = vld [vmem:[%s16 + $0x38] sm:$0xff]
          %v3848 = vld [vmem:[%s16 + $0x40] sm:$0xff]
          %v3849 = vld [vmem:[%s16 + $0x48] sm:$0xff]
          %v3850 = vld [vmem:[%s16 + $0x50] sm:$0xff]
          %v3851 = vld [vmem:[%s16 + $0x58] sm:$0xff]
          %v3852 = vld [vmem:[%s16 + $0x60] sm:$0xff]
          %v3853 = vld [vmem:[%s16 + $0x68] sm:$0xff]
          %v3854 = vld [vmem:[%s16 + $0x70] sm:$0xff]
          %v3855 = vld [vmem:[%s16 + $0x78] sm:$0xff]
          %v3856 = vld [vmem:[%s16 + $0x80] sm:$0xff]
          %v3857 = vld [vmem:[%s16 + $0x88] sm:$0xff]
          %v3858 = vld [vmem:[%s16 + $0x90] sm:$0xff]
          %v3859 = vld [vmem:[%s16 + $0x98] sm:$0xff]
          %v3860 = vld [vmem:[%s16 + $0xa0] sm:$0xff]
          %v3861 = vld [vmem:[%s16 + $0xa8] sm:$0xff]
          %v3862 = vld [vmem:[%s16 + $0xb0] sm:$0xff]
          %v3863 = vld [vmem:[%s16 + $0xb8] sm:$0xff]
          %v3864 = vld [vmem:[%s16 + $0xc0] sm:$0xff]
          %v3865 = vld [vmem:[%s16 + $0xc8] sm:$0xff]
          %v3866 = vld [vmem:[%s16 + $0xd0] sm:$0xff]
          %v3867 = vld [vmem:[%s16 + $0xd8] sm:$0xff]
          %v3868 = vld [vmem:[%s16 + $0xe0] sm:$0xff]
          %v3869 = vld [vmem:[%s16 + $0xe8] sm:$0xff]
          %v3870 = vld [vmem:[%s16 + $0xf0] sm:$0xff]
          %v3871 = vld [vmem:[%s16 + $0xf8] sm:$0xff]
          %v3872 = vld [vmem:[%s17] sm:$0x3]
          %v3874 = vlaneseq
          %v3875 = vshrl.u32 %v3874, 7
          %v3876 = vsub.s32 0, %v3875
          %v3877 = vrot.slane %v3872, %v3876
          %v3878 = vlaneseq
          %v3879 = vshrl.u32 %v3878, 7
          %v3880 = vsub.s32 1, %v3879
          %v3881 = vrot.slane %v3872, %v3880
          %v3888 = vunpack.c.l.b16 %v3836
          %v3889 = vunpack.c.l.b16 %v3837
          %v3890 = vunpack.c.l.b16 %v3838
          %v3891 = vunpack.c.l.b16 %v3839
          %v3892 = vrot.slane %v3890, 7
          %vm3893 = vcmask 1041409
          %v3894 = vsel %vm3893, %v3892, %v3888
          %v3895 = vrot.slane %v3891, 7
          %v3896 = vsel %vm3893, %v3895, %v3889
          %v3897 = vpack.c.b16 %v3894, %v3894
          %v3898 = vpack.c.b16 %v3896, %v3896
          %v3933 = vunpack.c.l.b16 %v3840
          %v3934 = vunpack.c.h.b16 %v3840
          %v3935 = vunpack.c.l.b16 %v3841
          %v3936 = vunpack.c.h.b16 %v3841
          %v3937 = vunpack.c.l.b16 %v3842
          %v3938 = vunpack.c.h.b16 %v3842
          %v3939 = vunpack.c.l.b16 %v3843
          %v3940 = vunpack.c.h.b16 %v3843
          %v3941 = vunpack.c.l.b16 %v3844
          %v3942 = vunpack.c.h.b16 %v3844
          %v3943 = vunpack.c.l.b16 %v3845
          %v3944 = vunpack.c.h.b16 %v3845
          %v3945 = vunpack.c.l.b16 %v3846
          %v3946 = vunpack.c.h.b16 %v3846
          %v3947 = vunpack.c.l.b16 %v3847
          %v3948 = vunpack.c.h.b16 %v3847
          %v3949 = vunpack.c.l.b16 %v3848
          %v3950 = vunpack.c.h.b16 %v3848
          %v3951 = vunpack.c.l.b16 %v3849
          %v3952 = vunpack.c.h.b16 %v3849
          %v3953 = vunpack.c.l.b16 %v3850
          %v3954 = vunpack.c.h.b16 %v3850
          %v3955 = vunpack.c.l.b16 %v3851
          %v3956 = vunpack.c.h.b16 %v3851
          %v3957 = vunpack.c.l.b16 %v3852
          %v3958 = vunpack.c.h.b16 %v3852
          %v3959 = vunpack.c.l.b16 %v3853
          %v3960 = vunpack.c.h.b16 %v3853
          %v3961 = vunpack.c.l.b16 %v3854
          %v3962 = vunpack.c.h.b16 %v3854
          %v3963 = vunpack.c.l.b16 %v3855
          %v3964 = vunpack.c.h.b16 %v3855
          %v3965 = vunpack.c.l.b16 %v3856
          %v3966 = vunpack.c.h.b16 %v3856
          %v3967 = vunpack.c.l.b16 %v3857
          %v3968 = vunpack.c.h.b16 %v3857
          %v3969 = vunpack.c.l.b16 %v3858
          %v3970 = vunpack.c.h.b16 %v3858
          %v3971 = vunpack.c.l.b16 %v3859
          %v3972 = vunpack.c.h.b16 %v3859
          %v3973 = vunpack.c.l.b16 %v3860
          %v3974 = vunpack.c.h.b16 %v3860
          %v3975 = vunpack.c.l.b16 %v3861
          %v3976 = vunpack.c.h.b16 %v3861
          %v3977 = vunpack.c.l.b16 %v3862
          %v3978 = vunpack.c.h.b16 %v3862
          %v3979 = vunpack.c.l.b16 %v3863
          %v3980 = vunpack.c.h.b16 %v3863
          %v3981 = vunpack.c.l.b16 %v3864
          %v3982 = vunpack.c.h.b16 %v3864
          %v3983 = vunpack.c.l.b16 %v3865
          %v3984 = vunpack.c.h.b16 %v3865
          %v3985 = vunpack.c.l.b16 %v3866
          %v3986 = vunpack.c.h.b16 %v3866
          %v3987 = vunpack.c.l.b16 %v3867
          %v3988 = vunpack.c.h.b16 %v3867
          %v3989 = vunpack.c.l.b16 %v3868
          %v3990 = vunpack.c.h.b16 %v3868
          %v3991 = vunpack.c.l.b16 %v3869
          %v3992 = vunpack.c.h.b16 %v3869
          %v3993 = vunpack.c.l.b16 %v3870
          %v3994 = vunpack.c.h.b16 %v3870
          %v3995 = vunpack.c.l.b16 %v3871
          %v3996 = vunpack.c.h.b16 %v3871
          %v3997 = vpack.c.b16 %v3935, %v3933
          %v3998 = vpack.c.b16 %v3936, %v3934
          %v3999 = vpack.c.b16 %v3939, %v3937
          %v4000 = vpack.c.b16 %v3940, %v3938
          %v4001 = vpack.c.b16 %v3943, %v3941
          %v4002 = vpack.c.b16 %v3944, %v3942
          %v4003 = vpack.c.b16 %v3947, %v3945
          %v4004 = vpack.c.b16 %v3948, %v3946
          %v4005 = vpack.c.b16 %v3951, %v3949
          %v4006 = vpack.c.b16 %v3952, %v3950
          %v4007 = vpack.c.b16 %v3955, %v3953
          %v4008 = vpack.c.b16 %v3956, %v3954
          %v4009 = vpack.c.b16 %v3959, %v3957
          %v4010 = vpack.c.b16 %v3960, %v3958
          %v4011 = vpack.c.b16 %v3963, %v3961
          %v4012 = vpack.c.b16 %v3964, %v3962
          %v4013 = vpack.c.b16 %v3967, %v3965
          %v4014 = vpack.c.b16 %v3968, %v3966
          %v4015 = vpack.c.b16 %v3971, %v3969
          %v4016 = vpack.c.b16 %v3972, %v3970
          %v4017 = vpack.c.b16 %v3975, %v3973
          %v4018 = vpack.c.b16 %v3976, %v3974
          %v4019 = vpack.c.b16 %v3979, %v3977
          %v4020 = vpack.c.b16 %v3980, %v3978
          %v4021 = vpack.c.b16 %v3983, %v3981
          %v4022 = vpack.c.b16 %v3984, %v3982
          %v4023 = vpack.c.b16 %v3987, %v3985
          %v4024 = vpack.c.b16 %v3988, %v3986
          %v4025 = vpack.c.b16 %v3991, %v3989
          %v4026 = vpack.c.b16 %v3992, %v3990
          %v4027 = vpack.c.b16 %v3995, %v3993
          %v4028 = vpack.c.b16 %v3996, %v3994
          %4061 = vmatprep.subr.bf16.mxu0 %v4012
          %4062 = vmatpush1.bf16.msra.mxu0 %v4011
          %4063 = vmatprep.subr.bf16.mxu0 %v4010
          %4064 = vmatpush1.bf16.msra.mxu0 %v4009
          %4065 = vmatprep.subr.bf16.mxu0 %v4008
          %4066 = vmatpush1.bf16.msra.mxu0 %v4007
          %4067 = vmatprep.subr.bf16.mxu0 %v4006
          %4068 = vmatpush1.bf16.msra.mxu0 %v4005
          %4069 = vmatprep.subr.bf16.mxu0 %v4004
          %4070 = vmatpush1.bf16.msra.mxu0 %v4003
          %4071 = vmatprep.subr.bf16.mxu0 %v4002
          %4072 = vmatpush1.bf16.msra.mxu0 %v4001
          %4073 = vmatprep.subr.bf16.mxu0 %v4000
          %4074 = vmatpush1.bf16.msra.mxu0 %v3999
          %4075 = vmatprep.subr.bf16.mxu0 %v3998
          %4076 = vmatpush1.bf16.msra.mxu0 %v3997
          %4077 = vmatprep.subr.bf16.mxu0 %v4028
          %4078 = vmatpush2.bf16.msra.mxu0 %v4027
          %4079 = vmatprep.subr.bf16.mxu0 %v4026
          %4080 = vmatpush2.bf16.msra.mxu0 %v4025
          %4081 = vmatprep.subr.bf16.mxu0 %v4024
          %4082 = vmatpush2.bf16.msra.mxu0 %v4023
          %4083 = vmatprep.subr.bf16.mxu0 %v4022
          %4084 = vmatpush2.bf16.msra.mxu0 %v4021
          %4085 = vmatprep.subr.bf16.mxu0 %v4020
          %4086 = vmatpush2.bf16.msra.mxu0 %v4019
          %4087 = vmatprep.subr.bf16.mxu0 %v4018
          %4088 = vmatpush2.bf16.msra.mxu0 %v4017
          %4089 = vmatprep.subr.bf16.mxu0 %v4016
          %4090 = vmatpush2.bf16.msra.mxu0 %v4015
          %4091 = vmatprep.subr.bf16.mxu0 %v4014
          %4092 = vmatpush2.bf16.msra.mxu0 %v4013
          %4093 = vmatprep.mubr.bf16.mxu0 %v3898
          %4094 = vmatmul.mubr.bf16.gmra.mxu0 %v3897
          %v4095 = vpop.f32.mrf.mxu0
          %v4096 = vadd.f32 %v3877, %v4095
          %v4097 = vpop.f32.mrf.mxu0
          %v4098 = vadd.f32 %v3881, %v4097
          %v4099 = vpop.f32.mrf.mxu0
          %v4100 = vpop.f32.mrf.mxu0
          %4101 = vdwg.mxu0
          %v4102 = vtanh.pop %v4096
          %v4103 = vtanh.pop %v4098
          %v4104 = vpack.c.bf16 %v4102, %v4102
          %v4105 = vpack.c.bf16 %v4103, %v4103
          %v4106 = vld [vmem:[%s18] sm:$0xf]
          %v4107 = vld [vmem:[%s18 + $0x4] sm:$0xf]
          %v4108 = vld [vmem:[%s18 + $0x8] sm:$0xf]
          %v4109 = vld [vmem:[%s18 + $0xc] sm:$0xf]
          %v4110 = vld [vmem:[%s18 + $0x10] sm:$0xf]
          %v4111 = vld [vmem:[%s18 + $0x14] sm:$0xf]
          %v4112 = vld [vmem:[%s18 + $0x18] sm:$0xf]
          %v4113 = vld [vmem:[%s18 + $0x1c] sm:$0xf]
          %v4114 = vld [vmem:[%s18 + $0x20] sm:$0xf]
          %v4115 = vld [vmem:[%s18 + $0x24] sm:$0xf]
          %v4116 = vld [vmem:[%s18 + $0x28] sm:$0xf]
          %v4117 = vld [vmem:[%s18 + $0x2c] sm:$0xf]
          %v4118 = vld [vmem:[%s18 + $0x30] sm:$0xf]
          %v4119 = vld [vmem:[%s18 + $0x34] sm:$0xf]
          %v4120 = vld [vmem:[%s18 + $0x38] sm:$0xf]
          %v4121 = vld [vmem:[%s18 + $0x3c] sm:$0xf]
          %v4122 = vld [vmem:[%s18 + $0x40] sm:$0xf]
          %v4123 = vld [vmem:[%s18 + $0x44] sm:$0xf]
          %v4124 = vld [vmem:[%s18 + $0x48] sm:$0xf]
          %v4125 = vld [vmem:[%s18 + $0x4c] sm:$0xf]
          %v4126 = vld [vmem:[%s18 + $0x50] sm:$0xf]
          %v4127 = vld [vmem:[%s18 + $0x54] sm:$0xf]
          %v4128 = vld [vmem:[%s18 + $0x58] sm:$0xf]
          %v4129 = vld [vmem:[%s18 + $0x5c] sm:$0xf]
          %v4130 = vld [vmem:[%s18 + $0x60] sm:$0xf]
          %v4131 = vld [vmem:[%s18 + $0x64] sm:$0xf]
          %v4132 = vld [vmem:[%s18 + $0x68] sm:$0xf]
          %v4133 = vld [vmem:[%s18 + $0x6c] sm:$0xf]
          %v4134 = vld [vmem:[%s18 + $0x70] sm:$0xf]
          %v4135 = vld [vmem:[%s18 + $0x74] sm:$0xf]
          %v4136 = vld [vmem:[%s18 + $0x78] sm:$0xf]
          %v4137 = vld [vmem:[%s18 + $0x7c] sm:$0xf]
          %v4138 = vld [vmem:[%s19] sm:$0x1]
          %v4140 = vlaneseq
          %v4141 = vshrl.u32 %v4140, 7
          %v4142 = vsub.s32 0, %v4141
          %v4143 = vrot.slane %v4138, %v4142
          %v4177 = vunpack.c.l.b16 %v4106
          %v4178 = vunpack.c.l.b16 %v4107
          %v4179 = vunpack.c.l.b16 %v4108
          %v4180 = vunpack.c.l.b16 %v4109
          %v4181 = vunpack.c.l.b16 %v4110
          %v4182 = vunpack.c.l.b16 %v4111
          %v4183 = vunpack.c.l.b16 %v4112
          %v4184 = vunpack.c.l.b16 %v4113
          %v4185 = vunpack.c.l.b16 %v4114
          %v4186 = vunpack.c.l.b16 %v4115
          %v4187 = vunpack.c.l.b16 %v4116
          %v4188 = vunpack.c.l.b16 %v4117
          %v4189 = vunpack.c.l.b16 %v4118
          %v4190 = vunpack.c.l.b16 %v4119
          %v4191 = vunpack.c.l.b16 %v4120
          %v4192 = vunpack.c.l.b16 %v4121
          %v4193 = vunpack.c.l.b16 %v4122
          %v4194 = vunpack.c.l.b16 %v4123
          %v4195 = vunpack.c.l.b16 %v4124
          %v4196 = vunpack.c.l.b16 %v4125
          %v4197 = vunpack.c.l.b16 %v4126
          %v4198 = vunpack.c.l.b16 %v4127
          %v4199 = vunpack.c.l.b16 %v4128
          %v4200 = vunpack.c.l.b16 %v4129
          %v4201 = vunpack.c.l.b16 %v4130
          %v4202 = vunpack.c.l.b16 %v4131
          %v4203 = vunpack.c.l.b16 %v4132
          %v4204 = vunpack.c.l.b16 %v4133
          %v4205 = vunpack.c.l.b16 %v4134
          %v4206 = vunpack.c.l.b16 %v4135
          %v4207 = vunpack.c.l.b16 %v4136
          %v4208 = vunpack.c.l.b16 %v4137
          %v4209 = vpack.c.b16 %v4178, %v4177
          %v4210 = vpack.c.b16 %v4180, %v4179
          %v4211 = vpack.c.b16 %v4182, %v4181
          %v4212 = vpack.c.b16 %v4184, %v4183
          %v4213 = vpack.c.b16 %v4186, %v4185
          %v4214 = vpack.c.b16 %v4188, %v4187
          %v4215 = vpack.c.b16 %v4190, %v4189
          %v4216 = vpack.c.b16 %v4192, %v4191
          %v4217 = vpack.c.b16 %v4194, %v4193
          %v4218 = vpack.c.b16 %v4196, %v4195
          %v4219 = vpack.c.b16 %v4198, %v4197
          %v4220 = vpack.c.b16 %v4200, %v4199
          %v4221 = vpack.c.b16 %v4202, %v4201
          %v4222 = vpack.c.b16 %v4204, %v4203
          %v4223 = vpack.c.b16 %v4206, %v4205
          %v4224 = vpack.c.b16 %v4208, %v4207
          %4241 = vmatprep.subr.bf16.mxu0 0
          %4242 = vmatpush1.bf16.msra.mxu0 %v4216
          %4243 = vmatprep.subr.bf16.mxu0 0
          %4244 = vmatpush1.bf16.msra.mxu0 %v4215
          %4245 = vmatprep.subr.bf16.mxu0 0
          %4246 = vmatpush1.bf16.msra.mxu0 %v4214
          %4247 = vmatprep.subr.bf16.mxu0 0
          %4248 = vmatpush1.bf16.msra.mxu0 %v4213
          %4249 = vmatprep.subr.bf16.mxu0 0
          %4250 = vmatpush1.bf16.msra.mxu0 %v4212
          %4251 = vmatprep.subr.bf16.mxu0 0
          %4252 = vmatpush1.bf16.msra.mxu0 %v4211
          %4253 = vmatprep.subr.bf16.mxu0 0
          %4254 = vmatpush1.bf16.msra.mxu0 %v4210
          %4255 = vmatprep.subr.bf16.mxu0 0
          %4256 = vmatpush1.bf16.msra.mxu0 %v4209
          %4257 = vmatprep.subr.bf16.mxu0 0
          %4258 = vmatpush2.bf16.msra.mxu0 %v4224
          %4259 = vmatprep.subr.bf16.mxu0 0
          %4260 = vmatpush2.bf16.msra.mxu0 %v4223
          %4261 = vmatprep.subr.bf16.mxu0 0
          %4262 = vmatpush2.bf16.msra.mxu0 %v4222
          %4263 = vmatprep.subr.bf16.mxu0 0
          %4264 = vmatpush2.bf16.msra.mxu0 %v4221
          %4265 = vmatprep.subr.bf16.mxu0 0
          %4266 = vmatpush2.bf16.msra.mxu0 %v4220
          %4267 = vmatprep.subr.bf16.mxu0 0
          %4268 = vmatpush2.bf16.msra.mxu0 %v4219
          %4269 = vmatprep.subr.bf16.mxu0 0
          %4270 = vmatpush2.bf16.msra.mxu0 %v4218
          %4271 = vmatprep.subr.bf16.mxu0 0
          %4272 = vmatpush2.bf16.msra.mxu0 %v4217
          %4273 = vmatprep.mubr.bf16.mxu0 %v4105
          %4274 = vmatmul.mubr.bf16.gmra.mxu0 %v4104
          %v4275 = vpop.f32.mrf.mxu0
          %v4276 = vadd.f32 %v4143, %v4275
          %v4277 = vpop.f32.mrf.mxu0
          %v4278 = vpop.f32.mrf.mxu0
          %v4279 = vpop.f32.mrf.mxu0
          %4280 = vdwg.mxu0
          %4281 = vst [vmem:[#allocation9] sm:$0x3] %v4276
        $region120: #{question_encoder_forward.1} parent=99 // pred_fallthru
          _
        // Predicated region
        $region121: #{question_encoder_forward.1} parent=99 // pred_check
          %p4282 = pneg %p531
        $region122: #{question_encoder_forward.1} parent=99 // pred_check_branch
          %4284 = sbr.rel (%p4282) target = $region124
        $region123: #{question_encoder_forward.1} parent=99 // pred_region
          %s4286 = ssub.s32 32, 32
          %4287 = vsyncadd [#allocation5], %s4286
          %s4289 = sshll.u32 [#allocation9], 4
          %s4290 = int_to_ptr.vmem [resolvable:$true] %s4289
          %4292 = dma.vmem_to_hbm [thread:$0]  %s4290, 32, %s20, [#allocation5]
        $region124: #{question_encoder_forward.1} parent=99 // pred_fallthru
          _
        // Predicated region
        $region125: #{question_encoder_forward.1} parent=99 // pred_check
          %p4293 = pneg %p531
        $region126: #{question_encoder_forward.1} parent=99 // pred_check_branch
          %4295 = sbr.rel (%p4293) target = $region128
        $region127: #{question_encoder_forward.1} parent=99 // pred_region
          %4296 = dma.done [#allocation5], 32
        $region128: #{question_encoder_forward.1} parent=99 // pred_fallthru
          _
      $region100: #{question_encoder_forward.1} parent=5 // pred_fallthru
        _
      %p4297 = scmp.le.s32.totalorder 2, %s33
      // Predicated region
      $region129: #{question_encoder_forward.1} parent=5 // pred_check
        %p4298 = pneg %p4297
      $region130: #{question_encoder_forward.1} parent=5 // pred_check_branch
        %4300 = sbr.rel (%p4298) target = $region132
      $region131: #{question_encoder_forward.1} parent=5 // pred_region
        %s4301 = ssub.s32 %s33, 2
      $region132: #{question_encoder_forward.1} parent=5 // pred_fallthru
        _
    $region6: #{question_encoder_forward.1} parent=1 // loop_footer
      %s37 = sadd.s32 1, %s33
    $region7: #{question_encoder_forward.1} parent=1 // loop_footer_branch
      %32 = sbr.rel target = $region3
    $region8: #{question_encoder_forward.1} parent=1 // loop_exit
      _
    %4302 = vsyncpa [#allocation4], 1
    %s4303 = scalar_lea.sflag [#allocation4], 1
    %4304 = vsyncpa %s4303, 1
    %4305 = vsyncpa [#allocation7], 1
    %s4306 = scalar_lea.sflag [#allocation7], 1
    %4307 = vsyncpa %s4306, 1
    %4308 = vsyncpa [#allocation5], 1
    %s4309 = scalar_lea.sflag [#allocation5], 1
    %4310 = vsyncpa %s4309, 1

</llo_original>
